<compile_context>
chip_gen: v5e
topology: v5e:2x2
jax: 0.10.0
libtpu: 0.0.40
codegen_flags: <defaults>
</compile_context>

<pallas_src>
import jax
import jax.numpy as jnp
import numpy as np
from jax.experimental import pallas as pl
from jax.experimental.pallas import tpu as pltpu

KH = KW = 5        # both convs use 5x5 kernels
FC1_CHUNK = 768    # fc1 reduction chunk (6 * 128 lanes); 3072 / 768 = 4 grid steps


# ----------------------------- Pallas kernels ------------------------------ #

def _conv_relu_pool_kernel(p_ref, wt_ref, b_ref, o_ref):
    """Fused conv (im2col matmul) + 2x2/stride-2 max-pool + bias + ReLU.

    Grid axis 0 walks the 4 positions of the pooling window ("arbitrary"
    reduction); the output block is resident and accumulates the max of the
    raw conv results.  Bias + ReLU run once on the last step.

    p_ref : (1, K, M)  transposed patch matrix for one pool position
    wt_ref: (Cout, K)  weights (rows = cout, cols = (cin, kh, kw))
    b_ref : (Cout, 1)  bias column
    o_ref : (Cout, M)  lane-dense output, M = N*PH*PW
    """
    b = pl.program_id(0)
    y = jnp.dot(wt_ref[...], p_ref[0], preferred_element_type=jnp.float32)

    @pl.when(b == 0)
    def _():
        o_ref[...] = y

    @pl.when(b != 0)
    def _():
        o_ref[...] = jnp.maximum(o_ref[...], y)

    @pl.when(b == pl.num_programs(0) - 1)
    def _():
        o_ref[...] = jnp.maximum(o_ref[...] + b_ref[...], 0.0)


def _mlp_kernel(x_ref, w1_ref, b1_ref, w2_ref, b2_ref, w3_ref, b3_ref,
                o_ref, acc_ref):
    """fc1 (reduction chunked over the grid) -> ReLU -> fc2 -> ReLU -> fc3.

    Grid axis 0 walks 768-wide chunks of the 3072-long fc1 reduction; each
    step streams one (768, 500) bf16 slab of fc1_w and accumulates into an
    f32 VMEM scratch, so the dominant fc1 weight load is pipelined against
    compute.  fc2/fc3 (small, resident blocks) run fused on the final step.
    """
    k = pl.program_id(0)

    @pl.when(k == 0)
    def _():
        acc_ref[...] = jnp.zeros_like(acc_ref)

    # bf16 x bf16 MXU matmul, f32 accumulation (cast the tiny activation
    # block instead of the large weight slab).
    acc_ref[...] += jnp.dot(x_ref[...].astype(jnp.bfloat16), w1_ref[...],
                            preferred_element_type=jnp.float32)

    @pl.when(k == pl.num_programs(0) - 1)
    def _():
        h1 = jnp.maximum(acc_ref[...] + b1_ref[...], 0.0)
        h2 = jnp.dot(h1, w2_ref[...], preferred_element_type=jnp.float32) + b2_ref[...]
        h2 = jnp.maximum(h2, 0.0)
        o_ref[...] = (jnp.dot(h2, w3_ref[...], preferred_element_type=jnp.float32)
                      + b3_ref[...])


_ARB = pltpu.CompilerParams(dimension_semantics=("arbitrary",))


# ----------------------------- layer wrappers ------------------------------ #

def _im2col_pool_t(x_cnhw):
    """Transposed, pool-strided im2col (done once in XLA per conv layer).

    x_cnhw: (Cin, N, H, W).  Returns ((4, K, M), (N, PH, PW)) with K rows
    ordered (cin, kh, kw) — matching an OIHW weight reshape — and M columns
    ordered (n, ph, pw); axis 0 enumerates the 2x2 pool positions (dy, dx).
    """
    Cin, N, H, W = x_cnhw.shape
    OH, OW = H - KH + 1, W - KW + 1
    PH, PW = OH // 2, OW // 2
    K, M = Cin * KH * KW, N * PH * PW

    branches = []
    for dy in range(2):
        for dx in range(2):
            rows = []
            for kh in range(KH):
                for kw in range(KW):
                    h0, w0 = dy + kh, dx + kw
                    rows.append(x_cnhw[:, :, h0:h0 + 2 * PH:2, w0:w0 + 2 * PW:2])
            r = jnp.stack(rows, axis=0)              # (25, Cin, N, PH, PW)
            r = jnp.transpose(r, (1, 0, 2, 3, 4))    # (Cin, 25, N, PH, PW)
            branches.append(r.reshape(K, M))
    return jnp.stack(branches, axis=0), (N, PH, PW)


def conv_relu_pool(p_all, wt, b_col):
    """p_all: (4, K, M); wt: (Cout, K); b_col: (Cout, 1) -> (Cout, M)."""
    nb, K, M = p_all.shape
    Cout = wt.shape[0]
    # TODO(synk): on v7x a second ("parallel") grid axis over M would use both
    # TensorCores, but M (= N*PH*PW) is not a multiple of 128 at these shapes.
    return pl.pallas_call(
        _conv_relu_pool_kernel,
        grid=(nb,),
        in_specs=[pl.BlockSpec((1, K, M), lambda i: (i, 0, 0)),
                  pl.BlockSpec((Cout, K), lambda i: (0, 0)),
                  pl.BlockSpec((Cout, 1), lambda i: (0, 0))],
        out_specs=pl.BlockSpec((Cout, M), lambda i: (0, 0)),
        out_shape=jax.ShapeDtypeStruct((Cout, M), jnp.float32),
        compiler_params=_ARB,
    )(p_all, wt, b_col)


def mlp(x2d, w1, b1, w2, b2, w3, b3):
    """x2d: (N, D) f32; w1: (D, H1) bf16 -> logits (N, num_classes)."""
    N, D = x2d.shape
    H1, H2, NC = w1.shape[1], w2.shape[1], w3.shape[1]
    kc = FC1_CHUNK if D % FC1_CHUNK == 0 else D
    return pl.pallas_call(
        _mlp_kernel,
        grid=(D // kc,),
        in_specs=[pl.BlockSpec((N, kc), lambda k: (0, k)),
                  pl.BlockSpec((kc, H1), lambda k: (k, 0)),
                  pl.BlockSpec((1, H1), lambda k: (0, 0)),
                  pl.BlockSpec((H1, H2), lambda k: (0, 0)),
                  pl.BlockSpec((1, H2), lambda k: (0, 0)),
                  pl.BlockSpec((H2, NC), lambda k: (0, 0)),
                  pl.BlockSpec((1, NC), lambda k: (0, 0))],
        out_specs=pl.BlockSpec((N, NC), lambda k: (0, 0)),
        out_shape=jax.ShapeDtypeStruct((N, NC), jnp.float32),
        scratch_shapes=[pltpu.VMEM((N, H1), jnp.float32)],
        compiler_params=_ARB,
    )(x2d, w1, b1, w2, b2, w3, b3)


def lenet_forward(x_nchw, kp):
    # TODO(synk): the reference forward's print(x.shape) calls are host-side
    # diagnostics only; omitted here.
    # conv1 + relu + pool (im2col consumes a (Cin, N, H, W) view of the input)
    p1, (n, ph1, pw1) = _im2col_pool_t(jnp.transpose(x_nchw, (1, 0, 2, 3)))
    y1 = conv_relu_pool(p1, kp['conv1_wt'], kp['conv1_b'])        # (6, n*ph1*pw1)
    y1 = y1.reshape(6, n, ph1, pw1)                               # free reshape -> (C, N, H, W)
    # conv2 + relu + pool
    p2, (_, ph2, pw2) = _im2col_pool_t(y1)
    y2 = conv_relu_pool(p2, kp['conv2_wt'], kp['conv2_b'])        # (16, n*ph2*pw2)
    # NCHW flatten for fc1 (tiny 24 KB transpose done in XLA)
    x2d = jnp.transpose(y2.reshape(16, n, ph2 * pw2), (1, 0, 2)).reshape(n, -1)
    return mlp(x2d, kp['fc1_w'], kp['fc1_b'], kp['fc2_w'], kp['fc2_b'],
               kp['fc3_w'], kp['fc3_b'])


# ------------------------- deterministic parameters ------------------------ #

def init_params(key):
    """Returns (torch_params, kernel_params).

    torch_params keeps PyTorch-native layouts in f32 (used by the pure-JAX
    reference); kernel_params holds the same weights re-laid-out for the
    Pallas kernels (fc1_w cast to bf16 to halve its HBM read).
    """
    def uinit(k, shape, fan_in):
        bound = 1.0 / np.sqrt(fan_in)
        return jax.random.uniform(k, shape, jnp.float32, -bound, bound)

    ks = jax.random.split(key, 10)
    conv1_w = uinit(ks[0], (6, 3, KH, KW), 3 * KH * KW)      # OIHW
    conv1_b = uinit(ks[1], (6,), 3 * KH * KW)
    conv2_w = uinit(ks[2], (16, 6, KH, KW), 6 * KH * KW)
    conv2_b = uinit(ks[3], (16,), 6 * KH * KW)
    fc1_w = uinit(ks[4], (3072, 500), 3072)                  # (in, out); rows in NCHW-flatten order
    fc1_b = uinit(ks[5], (500,), 3072)
    fc2_w = uinit(ks[6], (500, 200), 500)
    fc2_b = uinit(ks[7], (200,), 500)
    fc3_w = uinit(ks[8], (200, 10), 200)
    fc3_b = uinit(ks[9], (10,), 200)

    torch_params = dict(conv1_w=conv1_w, conv1_b=conv1_b,
                        conv2_w=conv2_w, conv2_b=conv2_b,
                        fc1_w=fc1_w, fc1_b=fc1_b,
                        fc2_w=fc2_w, fc2_b=fc2_b,
                        fc3_w=fc3_w, fc3_b=fc3_b)

    kernel_params = dict(
        conv1_wt=conv1_w.reshape(6, 3 * KH * KW),            # cols ordered (cin, kh, kw)
        conv1_b=conv1_b.reshape(6, 1),
        conv2_wt=conv2_w.reshape(16, 6 * KH * KW),
        conv2_b=conv2_b.reshape(16, 1),
        fc1_w=fc1_w.astype(jnp.bfloat16),                    # bf16 halves the dominant HBM read
        fc1_b=fc1_b.reshape(1, 500),
        fc2_w=fc2_w,
        fc2_b=fc2_b.reshape(1, 200),
        fc3_w=fc3_w,
        fc3_b=fc3_b.reshape(1, 10),
    )
    return torch_params, kernel_params


# --------------------------- pure-JAX reference ----------------------------- #

def ref_forward(x_nchw, tp):
    def conv(x, w_oihw, b):
        y = jax.lax.conv_general_dilated(
            x, w_oihw, window_strides=(1, 1), padding='VALID',
            dimension_numbers=('NCHW', 'OIHW', 'NCHW'))
        return y + b.reshape(1, -1, 1, 1)

    def pool(x):
        return jax.lax.reduce_window(x, -jnp.inf, jax.lax.max,
                                     (1, 1, 2, 2), (1, 1, 2, 2), 'VALID')

    x = pool(jnp.maximum(conv(x_nchw, tp['conv1_w'], tp['conv1_b']), 0.0))
    x = pool(jnp.maximum(conv(x, tp['conv2_w'], tp['conv2_b']), 0.0))
    x = x.reshape(x.shape[0], -1)                             # NCHW flatten, like torch
    x = jnp.maximum(x @ tp['fc1_w'] + tp['fc1_b'], 0.0)
    x = jnp.maximum(x @ tp['fc2_w'] + tp['fc2_b'], 0.0)
    return x @ tp['fc3_w'] + tp['fc3_b']


# ----------------------------------- main ----------------------------------- #

if __name__ == "__main__":
    key = jax.random.PRNGKey(0)
    k_params, k_x = jax.random.split(key)
    torch_params, kernel_params = init_params(k_params)

    # batch=2, 3 channels, 60x76 spatial -> flatten = 16*12*16 = 3072 = fc1 in_features
    x = jax.random.normal(k_x, (2, 3, 60, 76), dtype=jnp.float32)

    out = jax.jit(lenet_forward)(x, kernel_params)
    out = jax.block_until_ready(out)
    assert out.shape == (2, 10) and out.dtype == jnp.float32

    expected = ref_forward(x, torch_params)
    np.testing.assert_allclose(np.asarray(out), np.asarray(expected),
                               rtol=1e-2, atol=1e-2)

    print("KERNEL_OK")
</pallas_src>

<mosaic_0001>
module attributes {stable_mosaic.version = 11 : i64} {
  func.func @_conv_relu_pool_kernel(%arg0: i32, %arg1: memref<1x75x2016xf32, #tpu.memory_space<vmem>>, %arg2: memref<6x75xf32, #tpu.memory_space<vmem>>, %arg3: memref<6x1xf32, #tpu.memory_space<vmem>>, %arg4: memref<6x2016xf32, #tpu.memory_space<vmem>>) attributes {dimension_semantics = [#tpu.dimension_semantics<arbitrary>], iteration_bounds = array<i64: 4>, scalar_prefetch = 0 : i64, scratch_operands = 0 : i64, tpu.core_type = #tpu.core_type<tc>, window_params = [{transform_indices = @transform_0, window_bounds = array<i64: 1, 75, 2016>}, {pipeline_mode = #tpu.pipeline_mode<synchronous>, transform_indices = @transform_1, window_bounds = array<i64: 6, 75>}, {pipeline_mode = #tpu.pipeline_mode<synchronous>, transform_indices = @transform_2, window_bounds = array<i64: 6, 1>}, {pipeline_mode = #tpu.pipeline_mode<synchronous>, transform_indices = @transform_3, window_bounds = array<i64: 6, 2016>}]} {
    %c0 = arith.constant 0 : index
    %c0_0 = arith.constant 0 : index
    %0 = vector.load %arg2[%c0, %c0_0] : memref<6x75xf32, #tpu.memory_space<vmem>>, vector<6x75xf32>
    %c0_1 = arith.constant 0 : index
    %c0_2 = arith.constant 0 : index
    %c0_3 = arith.constant 0 : index
    %1 = vector.load %arg1[%c0_1, %c0_2, %c0_3] : memref<1x75x2016xf32, #tpu.memory_space<vmem>>, vector<1x75x2016xf32>
    %2 = vector.shape_cast %1 : vector<1x75x2016xf32> to vector<75x2016xf32>
    %cst = arith.constant dense<0.000000e+00> : vector<6x2016xf32>
    %3 = tpu.matmul %0, %2, %cst {dimension_numbers = #tpu.dot_dimension_numbers<[1], [0], [0], [1], [0, 0, 1, 1], [], []>} : vector<6x75xf32>, vector<75x2016xf32>, vector<6x2016xf32> -> vector<6x2016xf32>
    %c0_i32 = arith.constant 0 : i32
    %4 = arith.cmpi eq, %arg0, %c0_i32 : i32
    %5 = arith.extui %4 : i1 to i32
    %c0_i32_4 = arith.constant 0 : i32
    %6 = arith.cmpi ne, %5, %c0_i32_4 : i32
    scf.if %6 {
      %c0_8 = arith.constant 0 : index
      %c0_9 = arith.constant 0 : index
      %13 = vector.load %arg4[%c0_8, %c0_9] : memref<6x2016xf32, #tpu.memory_space<vmem>>, vector<6x2016xf32>
      tpu.vector_store %arg4[%c0_8, %c0_9], %3 {strides = array<i32>} : memref<6x2016xf32, #tpu.memory_space<vmem>>, vector<6x2016xf32>,
    } else {
    }
    %c0_i32_5 = arith.constant 0 : i32
    %7 = arith.cmpi ne, %arg0, %c0_i32_5 : i32
    %8 = arith.extui %7 : i1 to i32
    %c0_i32_6 = arith.constant 0 : i32
    %9 = arith.cmpi ne, %8, %c0_i32_6 : i32
    scf.if %9 {
      %c0_8 = arith.constant 0 : index
      %c0_9 = arith.constant 0 : index
      %13 = vector.load %arg4[%c0_8, %c0_9] : memref<6x2016xf32, #tpu.memory_space<vmem>>, vector<6x2016xf32>
      %14 = arith.maximumf %13, %3 : vector<6x2016xf32>
      %c0_10 = arith.constant 0 : index
      %c0_11 = arith.constant 0 : index
      %15 = vector.load %arg4[%c0_10, %c0_11] : memref<6x2016xf32, #tpu.memory_space<vmem>>, vector<6x2016xf32>
      tpu.vector_store %arg4[%c0_10, %c0_11], %14 {strides = array<i32>} : memref<6x2016xf32, #tpu.memory_space<vmem>>, vector<6x2016xf32>,
    } else {
    }
    %c3_i32 = arith.constant 3 : i32
    %10 = arith.cmpi eq, %arg0, %c3_i32 : i32
    %11 = arith.extui %10 : i1 to i32
    %c0_i32_7 = arith.constant 0 : i32
    %12 = arith.cmpi ne, %11, %c0_i32_7 : i32
    scf.if %12 {
      %c0_8 = arith.constant 0 : index
      %c0_9 = arith.constant 0 : index
      %13 = vector.load %arg4[%c0_8, %c0_9] : memref<6x2016xf32, #tpu.memory_space<vmem>>, vector<6x2016xf32>
      %c0_10 = arith.constant 0 : index
      %c0_11 = arith.constant 0 : index
      %14 = vector.load %arg3[%c0_10, %c0_11] : memref<6x1xf32, #tpu.memory_space<vmem>>, vector<6x1xf32>
      %15 = vector.broadcast %14 : vector<6x1xf32> to vector<6x2016xf32>
      %16 = arith.addf %13, %15 : vector<6x2016xf32>
      %cst_12 = arith.constant 0.000000e+00 : f32
      %17 = vector.broadcast %cst_12 : f32 to vector<6x2016xf32>
      %18 = arith.maximumf %16, %17 : vector<6x2016xf32>
      %c0_13 = arith.constant 0 : index
      %c0_14 = arith.constant 0 : index
      %19 = vector.load %arg4[%c0_13, %c0_14] : memref<6x2016xf32, #tpu.memory_space<vmem>>, vector<6x2016xf32>
      tpu.vector_store %arg4[%c0_13, %c0_14], %18 {strides = array<i32>} : memref<6x2016xf32, #tpu.memory_space<vmem>>, vector<6x2016xf32>,
    } else {
    }
    return
  }
  func.func @transform_0(%arg0: i32) -> (i32, i32, i32) {
    %c0_i32 = arith.constant 0 : i32
    %c0_i32_0 = arith.constant 0 : i32
    %c0_i32_1 = arith.constant 0 : i32
    return %arg0, %c0_i32, %c0_i32_0 : i32, i32, i32
  }
  func.func @transform_1(%arg0: i32) -> (i32, i32) {
    %c0_i32 = arith.constant 0 : i32
    %c0_i32_0 = arith.constant 0 : i32
    %c0_i32_1 = arith.constant 0 : i32
    return %c0_i32, %c0_i32_0 : i32, i32
  }
  func.func @transform_2(%arg0: i32) -> (i32, i32) {
    %c0_i32 = arith.constant 0 : i32
    %c0_i32_0 = arith.constant 0 : i32
    %c0_i32_1 = arith.constant 0 : i32
    return %c0_i32, %c0_i32_0 : i32, i32
  }
  func.func @transform_3(%arg0: i32) -> (i32, i32) {
    %c0_i32 = arith.constant 0 : i32
    %c0_i32_0 = arith.constant 0 : i32
    %c0_i32_1 = arith.constant 0 : i32
    return %c0_i32, %c0_i32_0 : i32, i32
  }
}

module attributes {stable_mosaic.version = 11 : i64} {
  func.func @_conv_relu_pool_kernel(%arg0: i32, %arg1: memref<1x150x384xf32, #tpu.memory_space<vmem>>, %arg2: memref<16x150xf32, #tpu.memory_space<vmem>>, %arg3: memref<16x1xf32, #tpu.memory_space<vmem>>, %arg4: memref<16x384xf32, #tpu.memory_space<vmem>>) attributes {dimension_semantics = [#tpu.dimension_semantics<arbitrary>], iteration_bounds = array<i64: 4>, scalar_prefetch = 0 : i64, scratch_operands = 0 : i64, tpu.core_type = #tpu.core_type<tc>, window_params = [{transform_indices = @transform_0, window_bounds = array<i64: 1, 150, 384>}, {pipeline_mode = #tpu.pipeline_mode<synchronous>, transform_indices = @transform_1, window_bounds = array<i64: 16, 150>}, {pipeline_mode = #tpu.pipeline_mode<synchronous>, transform_indices = @transform_2, window_bounds = array<i64: 16, 1>}, {pipeline_mode = #tpu.pipeline_mode<synchronous>, transform_indices = @transform_3, window_bounds = array<i64: 16, 384>}]} {
    %c0 = arith.constant 0 : index
    %c0_0 = arith.constant 0 : index
    %0 = vector.load %arg2[%c0, %c0_0] : memref<16x150xf32, #tpu.memory_space<vmem>>, vector<16x150xf32>
    %c0_1 = arith.constant 0 : index
    %c0_2 = arith.constant 0 : index
    %c0_3 = arith.constant 0 : index
    %1 = vector.load %arg1[%c0_1, %c0_2, %c0_3] : memref<1x150x384xf32, #tpu.memory_space<vmem>>, vector<1x150x384xf32>
    %2 = vector.shape_cast %1 : vector<1x150x384xf32> to vector<150x384xf32>
    %cst = arith.constant dense<0.000000e+00> : vector<16x384xf32>
    %3 = tpu.matmul %0, %2, %cst {dimension_numbers = #tpu.dot_dimension_numbers<[1], [0], [0], [1], [0, 0, 1, 1], [], []>} : vector<16x150xf32>, vector<150x384xf32>, vector<16x384xf32> -> vector<16x384xf32>
    %c0_i32 = arith.constant 0 : i32
    %4 = arith.cmpi eq, %arg0, %c0_i32 : i32
    %5 = arith.extui %4 : i1 to i32
    %c0_i32_4 = arith.constant 0 : i32
    %6 = arith.cmpi ne, %5, %c0_i32_4 : i32
    scf.if %6 {
      %c0_8 = arith.constant 0 : index
      %c0_9 = arith.constant 0 : index
      %13 = vector.load %arg4[%c0_8, %c0_9] : memref<16x384xf32, #tpu.memory_space<vmem>>, vector<16x384xf32>
      tpu.vector_store %arg4[%c0_8, %c0_9], %3 {strides = array<i32>} : memref<16x384xf32, #tpu.memory_space<vmem>>, vector<16x384xf32>,
    } else {
    }
    %c0_i32_5 = arith.constant 0 : i32
    %7 = arith.cmpi ne, %arg0, %c0_i32_5 : i32
    %8 = arith.extui %7 : i1 to i32
    %c0_i32_6 = arith.constant 0 : i32
    %9 = arith.cmpi ne, %8, %c0_i32_6 : i32
    scf.if %9 {
      %c0_8 = arith.constant 0 : index
      %c0_9 = arith.constant 0 : index
      %13 = vector.load %arg4[%c0_8, %c0_9] : memref<16x384xf32, #tpu.memory_space<vmem>>, vector<16x384xf32>
      %14 = arith.maximumf %13, %3 : vector<16x384xf32>
      %c0_10 = arith.constant 0 : index
      %c0_11 = arith.constant 0 : index
      %15 = vector.load %arg4[%c0_10, %c0_11] : memref<16x384xf32, #tpu.memory_space<vmem>>, vector<16x384xf32>
      tpu.vector_store %arg4[%c0_10, %c0_11], %14 {strides = array<i32>} : memref<16x384xf32, #tpu.memory_space<vmem>>, vector<16x384xf32>,
    } else {
    }
    %c3_i32 = arith.constant 3 : i32
    %10 = arith.cmpi eq, %arg0, %c3_i32 : i32
    %11 = arith.extui %10 : i1 to i32
    %c0_i32_7 = arith.constant 0 : i32
    %12 = arith.cmpi ne, %11, %c0_i32_7 : i32
    scf.if %12 {
      %c0_8 = arith.constant 0 : index
      %c0_9 = arith.constant 0 : index
      %13 = vector.load %arg4[%c0_8, %c0_9] : memref<16x384xf32, #tpu.memory_space<vmem>>, vector<16x384xf32>
      %c0_10 = arith.constant 0 : index
      %c0_11 = arith.constant 0 : index
      %14 = vector.load %arg3[%c0_10, %c0_11] : memref<16x1xf32, #tpu.memory_space<vmem>>, vector<16x1xf32>
      %15 = vector.broadcast %14 : vector<16x1xf32> to vector<16x384xf32>
      %16 = arith.addf %13, %15 : vector<16x384xf32>
      %cst_12 = arith.constant 0.000000e+00 : f32
      %17 = vector.broadcast %cst_12 : f32 to vector<16x384xf32>
      %18 = arith.maximumf %16, %17 : vector<16x384xf32>
      %c0_13 = arith.constant 0 : index
      %c0_14 = arith.constant 0 : index
      %19 = vector.load %arg4[%c0_13, %c0_14] : memref<16x384xf32, #tpu.memory_space<vmem>>, vector<16x384xf32>
      tpu.vector_store %arg4[%c0_13, %c0_14], %18 {strides = array<i32>} : memref<16x384xf32, #tpu.memory_space<vmem>>, vector<16x384xf32>,
    } else {
    }
    return
  }
  func.func @transform_0(%arg0: i32) -> (i32, i32, i32) {
    %c0_i32 = arith.constant 0 : i32
    %c0_i32_0 = arith.constant 0 : i32
    %c0_i32_1 = arith.constant 0 : i32
    return %arg0, %c0_i32, %c0_i32_0 : i32, i32, i32
  }
  func.func @transform_1(%arg0: i32) -> (i32, i32) {
    %c0_i32 = arith.constant 0 : i32
    %c0_i32_0 = arith.constant 0 : i32
    %c0_i32_1 = arith.constant 0 : i32
    return %c0_i32, %c0_i32_0 : i32, i32
  }
  func.func @transform_2(%arg0: i32) -> (i32, i32) {
    %c0_i32 = arith.constant 0 : i32
    %c0_i32_0 = arith.constant 0 : i32
    %c0_i32_1 = arith.constant 0 : i32
    return %c0_i32, %c0_i32_0 : i32, i32
  }
  func.func @transform_3(%arg0: i32) -> (i32, i32) {
    %c0_i32 = arith.constant 0 : i32
    %c0_i32_0 = arith.constant 0 : i32
    %c0_i32_1 = arith.constant 0 : i32
    return %c0_i32, %c0_i32_0 : i32, i32
  }
}

module attributes {stable_mosaic.version = 11 : i64} {
  func.func @_mlp_kernel(%arg0: i32, %arg1: memref<2x768xf32, #tpu.memory_space<vmem>>, %arg2: memref<768x500xbf16, #tpu.memory_space<vmem>>, %arg3: memref<1x500xf32, #tpu.memory_space<vmem>>, %arg4: memref<500x200xf32, #tpu.memory_space<vmem>>, %arg5: memref<1x200xf32, #tpu.memory_space<vmem>>, %arg6: memref<200x10xf32, #tpu.memory_space<vmem>>, %arg7: memref<1x10xf32, #tpu.memory_space<vmem>>, %arg8: memref<2x10xf32, #tpu.memory_space<vmem>>, %arg9: memref<2x500xf32, #tpu.memory_space<vmem>>) attributes {dimension_semantics = [#tpu.dimension_semantics<arbitrary>], iteration_bounds = array<i64: 4>, scalar_prefetch = 0 : i64, scratch_operands = 1 : i64, tpu.core_type = #tpu.core_type<tc>, window_params = [{transform_indices = @transform_0, window_bounds = array<i64: 2, 768>}, {transform_indices = @transform_1, window_bounds = array<i64: 768, 500>}, {pipeline_mode = #tpu.pipeline_mode<synchronous>, transform_indices = @transform_2, window_bounds = array<i64: 1, 500>}, {pipeline_mode = #tpu.pipeline_mode<synchronous>, transform_indices = @transform_3, window_bounds = array<i64: 500, 200>}, {pipeline_mode = #tpu.pipeline_mode<synchronous>, transform_indices = @transform_4, window_bounds = array<i64: 1, 200>}, {pipeline_mode = #tpu.pipeline_mode<synchronous>, transform_indices = @transform_5, window_bounds = array<i64: 200, 10>}, {pipeline_mode = #tpu.pipeline_mode<synchronous>, transform_indices = @transform_6, window_bounds = array<i64: 1, 10>}, {pipeline_mode = #tpu.pipeline_mode<synchronous>, transform_indices = @transform_7, window_bounds = array<i64: 2, 10>}]} {
    %c0_i32 = arith.constant 0 : i32
    %0 = arith.cmpi eq, %arg0, %c0_i32 : i32
    %1 = arith.extui %0 : i1 to i32
    %c0_i32_0 = arith.constant 0 : i32
    %2 = arith.cmpi ne, %1, %c0_i32_0 : i32
    scf.if %2 {
      %cst_9 = arith.constant 0.000000e+00 : f32
      %13 = vector.broadcast %cst_9 : f32 to vector<2x500xf32>
      %c0_10 = arith.constant 0 : index
      %c0_11 = arith.constant 0 : index
      %14 = vector.load %arg9[%c0_10, %c0_11] : memref<2x500xf32, #tpu.memory_space<vmem>>, vector<2x500xf32>
      tpu.vector_store %arg9[%c0_10, %c0_11], %13 {strides = array<i32>} : memref<2x500xf32, #tpu.memory_space<vmem>>, vector<2x500xf32>,
    } else {
    }
    %c0 = arith.constant 0 : index
    %c0_1 = arith.constant 0 : index
    %3 = vector.load %arg9[%c0, %c0_1] : memref<2x500xf32, #tpu.memory_space<vmem>>, vector<2x500xf32>
    %c0_2 = arith.constant 0 : index
    %c0_3 = arith.constant 0 : index
    %4 = vector.load %arg1[%c0_2, %c0_3] : memref<2x768xf32, #tpu.memory_space<vmem>>, vector<2x768xf32>
    %5 = arith.truncf %4 : vector<2x768xf32> to vector<2x768xbf16>
    %c0_4 = arith.constant 0 : index
    %c0_5 = arith.constant 0 : index
    %6 = vector.load %arg2[%c0_4, %c0_5] : memref<768x500xbf16, #tpu.memory_space<vmem>>, vector<768x500xbf16>
    %cst = arith.constant dense<0.000000e+00> : vector<2x500xf32>
    %7 = tpu.matmul %5, %6, %cst {dimension_numbers = #tpu.dot_dimension_numbers<[1], [0], [0], [1], [0, 0, 1, 1], [], []>} : vector<2x768xbf16>, vector<768x500xbf16>, vector<2x500xf32> -> vector<2x500xf32>
    %8 = arith.addf %3, %7 : vector<2x500xf32>
    %c0_6 = arith.constant 0 : index
    %c0_7 = arith.constant 0 : index
    %9 = vector.load %arg9[%c0_6, %c0_7] : memref<2x500xf32, #tpu.memory_space<vmem>>, vector<2x500xf32>
    tpu.vector_store %arg9[%c0_6, %c0_7], %8 {strides = array<i32>} : memref<2x500xf32, #tpu.memory_space<vmem>>, vector<2x500xf32>,
    %c3_i32 = arith.constant 3 : i32
    %10 = arith.cmpi eq, %arg0, %c3_i32 : i32
    %11 = arith.extui %10 : i1 to i32
    %c0_i32_8 = arith.constant 0 : i32
    %12 = arith.cmpi ne, %11, %c0_i32_8 : i32
    scf.if %12 {
      %c0_9 = arith.constant 0 : index
      %c0_10 = arith.constant 0 : index
      %13 = vector.load %arg9[%c0_9, %c0_10] : memref<2x500xf32, #tpu.memory_space<vmem>>, vector<2x500xf32>
      %c0_11 = arith.constant 0 : index
      %c0_12 = arith.constant 0 : index
      %14 = vector.load %arg3[%c0_11, %c0_12] : memref<1x500xf32, #tpu.memory_space<vmem>>, vector<1x500xf32>
      %15 = vector.broadcast %14 : vector<1x500xf32> to vector<2x500xf32>
      %16 = arith.addf %13, %15 : vector<2x500xf32>
      %cst_13 = arith.constant 0.000000e+00 : f32
      %17 = vector.broadcast %cst_13 : f32 to vector<2x500xf32>
      %18 = arith.maximumf %16, %17 : vector<2x500xf32>
      %c0_14 = arith.constant 0 : index
      %c0_15 = arith.constant 0 : index
      %19 = vector.load %arg4[%c0_14, %c0_15] : memref<500x200xf32, #tpu.memory_space<vmem>>, vector<500x200xf32>
      %cst_16 = arith.constant dense<0.000000e+00> : vector<2x200xf32>
      %20 = tpu.matmul %18, %19, %cst_16 {dimension_numbers = #tpu.dot_dimension_numbers<[1], [0], [0], [1], [0, 0, 1, 1], [], []>} : vector<2x500xf32>, vector<500x200xf32>, vector<2x200xf32> -> vector<2x200xf32>
      %c0_17 = arith.constant 0 : index
      %c0_18 = arith.constant 0 : index
      %21 = vector.load %arg5[%c0_17, %c0_18] : memref<1x200xf32, #tpu.memory_space<vmem>>, vector<1x200xf32>
      %22 = vector.broadcast %21 : vector<1x200xf32> to vector<2x200xf32>
      %23 = arith.addf %20, %22 : vector<2x200xf32>
      %cst_19 = arith.constant 0.000000e+00 : f32
      %24 = vector.broadcast %cst_19 : f32 to vector<2x200xf32>
      %25 = arith.maximumf %23, %24 : vector<2x200xf32>
      %c0_20 = arith.constant 0 : index
      %c0_21 = arith.constant 0 : index
      %26 = vector.load %arg6[%c0_20, %c0_21] : memref<200x10xf32, #tpu.memory_space<vmem>>, vector<200x10xf32>
      %cst_22 = arith.constant dense<0.000000e+00> : vector<2x10xf32>
      %27 = tpu.matmul %25, %26, %cst_22 {dimension_numbers = #tpu.dot_dimension_numbers<[1], [0], [0], [1], [0, 0, 1, 1], [], []>} : vector<2x200xf32>, vector<200x10xf32>, vector<2x10xf32> -> vector<2x10xf32>
      %c0_23 = arith.constant 0 : index
      %c0_24 = arith.constant 0 : index
      %28 = vector.load %arg7[%c0_23, %c0_24] : memref<1x10xf32, #tpu.memory_space<vmem>>, vector<1x10xf32>
      %29 = vector.broadcast %28 : vector<1x10xf32> to vector<2x10xf32>
      %30 = arith.addf %27, %29 : vector<2x10xf32>
      %c0_25 = arith.constant 0 : index
      %c0_26 = arith.constant 0 : index
      %31 = vector.load %arg8[%c0_25, %c0_26] : memref<2x10xf32, #tpu.memory_space<vmem>>, vector<2x10xf32>
      tpu.vector_store %arg8[%c0_25, %c0_26], %30 {strides = array<i32>} : memref<2x10xf32, #tpu.memory_space<vmem>>, vector<2x10xf32>,
    } else {
    }
    return
  }
  func.func @transform_0(%arg0: i32) -> (i32, i32) {
    %c0_i32 = arith.constant 0 : i32
    %c0_i32_0 = arith.constant 0 : i32
    return %c0_i32, %arg0 : i32, i32
  }
  func.func @transform_1(%arg0: i32) -> (i32, i32) {
    %c0_i32 = arith.constant 0 : i32
    %c0_i32_0 = arith.constant 0 : i32
    return %arg0, %c0_i32 : i32, i32
  }
  func.func @transform_2(%arg0: i32) -> (i32, i32) {
    %c0_i32 = arith.constant 0 : i32
    %c0_i32_0 = arith.constant 0 : i32
    %c0_i32_1 = arith.constant 0 : i32
    return %c0_i32, %c0_i32_0 : i32, i32
  }
  func.func @transform_3(%arg0: i32) -> (i32, i32) {
    %c0_i32 = arith.constant 0 : i32
    %c0_i32_0 = arith.constant 0 : i32
    %c0_i32_1 = arith.constant 0 : i32
    return %c0_i32, %c0_i32_0 : i32, i32
  }
  func.func @transform_4(%arg0: i32) -> (i32, i32) {
    %c0_i32 = arith.constant 0 : i32
    %c0_i32_0 = arith.constant 0 : i32
    %c0_i32_1 = arith.constant 0 : i32
    return %c0_i32, %c0_i32_0 : i32, i32
  }
  func.func @transform_5(%arg0: i32) -> (i32, i32) {
    %c0_i32 = arith.constant 0 : i32
    %c0_i32_0 = arith.constant 0 : i32
    %c0_i32_1 = arith.constant 0 : i32
    return %c0_i32, %c0_i32_0 : i32, i32
  }
  func.func @transform_6(%arg0: i32) -> (i32, i32) {
    %c0_i32 = arith.constant 0 : i32
    %c0_i32_0 = arith.constant 0 : i32
    %c0_i32_1 = arith.constant 0 : i32
    return %c0_i32, %c0_i32_0 : i32, i32
  }
  func.func @transform_7(%arg0: i32) -> (i32, i32) {
    %c0_i32 = arith.constant 0 : i32
    %c0_i32_0 = arith.constant 0 : i32
    %c0_i32_1 = arith.constant 0 : i32
    return %c0_i32, %c0_i32_0 : i32, i32
  }
}

</mosaic_0001>

<llo_original>
// kernel: lenet_forward.3
$region0: #{lenet_forward.3}
  #allocation0 [shape = 'u32[]', space=smem, size = 0x4, offset = 0x4, fixed_abs, tag = 'smem constant byte address 0x4 - core index']
  #allocation1 [shape = 'u32[72,128]{1,0:T(1,128)}', space=vmem, size = 0x9000, scoped, tag = 'internal scratch']
  %s0 = inlined_call_operand.vmem [shape: f32[4,75,2016], index: 0, kind: input, shape index: {}]
  %s1 = inlined_call_operand.vmem [shape: f32[6,75], index: 1, kind: input, shape index: {}]
  %s2 = inlined_call_operand.vmem [shape: f32[6,1], index: 2, kind: input, shape index: {}]
  %s3 = inlined_call_operand.vmem [shape: f32[6,2016], index: 3, kind: output, shape index: {}]
  %s4 = sld [smem:[#allocation0]]
  $region57: #{lenet_forward.3} parent=0
    _
  %s6 = ssub.s32 1, %s4
  %s7 = scalar_select 0, %s6, %s4
  loop: start=0, step=1, limit=6
  $region2: #{lenet_forward.3} parent=0 // loop_pre_header
    _
  $region3: #{lenet_forward.3} parent=0 // loop_header
    %s9 = sphi 0, %s13
    %p10 = scmp.ge.s32.totalorder %s9, 6
    %s19 = sphi 0, %s21
    %s22 = sphi 0, %s19
    %s23 = sphi 0, %s22
    %s39 = sphi 0, %s23
    %s43 = sphi 0, %s43
    %s45 = sphi 0, %s43
    %s46 = sphi 0, %s45
    %s60 = sphi 0, %s46
    %s64 = sphi 0, %s64
    %s66 = sphi 0, %s64
    %s67 = sphi 0, %s66
    %s81 = sphi 0, %s67
    %s85 = sphi 0, %s85
    %s87 = sphi 0, %s85
    %s88 = sphi 0, %s87
    %s102 = sphi 0, %s88
  $region4: #{lenet_forward.3} parent=0 // loop_header_branch
    %12 = sbr.rel (%p10) target = $region8
  $region5: #{lenet_forward.3} parent=0 // loop_body
    %s14 = ssub.s32 %s9, 1
    %s15 = ssub.s32 %s9, 2
    %s16 = sadd.s32 %s9, 1
    %s17 = ssub.s32 %s9, %s16
    %p18 = scmp.eq.s32.totalorder %s17, 0
    %s20 = sadd.s32 %s19, 1
    %s21 = scalar_select %p18, %s19, %s20
    %p24 = pneg %p18
    %p25 = scmp.eq.s32.totalorder %s9, 3
    %p26 = por %p24, %p25
    %p27 = scmp.ne.s32.totalorder %s19, %s22
    %p28 = scmp.eq.s32.totalorder %s9, 0
    %p29 = por %p27, %p28
    %p30 = scmp.ne.s32.totalorder %s19, %s22
    %p31 = scmp.eq.s32.totalorder %s14, 3
    %p32 = por %p30, %p31
    %p33 = scmp.ne.s32.totalorder %s22, %s23
    %p34 = scmp.eq.s32.totalorder %s14, 0
    %p35 = por %p33, %p34
    %p36 = scmp.ne.s32.totalorder %s22, %s23
    %p37 = scmp.eq.s32.totalorder %s15, 3
    %p38 = por %p36, %p37
    %p40 = scmp.ne.s32.totalorder %s23, %s39
    %p41 = scmp.eq.s32.totalorder %s15, 0
    %p42 = por %p40, %p41
    %s44 = sadd.s32 %s43, 1
    %p47 = scmp.eq.s32.totalorder %s9, 3
    %p48 = scmp.ne.s32.totalorder %s43, %s45
    %p49 = scmp.eq.s32.totalorder %s9, 0
    %p50 = por %p48, %p49
    %p51 = scmp.ne.s32.totalorder %s43, %s45
    %p52 = scmp.eq.s32.totalorder %s14, 3
    %p53 = por %p51, %p52
    %p54 = scmp.ne.s32.totalorder %s45, %s46
    %p55 = scmp.eq.s32.totalorder %s14, 0
    %p56 = por %p54, %p55
    %p57 = scmp.ne.s32.totalorder %s45, %s46
    %p58 = scmp.eq.s32.totalorder %s15, 3
    %p59 = por %p57, %p58
    %p61 = scmp.ne.s32.totalorder %s46, %s60
    %p62 = scmp.eq.s32.totalorder %s15, 0
    %p63 = por %p61, %p62
    %s65 = sadd.s32 %s64, 1
    %p68 = scmp.eq.s32.totalorder %s9, 3
    %p69 = scmp.ne.s32.totalorder %s64, %s66
    %p70 = scmp.eq.s32.totalorder %s9, 0
    %p71 = por %p69, %p70
    %p72 = scmp.ne.s32.totalorder %s64, %s66
    %p73 = scmp.eq.s32.totalorder %s14, 3
    %p74 = por %p72, %p73
    %p75 = scmp.ne.s32.totalorder %s66, %s67
    %p76 = scmp.eq.s32.totalorder %s14, 0
    %p77 = por %p75, %p76
    %p78 = scmp.ne.s32.totalorder %s66, %s67
    %p79 = scmp.eq.s32.totalorder %s15, 3
    %p80 = por %p78, %p79
    %p82 = scmp.ne.s32.totalorder %s67, %s81
    %p83 = scmp.eq.s32.totalorder %s15, 0
    %p84 = por %p82, %p83
    %s86 = sadd.s32 %s85, 1
    %p89 = scmp.eq.s32.totalorder %s9, 3
    %p90 = scmp.ne.s32.totalorder %s85, %s87
    %p91 = scmp.eq.s32.totalorder %s9, 0
    %p92 = por %p90, %p91
    %p93 = scmp.ne.s32.totalorder %s85, %s87
    %p94 = scmp.eq.s32.totalorder %s14, 3
    %p95 = por %p93, %p94
    %p96 = scmp.ne.s32.totalorder %s87, %s88
    %p97 = scmp.eq.s32.totalorder %s14, 0
    %p98 = por %p96, %p97
    %p99 = scmp.ne.s32.totalorder %s87, %s88
    %p100 = scmp.eq.s32.totalorder %s15, 3
    %p101 = por %p99, %p100
    %p103 = scmp.ne.s32.totalorder %s88, %s102
    %p104 = scmp.eq.s32.totalorder %s15, 0
    %p105 = por %p103, %p104
    %p106 = scmp.le.s32.totalorder 1, %s9
    %p107 = scmp.lt.s32.totalorder %s9, 5
    %p108 = pnand %p106, %p107
    %p109 = pneg %p108
    // Predicated region
    $region9: #{lenet_forward.3} parent=5 // pred_check
      _
    $region10: #{lenet_forward.3} parent=5 // pred_check_branch
      %111 = sbr.rel (%p108) target = $region12
    $region11: #{lenet_forward.3} parent=5 // pred_region
      %s112 = ssub.s32 %s9, 1
      // Predicated region
      $region13: #{lenet_forward.3} parent=11 // pred_check
        %p113 = pneg %p56
      $region14: #{lenet_forward.3} parent=11 // pred_check_branch
        %115 = sbr.rel (%p113) target = $region16
      $region15: #{lenet_forward.3} parent=11 // pred_region
        _
      $region16: #{lenet_forward.3} parent=11 // pred_fallthru
        _
      // Predicated region
      $region17: #{lenet_forward.3} parent=11 // pred_check
        %p116 = pneg %p77
      $region18: #{lenet_forward.3} parent=11 // pred_check_branch
        %118 = sbr.rel (%p116) target = $region20
      $region19: #{lenet_forward.3} parent=11 // pred_region
        _
      $region20: #{lenet_forward.3} parent=11 // pred_fallthru
        _
    $region12: #{lenet_forward.3} parent=5 // pred_fallthru
      _
    %p119 = scmp.lt.s32.totalorder %s9, 4
    // Predicated region
    $region21: #{lenet_forward.3} parent=5 // pred_check
      %p120 = pneg %p119
    $region22: #{lenet_forward.3} parent=5 // pred_check_branch
      %122 = sbr.rel (%p120) target = $region24
    $region23: #{lenet_forward.3} parent=5 // pred_region
      // Predicated region
      $region25: #{lenet_forward.3} parent=23 // pred_check
        %p123 = pneg %p29
      $region26: #{lenet_forward.3} parent=23 // pred_check_branch
        %125 = sbr.rel (%p123) target = $region28
      $region27: #{lenet_forward.3} parent=23 // pred_region
        %p126 = scmp.lt.s32.totalorder %s9, 3
        %s127 = scalar_select %p126, %s9, 3
        %s128 = smul.addr %s127, 160
        %s129 = smul.addr %s128, 8
        %s130 = scalar_lea.vmem %s0, %s129
      $region28: #{lenet_forward.3} parent=23 // pred_fallthru
        _
    $region24: #{lenet_forward.3} parent=5 // pred_fallthru
      _
    %p131 = scmp.le.s32.totalorder 1, %s9
    %p132 = scmp.lt.s32.totalorder %s9, 5
    %p133 = pnand %p131, %p132
    %p134 = pneg %p133
    // Predicated region
    $region29: #{lenet_forward.3} parent=5 // pred_check
      _
    $region30: #{lenet_forward.3} parent=5 // pred_check_branch
      %136 = sbr.rel (%p133) target = $region32
    $region31: #{lenet_forward.3} parent=5 // pred_region
      %s137 = ssub.s32 %s9, 1
      %p138 = scmp.lt.s32.totalorder %s14, 3
      %s139 = scalar_select %p138, %s14, 3
      %s140 = smul.addr %s139, 160
      %s141 = smul.addr %s140, 8
      %s142 = scalar_lea.vmem %s0, %s141
      %p143 = pneg %p35
      %p144 = pneg %p32
      %p145 = pneg %p56
      %p146 = pneg %p53
      %p147 = pneg %p77
      %p148 = pneg %p74
      %p149 = pneg %p98
      %p150 = pneg %p95
      %p151 = scmp.lt.s32.totalorder %s14, 3
      %s152 = scalar_select %p151, %s14, 3
      %s153 = smul.addr %s152, 160
      %s154 = smul.addr %s153, 8
      %s155 = scalar_lea.vmem %s0, %s154
      %v156 = vld [vmem:[%s1] sm:$0x3f]
      %v157 = vld [vmem:[%s155] sm:$0xff]
      %v158 = vld [vmem:[%s155 + $0x8] sm:$0xff]
      %v159 = vld [vmem:[%s155 + $0x10] sm:$0xff]
      %v160 = vld [vmem:[%s155 + $0x18] sm:$0xff]
      %v161 = vld [vmem:[%s155 + $0x20] sm:$0xff]
      %v162 = vld [vmem:[%s155 + $0x28] sm:$0xff]
      %v163 = vld [vmem:[%s155 + $0x30] sm:$0xff]
      %v164 = vld [vmem:[%s155 + $0x38] sm:$0xff]
      %v165 = vld [vmem:[%s155 + $0x40] sm:$0xff]
      %v166 = vld [vmem:[%s155 + $0x48] sm:$0xff]
      %v167 = vld [vmem:[%s155 + $0x50] sm:$0xff]
      %v168 = vld [vmem:[%s155 + $0x58] sm:$0xff]
      %v169 = vld [vmem:[%s155 + $0x60] sm:$0xff]
      %v170 = vld [vmem:[%s155 + $0x68] sm:$0xff]
      %v171 = vld [vmem:[%s155 + $0x70] sm:$0xff]
      %v172 = vld [vmem:[%s155 + $0x78] sm:$0xff]
      %v173 = vld [vmem:[%s155 + $0x80] sm:$0xff]
      %v174 = vld [vmem:[%s155 + $0x88] sm:$0xff]
      %v175 = vld [vmem:[%s155 + $0x90] sm:$0xff]
      %v176 = vld [vmem:[%s155 + $0x98] sm:$0xff]
      %v177 = vld [vmem:[%s155 + $0xa0] sm:$0xff]
      %v178 = vld [vmem:[%s155 + $0xa8] sm:$0xff]
      %v179 = vld [vmem:[%s155 + $0xb0] sm:$0xff]
      %v180 = vld [vmem:[%s155 + $0xb8] sm:$0xff]
      %v181 = vld [vmem:[%s155 + $0xc0] sm:$0xff]
      %v182 = vld [vmem:[%s155 + $0xc8] sm:$0xff]
      %v183 = vld [vmem:[%s155 + $0xd0] sm:$0xff]
      %v184 = vld [vmem:[%s155 + $0xd8] sm:$0xff]
      %v185 = vld [vmem:[%s155 + $0xe0] sm:$0xff]
      %v186 = vld [vmem:[%s155 + $0xe8] sm:$0xff]
      %v187 = vld [vmem:[%s155 + $0xf0] sm:$0xff]
      %v188 = vld [vmem:[%s155 + $0xf8] sm:$0xff]
      %v189 = vld [vmem:[%s155 + $0x100] sm:$0xff]
      %v190 = vld [vmem:[%s155 + $0x108] sm:$0xff]
      %v191 = vld [vmem:[%s155 + $0x110] sm:$0xff]
      %v192 = vld [vmem:[%s155 + $0x118] sm:$0xff]
      %v193 = vld [vmem:[%s155 + $0x120] sm:$0xff]
      %v194 = vld [vmem:[%s155 + $0x128] sm:$0xff]
      %v195 = vld [vmem:[%s155 + $0x130] sm:$0xff]
      %v196 = vld [vmem:[%s155 + $0x138] sm:$0xff]
      %v197 = vld [vmem:[%s155 + $0x140] sm:$0xff]
      %v198 = vld [vmem:[%s155 + $0x148] sm:$0xff]
      %v199 = vld [vmem:[%s155 + $0x150] sm:$0xff]
      %v200 = vld [vmem:[%s155 + $0x158] sm:$0xff]
      %v201 = vld [vmem:[%s155 + $0x160] sm:$0xff]
      %v202 = vld [vmem:[%s155 + $0x168] sm:$0xff]
      %v203 = vld [vmem:[%s155 + $0x170] sm:$0xff]
      %v204 = vld [vmem:[%s155 + $0x178] sm:$0xff]
      %v205 = vld [vmem:[%s155 + $0x180] sm:$0xff]
      %v206 = vld [vmem:[%s155 + $0x188] sm:$0xff]
      %v207 = vld [vmem:[%s155 + $0x190] sm:$0xff]
      %v208 = vld [vmem:[%s155 + $0x198] sm:$0xff]
      %v209 = vld [vmem:[%s155 + $0x1a0] sm:$0xff]
      %v210 = vld [vmem:[%s155 + $0x1a8] sm:$0xff]
      %v211 = vld [vmem:[%s155 + $0x1b0] sm:$0xff]
      %v212 = vld [vmem:[%s155 + $0x1b8] sm:$0xff]
      %v213 = vld [vmem:[%s155 + $0x1c0] sm:$0xff]
      %v214 = vld [vmem:[%s155 + $0x1c8] sm:$0xff]
      %v215 = vld [vmem:[%s155 + $0x1d0] sm:$0xff]
      %v216 = vld [vmem:[%s155 + $0x1d8] sm:$0xff]
      %v217 = vld [vmem:[%s155 + $0x1e0] sm:$0xff]
      %v218 = vld [vmem:[%s155 + $0x1e8] sm:$0xff]
      %v219 = vld [vmem:[%s155 + $0x1f0] sm:$0xff]
      %v220 = vld [vmem:[%s155 + $0x1f8] sm:$0xff]
      %v221 = vld [vmem:[%s155 + $0x200] sm:$0xff]
      %v222 = vld [vmem:[%s155 + $0x208] sm:$0xff]
      %v223 = vld [vmem:[%s155 + $0x210] sm:$0xff]
      %v224 = vld [vmem:[%s155 + $0x218] sm:$0xff]
      %v225 = vld [vmem:[%s155 + $0x220] sm:$0xff]
      %v226 = vld [vmem:[%s155 + $0x228] sm:$0xff]
      %v227 = vld [vmem:[%s155 + $0x230] sm:$0xff]
      %v228 = vld [vmem:[%s155 + $0x238] sm:$0xff]
      %v229 = vld [vmem:[%s155 + $0x240] sm:$0xff]
      %v230 = vld [vmem:[%s155 + $0x248] sm:$0xff]
      %v231 = vld [vmem:[%s155 + $0x250] sm:$0xff]
      %v232 = vld [vmem:[%s155 + $0x258] sm:$0xff]
      %v233 = vld [vmem:[%s155 + $0x260] sm:$0xff]
      %v234 = vld [vmem:[%s155 + $0x268] sm:$0xff]
      %v235 = vld [vmem:[%s155 + $0x270] sm:$0xff]
      %v236 = vld [vmem:[%s155 + $0x278] sm:$0xff]
      %v237 = vld [vmem:[%s155 + $0x280] sm:$0xff]
      %v238 = vld [vmem:[%s155 + $0x288] sm:$0xff]
      %v239 = vld [vmem:[%s155 + $0x290] sm:$0xff]
      %v240 = vld [vmem:[%s155 + $0x298] sm:$0xff]
      %v241 = vld [vmem:[%s155 + $0x2a0] sm:$0xff]
      %v242 = vld [vmem:[%s155 + $0x2a8] sm:$0xff]
      %v243 = vld [vmem:[%s155 + $0x2b0] sm:$0xff]
      %v244 = vld [vmem:[%s155 + $0x2b8] sm:$0xff]
      %v245 = vld [vmem:[%s155 + $0x2c0] sm:$0xff]
      %v246 = vld [vmem:[%s155 + $0x2c8] sm:$0xff]
      %v247 = vld [vmem:[%s155 + $0x2d0] sm:$0xff]
      %v248 = vld [vmem:[%s155 + $0x2d8] sm:$0xff]
      %v249 = vld [vmem:[%s155 + $0x2e0] sm:$0xff]
      %v250 = vld [vmem:[%s155 + $0x2e8] sm:$0xff]
      %v251 = vld [vmem:[%s155 + $0x2f0] sm:$0xff]
      %v252 = vld [vmem:[%s155 + $0x2f8] sm:$0xff]
      %v253 = vld [vmem:[%s155 + $0x300] sm:$0xff]
      %v254 = vld [vmem:[%s155 + $0x308] sm:$0xff]
      %v255 = vld [vmem:[%s155 + $0x310] sm:$0xff]
      %v256 = vld [vmem:[%s155 + $0x318] sm:$0xff]
      %v257 = vld [vmem:[%s155 + $0x320] sm:$0xff]
      %v258 = vld [vmem:[%s155 + $0x328] sm:$0xff]
      %v259 = vld [vmem:[%s155 + $0x330] sm:$0xff]
      %v260 = vld [vmem:[%s155 + $0x338] sm:$0xff]
      %v261 = vld [vmem:[%s155 + $0x340] sm:$0xff]
      %v262 = vld [vmem:[%s155 + $0x348] sm:$0xff]
      %v263 = vld [vmem:[%s155 + $0x350] sm:$0xff]
      %v264 = vld [vmem:[%s155 + $0x358] sm:$0xff]
      %v265 = vld [vmem:[%s155 + $0x360] sm:$0xff]
      %v266 = vld [vmem:[%s155 + $0x368] sm:$0xff]
      %v267 = vld [vmem:[%s155 + $0x370] sm:$0xff]
      %v268 = vld [vmem:[%s155 + $0x378] sm:$0xff]
      %v269 = vld [vmem:[%s155 + $0x380] sm:$0xff]
      %v270 = vld [vmem:[%s155 + $0x388] sm:$0xff]
      %v271 = vld [vmem:[%s155 + $0x390] sm:$0xff]
      %v272 = vld [vmem:[%s155 + $0x398] sm:$0xff]
      %v273 = vld [vmem:[%s155 + $0x3a0] sm:$0xff]
      %v274 = vld [vmem:[%s155 + $0x3a8] sm:$0xff]
      %v275 = vld [vmem:[%s155 + $0x3b0] sm:$0xff]
      %v276 = vld [vmem:[%s155 + $0x3b8] sm:$0xff]
      %v277 = vld [vmem:[%s155 + $0x3c0] sm:$0xff]
      %v278 = vld [vmem:[%s155 + $0x3c8] sm:$0xff]
      %v279 = vld [vmem:[%s155 + $0x3d0] sm:$0xff]
      %v280 = vld [vmem:[%s155 + $0x3d8] sm:$0xff]
      %v281 = vld [vmem:[%s155 + $0x3e0] sm:$0xff]
      %v282 = vld [vmem:[%s155 + $0x3e8] sm:$0xff]
      %v283 = vld [vmem:[%s155 + $0x3f0] sm:$0xff]
      %v284 = vld [vmem:[%s155 + $0x3f8] sm:$0xff]
      %v285 = vld [vmem:[%s155 + $0x400] sm:$0xff]
      %v286 = vld [vmem:[%s155 + $0x408] sm:$0xff]
      %v287 = vld [vmem:[%s155 + $0x410] sm:$0xff]
      %v288 = vld [vmem:[%s155 + $0x418] sm:$0xff]
      %v289 = vld [vmem:[%s155 + $0x420] sm:$0xff]
      %v290 = vld [vmem:[%s155 + $0x428] sm:$0xff]
      %v291 = vld [vmem:[%s155 + $0x430] sm:$0xff]
      %v292 = vld [vmem:[%s155 + $0x438] sm:$0xff]
      %v293 = vld [vmem:[%s155 + $0x440] sm:$0xff]
      %v294 = vld [vmem:[%s155 + $0x448] sm:$0xff]
      %v295 = vld [vmem:[%s155 + $0x450] sm:$0xff]
      %v296 = vld [vmem:[%s155 + $0x458] sm:$0xff]
      %v297 = vld [vmem:[%s155 + $0x460] sm:$0xff]
      %v298 = vld [vmem:[%s155 + $0x468] sm:$0xff]
      %v299 = vld [vmem:[%s155 + $0x470] sm:$0xff]
      %v300 = vld [vmem:[%s155 + $0x478] sm:$0xff]
      %v301 = vld [vmem:[%s155 + $0x480] sm:$0x7]
      %v302 = vld [vmem:[%s155 + $0x488] sm:$0x7]
      %v303 = vld [vmem:[%s155 + $0x490] sm:$0x7]
      %v304 = vld [vmem:[%s155 + $0x498] sm:$0x7]
      %v305 = vld [vmem:[%s155 + $0x4a0] sm:$0x7]
      %v306 = vld [vmem:[%s155 + $0x4a8] sm:$0x7]
      %v307 = vld [vmem:[%s155 + $0x4b0] sm:$0x7]
      %v308 = vld [vmem:[%s155 + $0x4b8] sm:$0x7]
      %v309 = vld [vmem:[%s155 + $0x4c0] sm:$0x7]
      %v310 = vld [vmem:[%s155 + $0x4c8] sm:$0x7]
      %v311 = vld [vmem:[%s155 + $0x4d0] sm:$0x7]
      %v312 = vld [vmem:[%s155 + $0x4d8] sm:$0x7]
      %v313 = vld [vmem:[%s155 + $0x4e0] sm:$0x7]
      %v314 = vld [vmem:[%s155 + $0x4e8] sm:$0x7]
      %v315 = vld [vmem:[%s155 + $0x4f0] sm:$0x7]
      %v316 = vld [vmem:[%s155 + $0x4f8] sm:$0x7]
      %vm317 = vcmask 613376
      %v319 = vsel %vm317, %v156, 0
      %vm321 = vcmask 1042432
      %v323 = vsel %vm321, %v301, 0
      %v326 = vsel %vm321, %v302, 0
      %v329 = vsel %vm321, %v303, 0
      %v332 = vsel %vm321, %v304, 0
      %v335 = vsel %vm321, %v305, 0
      %v338 = vsel %vm321, %v306, 0
      %v341 = vsel %vm321, %v307, 0
      %v344 = vsel %vm321, %v308, 0
      %v347 = vsel %vm321, %v309, 0
      %v350 = vsel %vm321, %v310, 0
      %v353 = vsel %vm321, %v311, 0
      %v356 = vsel %vm321, %v312, 0
      %v359 = vsel %vm321, %v313, 0
      %v362 = vsel %vm321, %v314, 0
      %v365 = vsel %vm321, %v315, 0
      %v368 = vsel %vm321, %v316, 0
      %370 = vmatpush.msra.mxu0 0.0
      %371 = vmatpush.msra.mxu0 0.0
      %372 = vmatpush.msra.mxu0 0.0
      %373 = vmatpush.msra.mxu0 0.0
      %374 = vmatpush.msra.mxu0 0.0
      %375 = vmatpush.msra.mxu0 0.0
      %376 = vmatpush.msra.mxu0 %v323
      %377 = vmatpush.msra.mxu0 %v285
      %378 = vmatpush.msra.mxu0 %v269
      %379 = vmatpush.msra.mxu0 %v253
      %380 = vmatpush.msra.mxu0 %v237
      %381 = vmatpush.msra.mxu0 %v221
      %382 = vmatpush.msra.mxu0 %v205
      %383 = vmatpush.msra.mxu0 %v189
      %384 = vmatpush.msra.mxu0 %v173
      %385 = vmatpush.msra.mxu0 %v157
      %386 = vmatmul.f32.gmra.mxu0 %v319
      %v387 = vpop.f32.mrf.mxu0
      %v388 = vadd.f32 0.0, %v387
      %389 = vdwg.mxu0
      %390 = vmatpush.msra.mxu0 0.0
      %391 = vmatpush.msra.mxu0 0.0
      %392 = vmatpush.msra.mxu0 0.0
      %393 = vmatpush.msra.mxu0 0.0
      %394 = vmatpush.msra.mxu0 0.0
      %395 = vmatpush.msra.mxu0 0.0
      %396 = vmatpush.msra.mxu0 %v326
      %397 = vmatpush.msra.mxu0 %v286
      %398 = vmatpush.msra.mxu0 %v270
      %399 = vmatpush.msra.mxu0 %v254
      %400 = vmatpush.msra.mxu0 %v238
      %401 = vmatpush.msra.mxu0 %v222
      %402 = vmatpush.msra.mxu0 %v206
      %403 = vmatpush.msra.mxu0 %v190
      %404 = vmatpush.msra.mxu0 %v174
      %405 = vmatpush.msra.mxu0 %v158
      %406 = vmatmul.f32.gmra.mxu0 %v319
      %v407 = vpop.f32.mrf.mxu0
      %v408 = vadd.f32 0.0, %v407
      %409 = vdwg.mxu0
      %410 = vmatpush.msra.mxu0 0.0
      %411 = vmatpush.msra.mxu0 0.0
      %412 = vmatpush.msra.mxu0 0.0
      %413 = vmatpush.msra.mxu0 0.0
      %414 = vmatpush.msra.mxu0 0.0
      %415 = vmatpush.msra.mxu0 0.0
      %416 = vmatpush.msra.mxu0 %v329
      %417 = vmatpush.msra.mxu0 %v287
      %418 = vmatpush.msra.mxu0 %v271
      %419 = vmatpush.msra.mxu0 %v255
      %420 = vmatpush.msra.mxu0 %v239
      %421 = vmatpush.msra.mxu0 %v223
      %422 = vmatpush.msra.mxu0 %v207
      %423 = vmatpush.msra.mxu0 %v191
      %424 = vmatpush.msra.mxu0 %v175
      %425 = vmatpush.msra.mxu0 %v159
      %426 = vmatmul.f32.gmra.mxu0 %v319
      %v427 = vpop.f32.mrf.mxu0
      %v428 = vadd.f32 0.0, %v427
      %429 = vdwg.mxu0
      %430 = vmatpush.msra.mxu0 0.0
      %431 = vmatpush.msra.mxu0 0.0
      %432 = vmatpush.msra.mxu0 0.0
      %433 = vmatpush.msra.mxu0 0.0
      %434 = vmatpush.msra.mxu0 0.0
      %435 = vmatpush.msra.mxu0 0.0
      %436 = vmatpush.msra.mxu0 %v332
      %437 = vmatpush.msra.mxu0 %v288
      %438 = vmatpush.msra.mxu0 %v272
      %439 = vmatpush.msra.mxu0 %v256
      %440 = vmatpush.msra.mxu0 %v240
      %441 = vmatpush.msra.mxu0 %v224
      %442 = vmatpush.msra.mxu0 %v208
      %443 = vmatpush.msra.mxu0 %v192
      %444 = vmatpush.msra.mxu0 %v176
      %445 = vmatpush.msra.mxu0 %v160
      %446 = vmatmul.f32.gmra.mxu0 %v319
      %v447 = vpop.f32.mrf.mxu0
      %v448 = vadd.f32 0.0, %v447
      %449 = vdwg.mxu0
      %450 = vmatpush.msra.mxu0 0.0
      %451 = vmatpush.msra.mxu0 0.0
      %452 = vmatpush.msra.mxu0 0.0
      %453 = vmatpush.msra.mxu0 0.0
      %454 = vmatpush.msra.mxu0 0.0
      %455 = vmatpush.msra.mxu0 0.0
      %456 = vmatpush.msra.mxu0 %v335
      %457 = vmatpush.msra.mxu0 %v289
      %458 = vmatpush.msra.mxu0 %v273
      %459 = vmatpush.msra.mxu0 %v257
      %460 = vmatpush.msra.mxu0 %v241
      %461 = vmatpush.msra.mxu0 %v225
      %462 = vmatpush.msra.mxu0 %v209
      %463 = vmatpush.msra.mxu0 %v193
      %464 = vmatpush.msra.mxu0 %v177
      %465 = vmatpush.msra.mxu0 %v161
      %466 = vmatmul.f32.gmra.mxu0 %v319
      %v467 = vpop.f32.mrf.mxu0
      %v468 = vadd.f32 0.0, %v467
      %469 = vdwg.mxu0
      %470 = vmatpush.msra.mxu0 0.0
      %471 = vmatpush.msra.mxu0 0.0
      %472 = vmatpush.msra.mxu0 0.0
      %473 = vmatpush.msra.mxu0 0.0
      %474 = vmatpush.msra.mxu0 0.0
      %475 = vmatpush.msra.mxu0 0.0
      %476 = vmatpush.msra.mxu0 %v338
      %477 = vmatpush.msra.mxu0 %v290
      %478 = vmatpush.msra.mxu0 %v274
      %479 = vmatpush.msra.mxu0 %v258
      %480 = vmatpush.msra.mxu0 %v242
      %481 = vmatpush.msra.mxu0 %v226
      %482 = vmatpush.msra.mxu0 %v210
      %483 = vmatpush.msra.mxu0 %v194
      %484 = vmatpush.msra.mxu0 %v178
      %485 = vmatpush.msra.mxu0 %v162
      %486 = vmatmul.f32.gmra.mxu0 %v319
      %v487 = vpop.f32.mrf.mxu0
      %v488 = vadd.f32 0.0, %v487
      %489 = vdwg.mxu0
      %490 = vmatpush.msra.mxu0 0.0
      %491 = vmatpush.msra.mxu0 0.0
      %492 = vmatpush.msra.mxu0 0.0
      %493 = vmatpush.msra.mxu0 0.0
      %494 = vmatpush.msra.mxu0 0.0
      %495 = vmatpush.msra.mxu0 0.0
      %496 = vmatpush.msra.mxu0 %v341
      %497 = vmatpush.msra.mxu0 %v291
      %498 = vmatpush.msra.mxu0 %v275
      %499 = vmatpush.msra.mxu0 %v259
      %500 = vmatpush.msra.mxu0 %v243
      %501 = vmatpush.msra.mxu0 %v227
      %502 = vmatpush.msra.mxu0 %v211
      %503 = vmatpush.msra.mxu0 %v195
      %504 = vmatpush.msra.mxu0 %v179
      %505 = vmatpush.msra.mxu0 %v163
      %506 = vmatmul.f32.gmra.mxu0 %v319
      %v507 = vpop.f32.mrf.mxu0
      %v508 = vadd.f32 0.0, %v507
      %509 = vdwg.mxu0
      %510 = vmatpush.msra.mxu0 0.0
      %511 = vmatpush.msra.mxu0 0.0
      %512 = vmatpush.msra.mxu0 0.0
      %513 = vmatpush.msra.mxu0 0.0
      %514 = vmatpush.msra.mxu0 0.0
      %515 = vmatpush.msra.mxu0 0.0
      %516 = vmatpush.msra.mxu0 %v344
      %517 = vmatpush.msra.mxu0 %v292
      %518 = vmatpush.msra.mxu0 %v276
      %519 = vmatpush.msra.mxu0 %v260
      %520 = vmatpush.msra.mxu0 %v244
      %521 = vmatpush.msra.mxu0 %v228
      %522 = vmatpush.msra.mxu0 %v212
      %523 = vmatpush.msra.mxu0 %v196
      %524 = vmatpush.msra.mxu0 %v180
      %525 = vmatpush.msra.mxu0 %v164
      %526 = vmatmul.f32.gmra.mxu0 %v319
      %v527 = vpop.f32.mrf.mxu0
      %v528 = vadd.f32 0.0, %v527
      %529 = vdwg.mxu0
      %530 = vmatpush.msra.mxu0 0.0
      %531 = vmatpush.msra.mxu0 0.0
      %532 = vmatpush.msra.mxu0 0.0
      %533 = vmatpush.msra.mxu0 0.0
      %534 = vmatpush.msra.mxu0 0.0
      %535 = vmatpush.msra.mxu0 0.0
      %536 = vmatpush.msra.mxu0 %v347
      %537 = vmatpush.msra.mxu0 %v293
      %538 = vmatpush.msra.mxu0 %v277
      %539 = vmatpush.msra.mxu0 %v261
      %540 = vmatpush.msra.mxu0 %v245
      %541 = vmatpush.msra.mxu0 %v229
      %542 = vmatpush.msra.mxu0 %v213
      %543 = vmatpush.msra.mxu0 %v197
      %544 = vmatpush.msra.mxu0 %v181
      %545 = vmatpush.msra.mxu0 %v165
      %546 = vmatmul.f32.gmra.mxu0 %v319
      %v547 = vpop.f32.mrf.mxu0
      %v548 = vadd.f32 0.0, %v547
      %549 = vdwg.mxu0
      %550 = vmatpush.msra.mxu0 0.0
      %551 = vmatpush.msra.mxu0 0.0
      %552 = vmatpush.msra.mxu0 0.0
      %553 = vmatpush.msra.mxu0 0.0
      %554 = vmatpush.msra.mxu0 0.0
      %555 = vmatpush.msra.mxu0 0.0
      %556 = vmatpush.msra.mxu0 %v350
      %557 = vmatpush.msra.mxu0 %v294
      %558 = vmatpush.msra.mxu0 %v278
      %559 = vmatpush.msra.mxu0 %v262
      %560 = vmatpush.msra.mxu0 %v246
      %561 = vmatpush.msra.mxu0 %v230
      %562 = vmatpush.msra.mxu0 %v214
      %563 = vmatpush.msra.mxu0 %v198
      %564 = vmatpush.msra.mxu0 %v182
      %565 = vmatpush.msra.mxu0 %v166
      %566 = vmatmul.f32.gmra.mxu0 %v319
      %v567 = vpop.f32.mrf.mxu0
      %v568 = vadd.f32 0.0, %v567
      %569 = vdwg.mxu0
      %570 = vmatpush.msra.mxu0 0.0
      %571 = vmatpush.msra.mxu0 0.0
      %572 = vmatpush.msra.mxu0 0.0
      %573 = vmatpush.msra.mxu0 0.0
      %574 = vmatpush.msra.mxu0 0.0
      %575 = vmatpush.msra.mxu0 0.0
      %576 = vmatpush.msra.mxu0 %v353
      %577 = vmatpush.msra.mxu0 %v295
      %578 = vmatpush.msra.mxu0 %v279
      %579 = vmatpush.msra.mxu0 %v263
      %580 = vmatpush.msra.mxu0 %v247
      %581 = vmatpush.msra.mxu0 %v231
      %582 = vmatpush.msra.mxu0 %v215
      %583 = vmatpush.msra.mxu0 %v199
      %584 = vmatpush.msra.mxu0 %v183
      %585 = vmatpush.msra.mxu0 %v167
      %586 = vmatmul.f32.gmra.mxu0 %v319
      %v587 = vpop.f32.mrf.mxu0
      %v588 = vadd.f32 0.0, %v587
      %589 = vdwg.mxu0
      %590 = vmatpush.msra.mxu0 0.0
      %591 = vmatpush.msra.mxu0 0.0
      %592 = vmatpush.msra.mxu0 0.0
      %593 = vmatpush.msra.mxu0 0.0
      %594 = vmatpush.msra.mxu0 0.0
      %595 = vmatpush.msra.mxu0 0.0
      %596 = vmatpush.msra.mxu0 %v356
      %597 = vmatpush.msra.mxu0 %v296
      %598 = vmatpush.msra.mxu0 %v280
      %599 = vmatpush.msra.mxu0 %v264
      %600 = vmatpush.msra.mxu0 %v248
      %601 = vmatpush.msra.mxu0 %v232
      %602 = vmatpush.msra.mxu0 %v216
      %603 = vmatpush.msra.mxu0 %v200
      %604 = vmatpush.msra.mxu0 %v184
      %605 = vmatpush.msra.mxu0 %v168
      %606 = vmatmul.f32.gmra.mxu0 %v319
      %v607 = vpop.f32.mrf.mxu0
      %v608 = vadd.f32 0.0, %v607
      %609 = vdwg.mxu0
      %610 = vmatpush.msra.mxu0 0.0
      %611 = vmatpush.msra.mxu0 0.0
      %612 = vmatpush.msra.mxu0 0.0
      %613 = vmatpush.msra.mxu0 0.0
      %614 = vmatpush.msra.mxu0 0.0
      %615 = vmatpush.msra.mxu0 0.0
      %616 = vmatpush.msra.mxu0 %v359
      %617 = vmatpush.msra.mxu0 %v297
      %618 = vmatpush.msra.mxu0 %v281
      %619 = vmatpush.msra.mxu0 %v265
      %620 = vmatpush.msra.mxu0 %v249
      %621 = vmatpush.msra.mxu0 %v233
      %622 = vmatpush.msra.mxu0 %v217
      %623 = vmatpush.msra.mxu0 %v201
      %624 = vmatpush.msra.mxu0 %v185
      %625 = vmatpush.msra.mxu0 %v169
      %626 = vmatmul.f32.gmra.mxu0 %v319
      %v627 = vpop.f32.mrf.mxu0
      %v628 = vadd.f32 0.0, %v627
      %629 = vdwg.mxu0
      %630 = vmatpush.msra.mxu0 0.0
      %631 = vmatpush.msra.mxu0 0.0
      %632 = vmatpush.msra.mxu0 0.0
      %633 = vmatpush.msra.mxu0 0.0
      %634 = vmatpush.msra.mxu0 0.0
      %635 = vmatpush.msra.mxu0 0.0
      %636 = vmatpush.msra.mxu0 %v362
      %637 = vmatpush.msra.mxu0 %v298
      %638 = vmatpush.msra.mxu0 %v282
      %639 = vmatpush.msra.mxu0 %v266
      %640 = vmatpush.msra.mxu0 %v250
      %641 = vmatpush.msra.mxu0 %v234
      %642 = vmatpush.msra.mxu0 %v218
      %643 = vmatpush.msra.mxu0 %v202
      %644 = vmatpush.msra.mxu0 %v186
      %645 = vmatpush.msra.mxu0 %v170
      %646 = vmatmul.f32.gmra.mxu0 %v319
      %v647 = vpop.f32.mrf.mxu0
      %v648 = vadd.f32 0.0, %v647
      %649 = vdwg.mxu0
      %650 = vmatpush.msra.mxu0 0.0
      %651 = vmatpush.msra.mxu0 0.0
      %652 = vmatpush.msra.mxu0 0.0
      %653 = vmatpush.msra.mxu0 0.0
      %654 = vmatpush.msra.mxu0 0.0
      %655 = vmatpush.msra.mxu0 0.0
      %656 = vmatpush.msra.mxu0 %v365
      %657 = vmatpush.msra.mxu0 %v299
      %658 = vmatpush.msra.mxu0 %v283
      %659 = vmatpush.msra.mxu0 %v267
      %660 = vmatpush.msra.mxu0 %v251
      %661 = vmatpush.msra.mxu0 %v235
      %662 = vmatpush.msra.mxu0 %v219
      %663 = vmatpush.msra.mxu0 %v203
      %664 = vmatpush.msra.mxu0 %v187
      %665 = vmatpush.msra.mxu0 %v171
      %666 = vmatmul.f32.gmra.mxu0 %v319
      %v667 = vpop.f32.mrf.mxu0
      %v668 = vadd.f32 0.0, %v667
      %669 = vdwg.mxu0
      %670 = vmatpush.msra.mxu0 0.0
      %671 = vmatpush.msra.mxu0 0.0
      %672 = vmatpush.msra.mxu0 0.0
      %673 = vmatpush.msra.mxu0 0.0
      %674 = vmatpush.msra.mxu0 0.0
      %675 = vmatpush.msra.mxu0 0.0
      %676 = vmatpush.msra.mxu0 %v368
      %677 = vmatpush.msra.mxu0 %v300
      %678 = vmatpush.msra.mxu0 %v284
      %679 = vmatpush.msra.mxu0 %v268
      %680 = vmatpush.msra.mxu0 %v252
      %681 = vmatpush.msra.mxu0 %v236
      %682 = vmatpush.msra.mxu0 %v220
      %683 = vmatpush.msra.mxu0 %v204
      %684 = vmatpush.msra.mxu0 %v188
      %685 = vmatpush.msra.mxu0 %v172
      %686 = vmatmul.f32.gmra.mxu0 %v319
      %v687 = vpop.f32.mrf.mxu0
      %v688 = vadd.f32 0.0, %v687
      %689 = vdwg.mxu0
      %p690 = scmp.eq.s32.totalorder %s14, 0
      // Predicated region
      $region33: #{lenet_forward.3} parent=31 // pred_check
        %p691 = pneg %p690
      $region34: #{lenet_forward.3} parent=31 // pred_check_branch
        %693 = sbr.rel (%p691) target = $region36
      $region35: #{lenet_forward.3} parent=31 // pred_region
        %694 = vst [vmem:[%s3] sm:$0x3f] %v388
        %695 = vst [vmem:[%s3 + $0x8] sm:$0x3f] %v408
        %696 = vst [vmem:[%s3 + $0x10] sm:$0x3f] %v428
        %697 = vst [vmem:[%s3 + $0x18] sm:$0x3f] %v448
        %698 = vst [vmem:[%s3 + $0x20] sm:$0x3f] %v468
        %699 = vst [vmem:[%s3 + $0x28] sm:$0x3f] %v488
        %700 = vst [vmem:[%s3 + $0x30] sm:$0x3f] %v508
        %701 = vst [vmem:[%s3 + $0x38] sm:$0x3f] %v528
        %702 = vst [vmem:[%s3 + $0x40] sm:$0x3f] %v548
        %703 = vst [vmem:[%s3 + $0x48] sm:$0x3f] %v568
        %704 = vst [vmem:[%s3 + $0x50] sm:$0x3f] %v588
        %705 = vst [vmem:[%s3 + $0x58] sm:$0x3f] %v608
        %706 = vst [vmem:[%s3 + $0x60] sm:$0x3f] %v628
        %707 = vst [vmem:[%s3 + $0x68] sm:$0x3f] %v648
        %708 = vst [vmem:[%s3 + $0x70] sm:$0x3f] %v668
        %vm709 = vcmask 783360
        %710 = vst.msk [vmem:[%s3 + $0x78] sm:$0x3f] %vm709, %v688
      $region36: #{lenet_forward.3} parent=31 // pred_fallthru
        _
      %p711 = scmp.ne.s32.totalorder %s14, 0
      // Predicated region
      $region37: #{lenet_forward.3} parent=31 // pred_check
        %p712 = pneg %p711
      $region38: #{lenet_forward.3} parent=31 // pred_check_branch
        %714 = sbr.rel (%p712) target = $region40
      $region39: #{lenet_forward.3} parent=31 // pred_region
        %v715 = vld [vmem:[%s3] sm:$0x3f]
        %v716 = vld [vmem:[%s3 + $0x8] sm:$0x3f]
        %v717 = vld [vmem:[%s3 + $0x10] sm:$0x3f]
        %v718 = vld [vmem:[%s3 + $0x18] sm:$0x3f]
        %v719 = vld [vmem:[%s3 + $0x20] sm:$0x3f]
        %v720 = vld [vmem:[%s3 + $0x28] sm:$0x3f]
        %v721 = vld [vmem:[%s3 + $0x30] sm:$0x3f]
        %v722 = vld [vmem:[%s3 + $0x38] sm:$0x3f]
        %v723 = vld [vmem:[%s3 + $0x40] sm:$0x3f]
        %v724 = vld [vmem:[%s3 + $0x48] sm:$0x3f]
        %v725 = vld [vmem:[%s3 + $0x50] sm:$0x3f]
        %v726 = vld [vmem:[%s3 + $0x58] sm:$0x3f]
        %v727 = vld [vmem:[%s3 + $0x60] sm:$0x3f]
        %v728 = vld [vmem:[%s3 + $0x68] sm:$0x3f]
        %v729 = vld [vmem:[%s3 + $0x70] sm:$0x3f]
        %v730 = vld [vmem:[%s3 + $0x78] sm:$0x3f]
        %v731 = vmax.f32 %v715, %v388
        %v732 = vmax.f32 %v716, %v408
        %v733 = vmax.f32 %v717, %v428
        %v734 = vmax.f32 %v718, %v448
        %v735 = vmax.f32 %v719, %v468
        %v736 = vmax.f32 %v720, %v488
        %v737 = vmax.f32 %v721, %v508
        %v738 = vmax.f32 %v722, %v528
        %v739 = vmax.f32 %v723, %v548
        %v740 = vmax.f32 %v724, %v568
        %v741 = vmax.f32 %v725, %v588
        %v742 = vmax.f32 %v726, %v608
        %v743 = vmax.f32 %v727, %v628
        %v744 = vmax.f32 %v728, %v648
        %v745 = vmax.f32 %v729, %v668
        %v746 = vmax.f32 %v730, %v688
        %747 = vst [vmem:[%s3] sm:$0x3f] %v731
        %748 = vst [vmem:[%s3 + $0x8] sm:$0x3f] %v732
        %749 = vst [vmem:[%s3 + $0x10] sm:$0x3f] %v733
        %750 = vst [vmem:[%s3 + $0x18] sm:$0x3f] %v734
        %751 = vst [vmem:[%s3 + $0x20] sm:$0x3f] %v735
        %752 = vst [vmem:[%s3 + $0x28] sm:$0x3f] %v736
        %753 = vst [vmem:[%s3 + $0x30] sm:$0x3f] %v737
        %754 = vst [vmem:[%s3 + $0x38] sm:$0x3f] %v738
        %755 = vst [vmem:[%s3 + $0x40] sm:$0x3f] %v739
        %756 = vst [vmem:[%s3 + $0x48] sm:$0x3f] %v740
        %757 = vst [vmem:[%s3 + $0x50] sm:$0x3f] %v741
        %758 = vst [vmem:[%s3 + $0x58] sm:$0x3f] %v742
        %759 = vst [vmem:[%s3 + $0x60] sm:$0x3f] %v743
        %760 = vst [vmem:[%s3 + $0x68] sm:$0x3f] %v744
        %761 = vst [vmem:[%s3 + $0x70] sm:$0x3f] %v745
        %vm762 = vcmask 783360
        %763 = vst.msk [vmem:[%s3 + $0x78] sm:$0x3f] %vm762, %v746
      $region40: #{lenet_forward.3} parent=31 // pred_fallthru
        _
      %p764 = scmp.eq.s32.totalorder %s14, 3
      // Predicated region
      $region41: #{lenet_forward.3} parent=31 // pred_check
        %p765 = pneg %p764
      $region42: #{lenet_forward.3} parent=31 // pred_check_branch
        %767 = sbr.rel (%p765) target = $region44
      $region43: #{lenet_forward.3} parent=31 // pred_region
        %v768 = vld [vmem:[%s3] sm:$0x3f]
        %v769 = vld [vmem:[%s3 + $0x8] sm:$0x3f]
        %v770 = vld [vmem:[%s3 + $0x10] sm:$0x3f]
        %v771 = vld [vmem:[%s3 + $0x18] sm:$0x3f]
        %v772 = vld [vmem:[%s3 + $0x20] sm:$0x3f]
        %v773 = vld [vmem:[%s3 + $0x28] sm:$0x3f]
        %v774 = vld [vmem:[%s3 + $0x30] sm:$0x3f]
        %v775 = vld [vmem:[%s3 + $0x38] sm:$0x3f]
        %v776 = vld [vmem:[%s3 + $0x40] sm:$0x3f]
        %v777 = vld [vmem:[%s3 + $0x48] sm:$0x3f]
        %v778 = vld [vmem:[%s3 + $0x50] sm:$0x3f]
        %v779 = vld [vmem:[%s3 + $0x58] sm:$0x3f]
        %v780 = vld [vmem:[%s3 + $0x60] sm:$0x3f]
        %v781 = vld [vmem:[%s3 + $0x68] sm:$0x3f]
        %v782 = vld [vmem:[%s3 + $0x70] sm:$0x3f]
        %v783 = vld [vmem:[%s3 + $0x78] sm:$0x3f]
        %v784 = vld [vmem:[%s2] sm:$0x3f]
        %786 = vset.pattern.permute.xlu0 0
        %787 = vperm.xlu0 %786, %v784
        %v788 = vpop.permute.xlu0 %787
        %v790 = vadd.f32 %v768, %v788
        %v791 = vadd.f32 %v769, %v788
        %v792 = vadd.f32 %v770, %v788
        %v793 = vadd.f32 %v771, %v788
        %v794 = vadd.f32 %v772, %v788
        %v795 = vadd.f32 %v773, %v788
        %v796 = vadd.f32 %v774, %v788
        %v797 = vadd.f32 %v775, %v788
        %v798 = vadd.f32 %v776, %v788
        %v799 = vadd.f32 %v777, %v788
        %v800 = vadd.f32 %v778, %v788
        %v801 = vadd.f32 %v779, %v788
        %v802 = vadd.f32 %v780, %v788
        %v803 = vadd.f32 %v781, %v788
        %v804 = vadd.f32 %v782, %v788
        %v805 = vadd.f32 %v783, %v788
        %v806 = vmax.f32 %v790, 0.0
        %v807 = vmax.f32 %v791, 0.0
        %v808 = vmax.f32 %v792, 0.0
        %v809 = vmax.f32 %v793, 0.0
        %v810 = vmax.f32 %v794, 0.0
        %v811 = vmax.f32 %v795, 0.0
        %v812 = vmax.f32 %v796, 0.0
        %v813 = vmax.f32 %v797, 0.0
        %v814 = vmax.f32 %v798, 0.0
        %v815 = vmax.f32 %v799, 0.0
        %v816 = vmax.f32 %v800, 0.0
        %v817 = vmax.f32 %v801, 0.0
        %v818 = vmax.f32 %v802, 0.0
        %v819 = vmax.f32 %v803, 0.0
        %v820 = vmax.f32 %v804, 0.0
        %v821 = vmax.f32 %v805, 0.0
        %822 = vst [vmem:[%s3] sm:$0x3f] %v806
        %823 = vst [vmem:[%s3 + $0x8] sm:$0x3f] %v807
        %824 = vst [vmem:[%s3 + $0x10] sm:$0x3f] %v808
        %825 = vst [vmem:[%s3 + $0x18] sm:$0x3f] %v809
        %826 = vst [vmem:[%s3 + $0x20] sm:$0x3f] %v810
        %827 = vst [vmem:[%s3 + $0x28] sm:$0x3f] %v811
        %828 = vst [vmem:[%s3 + $0x30] sm:$0x3f] %v812
        %829 = vst [vmem:[%s3 + $0x38] sm:$0x3f] %v813
        %830 = vst [vmem:[%s3 + $0x40] sm:$0x3f] %v814
        %831 = vst [vmem:[%s3 + $0x48] sm:$0x3f] %v815
        %832 = vst [vmem:[%s3 + $0x50] sm:$0x3f] %v816
        %833 = vst [vmem:[%s3 + $0x58] sm:$0x3f] %v817
        %834 = vst [vmem:[%s3 + $0x60] sm:$0x3f] %v818
        %835 = vst [vmem:[%s3 + $0x68] sm:$0x3f] %v819
        %836 = vst [vmem:[%s3 + $0x70] sm:$0x3f] %v820
        %vm837 = vcmask 783360
        %838 = vst.msk [vmem:[%s3 + $0x78] sm:$0x3f] %vm837, %v821
      $region44: #{lenet_forward.3} parent=31 // pred_fallthru
        _
      // Predicated region
      $region45: #{lenet_forward.3} parent=31 // pred_check
        %p839 = pneg %p95
      $region46: #{lenet_forward.3} parent=31 // pred_check_branch
        %841 = sbr.rel (%p839) target = $region48
      $region47: #{lenet_forward.3} parent=31 // pred_region
        _
      $region48: #{lenet_forward.3} parent=31 // pred_fallthru
        _
      // Predicated region
      $region49: #{lenet_forward.3} parent=31 // pred_check
        %p842 = pneg %p95
      $region50: #{lenet_forward.3} parent=31 // pred_check_branch
        %844 = sbr.rel (%p842) target = $region52
      $region51: #{lenet_forward.3} parent=31 // pred_region
        _
      $region52: #{lenet_forward.3} parent=31 // pred_fallthru
        _
    $region32: #{lenet_forward.3} parent=5 // pred_fallthru
      _
    %p845 = scmp.le.s32.totalorder 2, %s9
    // Predicated region
    $region53: #{lenet_forward.3} parent=5 // pred_check
      %p846 = pneg %p845
    $region54: #{lenet_forward.3} parent=5 // pred_check_branch
      %848 = sbr.rel (%p846) target = $region56
    $region55: #{lenet_forward.3} parent=5 // pred_region
      %s849 = ssub.s32 %s9, 2
    $region56: #{lenet_forward.3} parent=5 // pred_fallthru
      _
  $region6: #{lenet_forward.3} parent=0 // loop_footer
    %s13 = sadd.s32 1, %s9
  $region7: #{lenet_forward.3} parent=0 // loop_footer_branch
    %8 = sbr.rel target = $region3
  $region8: #{lenet_forward.3} parent=0 // loop_exit
    _

// kernel: lenet_forward.4
$region0: #{lenet_forward.4}
  #allocation0 [shape = 'u32[]', space=smem, size = 0x4, offset = 0x4, fixed_abs, tag = 'smem constant byte address 0x4 - core index']
  #allocation1 [shape = 'u32[72,128]{1,0:T(1,128)}', space=vmem, size = 0x9000, scoped, tag = 'internal scratch']
  %s0 = inlined_call_operand.vmem [shape: f32[4,150,384], index: 0, kind: input, shape index: {}]
  %s1 = inlined_call_operand.vmem [shape: f32[16,150], index: 1, kind: input, shape index: {}]
  %s2 = inlined_call_operand.vmem [shape: f32[16,1], index: 2, kind: input, shape index: {}]
  %s3 = inlined_call_operand.vmem [shape: f32[16,384], index: 3, kind: output, shape index: {}]
  %s4 = sld [smem:[#allocation0]]
  $region57: #{lenet_forward.4} parent=0
    _
  %s6 = ssub.s32 1, %s4
  %s7 = scalar_select 0, %s6, %s4
  loop: start=0, step=1, limit=6
  $region2: #{lenet_forward.4} parent=0 // loop_pre_header
    _
  $region3: #{lenet_forward.4} parent=0 // loop_header
    %s9 = sphi 0, %s13
    %p10 = scmp.ge.s32.totalorder %s9, 6
    %s19 = sphi 0, %s21
    %s22 = sphi 0, %s19
    %s23 = sphi 0, %s22
    %s39 = sphi 0, %s23
    %s43 = sphi 0, %s43
    %s45 = sphi 0, %s43
    %s46 = sphi 0, %s45
    %s60 = sphi 0, %s46
    %s64 = sphi 0, %s64
    %s66 = sphi 0, %s64
    %s67 = sphi 0, %s66
    %s81 = sphi 0, %s67
    %s85 = sphi 0, %s85
    %s87 = sphi 0, %s85
    %s88 = sphi 0, %s87
    %s102 = sphi 0, %s88
  $region4: #{lenet_forward.4} parent=0 // loop_header_branch
    %12 = sbr.rel (%p10) target = $region8
  $region5: #{lenet_forward.4} parent=0 // loop_body
    %s14 = ssub.s32 %s9, 1
    %s15 = ssub.s32 %s9, 2
    %s16 = sadd.s32 %s9, 1
    %s17 = ssub.s32 %s9, %s16
    %p18 = scmp.eq.s32.totalorder %s17, 0
    %s20 = sadd.s32 %s19, 1
    %s21 = scalar_select %p18, %s19, %s20
    %p24 = pneg %p18
    %p25 = scmp.eq.s32.totalorder %s9, 3
    %p26 = por %p24, %p25
    %p27 = scmp.ne.s32.totalorder %s19, %s22
    %p28 = scmp.eq.s32.totalorder %s9, 0
    %p29 = por %p27, %p28
    %p30 = scmp.ne.s32.totalorder %s19, %s22
    %p31 = scmp.eq.s32.totalorder %s14, 3
    %p32 = por %p30, %p31
    %p33 = scmp.ne.s32.totalorder %s22, %s23
    %p34 = scmp.eq.s32.totalorder %s14, 0
    %p35 = por %p33, %p34
    %p36 = scmp.ne.s32.totalorder %s22, %s23
    %p37 = scmp.eq.s32.totalorder %s15, 3
    %p38 = por %p36, %p37
    %p40 = scmp.ne.s32.totalorder %s23, %s39
    %p41 = scmp.eq.s32.totalorder %s15, 0
    %p42 = por %p40, %p41
    %s44 = sadd.s32 %s43, 1
    %p47 = scmp.eq.s32.totalorder %s9, 3
    %p48 = scmp.ne.s32.totalorder %s43, %s45
    %p49 = scmp.eq.s32.totalorder %s9, 0
    %p50 = por %p48, %p49
    %p51 = scmp.ne.s32.totalorder %s43, %s45
    %p52 = scmp.eq.s32.totalorder %s14, 3
    %p53 = por %p51, %p52
    %p54 = scmp.ne.s32.totalorder %s45, %s46
    %p55 = scmp.eq.s32.totalorder %s14, 0
    %p56 = por %p54, %p55
    %p57 = scmp.ne.s32.totalorder %s45, %s46
    %p58 = scmp.eq.s32.totalorder %s15, 3
    %p59 = por %p57, %p58
    %p61 = scmp.ne.s32.totalorder %s46, %s60
    %p62 = scmp.eq.s32.totalorder %s15, 0
    %p63 = por %p61, %p62
    %s65 = sadd.s32 %s64, 1
    %p68 = scmp.eq.s32.totalorder %s9, 3
    %p69 = scmp.ne.s32.totalorder %s64, %s66
    %p70 = scmp.eq.s32.totalorder %s9, 0
    %p71 = por %p69, %p70
    %p72 = scmp.ne.s32.totalorder %s64, %s66
    %p73 = scmp.eq.s32.totalorder %s14, 3
    %p74 = por %p72, %p73
    %p75 = scmp.ne.s32.totalorder %s66, %s67
    %p76 = scmp.eq.s32.totalorder %s14, 0
    %p77 = por %p75, %p76
    %p78 = scmp.ne.s32.totalorder %s66, %s67
    %p79 = scmp.eq.s32.totalorder %s15, 3
    %p80 = por %p78, %p79
    %p82 = scmp.ne.s32.totalorder %s67, %s81
    %p83 = scmp.eq.s32.totalorder %s15, 0
    %p84 = por %p82, %p83
    %s86 = sadd.s32 %s85, 1
    %p89 = scmp.eq.s32.totalorder %s9, 3
    %p90 = scmp.ne.s32.totalorder %s85, %s87
    %p91 = scmp.eq.s32.totalorder %s9, 0
    %p92 = por %p90, %p91
    %p93 = scmp.ne.s32.totalorder %s85, %s87
    %p94 = scmp.eq.s32.totalorder %s14, 3
    %p95 = por %p93, %p94
    %p96 = scmp.ne.s32.totalorder %s87, %s88
    %p97 = scmp.eq.s32.totalorder %s14, 0
    %p98 = por %p96, %p97
    %p99 = scmp.ne.s32.totalorder %s87, %s88
    %p100 = scmp.eq.s32.totalorder %s15, 3
    %p101 = por %p99, %p100
    %p103 = scmp.ne.s32.totalorder %s88, %s102
    %p104 = scmp.eq.s32.totalorder %s15, 0
    %p105 = por %p103, %p104
    %p106 = scmp.le.s32.totalorder 1, %s9
    %p107 = scmp.lt.s32.totalorder %s9, 5
    %p108 = pnand %p106, %p107
    %p109 = pneg %p108
    // Predicated region
    $region9: #{lenet_forward.4} parent=5 // pred_check
      _
    $region10: #{lenet_forward.4} parent=5 // pred_check_branch
      %111 = sbr.rel (%p108) target = $region12
    $region11: #{lenet_forward.4} parent=5 // pred_region
      %s112 = ssub.s32 %s9, 1
      // Predicated region
      $region13: #{lenet_forward.4} parent=11 // pred_check
        %p113 = pneg %p56
      $region14: #{lenet_forward.4} parent=11 // pred_check_branch
        %115 = sbr.rel (%p113) target = $region16
      $region15: #{lenet_forward.4} parent=11 // pred_region
        _
      $region16: #{lenet_forward.4} parent=11 // pred_fallthru
        _
      // Predicated region
      $region17: #{lenet_forward.4} parent=11 // pred_check
        %p116 = pneg %p77
      $region18: #{lenet_forward.4} parent=11 // pred_check_branch
        %118 = sbr.rel (%p116) target = $region20
      $region19: #{lenet_forward.4} parent=11 // pred_region
        _
      $region20: #{lenet_forward.4} parent=11 // pred_fallthru
        _
    $region12: #{lenet_forward.4} parent=5 // pred_fallthru
      _
    %p119 = scmp.lt.s32.totalorder %s9, 4
    // Predicated region
    $region21: #{lenet_forward.4} parent=5 // pred_check
      %p120 = pneg %p119
    $region22: #{lenet_forward.4} parent=5 // pred_check_branch
      %122 = sbr.rel (%p120) target = $region24
    $region23: #{lenet_forward.4} parent=5 // pred_region
      // Predicated region
      $region25: #{lenet_forward.4} parent=23 // pred_check
        %p123 = pneg %p29
      $region26: #{lenet_forward.4} parent=23 // pred_check_branch
        %125 = sbr.rel (%p123) target = $region28
      $region27: #{lenet_forward.4} parent=23 // pred_region
        %p126 = scmp.lt.s32.totalorder %s9, 3
        %s127 = scalar_select %p126, %s9, 3
        %s128 = smul.addr %s127, 57
        %s129 = smul.addr %s128, 8
        %s130 = scalar_lea.vmem %s0, %s129
      $region28: #{lenet_forward.4} parent=23 // pred_fallthru
        _
    $region24: #{lenet_forward.4} parent=5 // pred_fallthru
      _
    %p131 = scmp.le.s32.totalorder 1, %s9
    %p132 = scmp.lt.s32.totalorder %s9, 5
    %p133 = pnand %p131, %p132
    %p134 = pneg %p133
    // Predicated region
    $region29: #{lenet_forward.4} parent=5 // pred_check
      _
    $region30: #{lenet_forward.4} parent=5 // pred_check_branch
      %136 = sbr.rel (%p133) target = $region32
    $region31: #{lenet_forward.4} parent=5 // pred_region
      %s137 = ssub.s32 %s9, 1
      %p138 = scmp.lt.s32.totalorder %s14, 3
      %s139 = scalar_select %p138, %s14, 3
      %s140 = smul.addr %s139, 57
      %s141 = smul.addr %s140, 8
      %s142 = scalar_lea.vmem %s0, %s141
      %p143 = pneg %p35
      %p144 = pneg %p32
      %p145 = pneg %p56
      %p146 = pneg %p53
      %p147 = pneg %p77
      %p148 = pneg %p74
      %p149 = pneg %p98
      %p150 = pneg %p95
      %p151 = scmp.lt.s32.totalorder %s14, 3
      %s152 = scalar_select %p151, %s14, 3
      %s153 = smul.addr %s152, 57
      %s154 = smul.addr %s153, 8
      %s155 = scalar_lea.vmem %s0, %s154
      %v156 = vld [vmem:[%s1] sm:$0xff]
      %v157 = vld [vmem:[%s1 + $0x8] sm:$0xff]
      %v158 = vld [vmem:[%s1 + $0x10] sm:$0xff]
      %v159 = vld [vmem:[%s1 + $0x18] sm:$0xff]
      %v160 = vld [vmem:[%s155] sm:$0xff]
      %v161 = vld [vmem:[%s155 + $0x8] sm:$0xff]
      %v162 = vld [vmem:[%s155 + $0x10] sm:$0xff]
      %v163 = vld [vmem:[%s155 + $0x18] sm:$0xff]
      %v164 = vld [vmem:[%s155 + $0x20] sm:$0xff]
      %v165 = vld [vmem:[%s155 + $0x28] sm:$0xff]
      %v166 = vld [vmem:[%s155 + $0x30] sm:$0xff]
      %v167 = vld [vmem:[%s155 + $0x38] sm:$0xff]
      %v168 = vld [vmem:[%s155 + $0x40] sm:$0xff]
      %v169 = vld [vmem:[%s155 + $0x48] sm:$0xff]
      %v170 = vld [vmem:[%s155 + $0x50] sm:$0xff]
      %v171 = vld [vmem:[%s155 + $0x58] sm:$0xff]
      %v172 = vld [vmem:[%s155 + $0x60] sm:$0xff]
      %v173 = vld [vmem:[%s155 + $0x68] sm:$0xff]
      %v174 = vld [vmem:[%s155 + $0x70] sm:$0xff]
      %v175 = vld [vmem:[%s155 + $0x78] sm:$0xff]
      %v176 = vld [vmem:[%s155 + $0x80] sm:$0xff]
      %v177 = vld [vmem:[%s155 + $0x88] sm:$0xff]
      %v178 = vld [vmem:[%s155 + $0x90] sm:$0xff]
      %v179 = vld [vmem:[%s155 + $0x98] sm:$0xff]
      %v180 = vld [vmem:[%s155 + $0xa0] sm:$0xff]
      %v181 = vld [vmem:[%s155 + $0xa8] sm:$0xff]
      %v182 = vld [vmem:[%s155 + $0xb0] sm:$0xff]
      %v183 = vld [vmem:[%s155 + $0xb8] sm:$0xff]
      %v184 = vld [vmem:[%s155 + $0xc0] sm:$0xff]
      %v185 = vld [vmem:[%s155 + $0xc8] sm:$0xff]
      %v186 = vld [vmem:[%s155 + $0xd0] sm:$0xff]
      %v187 = vld [vmem:[%s155 + $0xd8] sm:$0xff]
      %v188 = vld [vmem:[%s155 + $0xe0] sm:$0xff]
      %v189 = vld [vmem:[%s155 + $0xe8] sm:$0xff]
      %v190 = vld [vmem:[%s155 + $0xf0] sm:$0xff]
      %v191 = vld [vmem:[%s155 + $0xf8] sm:$0xff]
      %v192 = vld [vmem:[%s155 + $0x100] sm:$0xff]
      %v193 = vld [vmem:[%s155 + $0x108] sm:$0xff]
      %v194 = vld [vmem:[%s155 + $0x110] sm:$0xff]
      %v195 = vld [vmem:[%s155 + $0x118] sm:$0xff]
      %v196 = vld [vmem:[%s155 + $0x120] sm:$0xff]
      %v197 = vld [vmem:[%s155 + $0x128] sm:$0xff]
      %v198 = vld [vmem:[%s155 + $0x130] sm:$0xff]
      %v199 = vld [vmem:[%s155 + $0x138] sm:$0xff]
      %v200 = vld [vmem:[%s155 + $0x140] sm:$0xff]
      %v201 = vld [vmem:[%s155 + $0x148] sm:$0xff]
      %v202 = vld [vmem:[%s155 + $0x150] sm:$0xff]
      %v203 = vld [vmem:[%s155 + $0x158] sm:$0xff]
      %v204 = vld [vmem:[%s155 + $0x160] sm:$0xff]
      %v205 = vld [vmem:[%s155 + $0x168] sm:$0xff]
      %v206 = vld [vmem:[%s155 + $0x170] sm:$0xff]
      %v207 = vld [vmem:[%s155 + $0x178] sm:$0xff]
      %v208 = vld [vmem:[%s155 + $0x180] sm:$0xff]
      %v209 = vld [vmem:[%s155 + $0x188] sm:$0xff]
      %v210 = vld [vmem:[%s155 + $0x190] sm:$0xff]
      %v211 = vld [vmem:[%s155 + $0x198] sm:$0xff]
      %v212 = vld [vmem:[%s155 + $0x1a0] sm:$0xff]
      %v213 = vld [vmem:[%s155 + $0x1a8] sm:$0xff]
      %v214 = vld [vmem:[%s155 + $0x1b0] sm:$0x3f]
      %v215 = vld [vmem:[%s155 + $0x1b8] sm:$0x3f]
      %v216 = vld [vmem:[%s155 + $0x1c0] sm:$0x3f]
      %vm217 = vcmask 179200
      %v219 = vsel %vm217, %v157, 0
      %v222 = vsel %vm217, %v159, 0
      %vm224 = vcmask 1045504
      %v226 = vsel %vm224, %v214, 0
      %v229 = vsel %vm224, %v215, 0
      %v232 = vsel %vm224, %v216, 0
      %234 = vmatpush.msra.mxu0 %v205
      %235 = vmatpush.msra.mxu0 %v202
      %236 = vmatpush.msra.mxu0 %v199
      %237 = vmatpush.msra.mxu0 %v196
      %238 = vmatpush.msra.mxu0 %v193
      %239 = vmatpush.msra.mxu0 %v190
      %240 = vmatpush.msra.mxu0 %v187
      %241 = vmatpush.msra.mxu0 %v184
      %242 = vmatpush.msra.mxu0 %v181
      %243 = vmatpush.msra.mxu0 %v178
      %244 = vmatpush.msra.mxu0 %v175
      %245 = vmatpush.msra.mxu0 %v172
      %246 = vmatpush.msra.mxu0 %v169
      %247 = vmatpush.msra.mxu0 %v166
      %248 = vmatpush.msra.mxu0 %v163
      %249 = vmatpush.msra.mxu0 %v160
      %250 = vmatmul.f32.gmra.mxu0 %v156
      %v251 = vpop.f32.mrf.mxu0
      %v252 = vadd.f32 0.0, %v251
      %253 = vmatmul.f32.gmra.mxu0 %v158
      %v254 = vpop.f32.mrf.mxu0
      %v255 = vadd.f32 0.0, %v254
      %256 = vdwg.mxu0
      %257 = vmatpush.msra.mxu0 0.0
      %258 = vmatpush.msra.mxu0 0.0
      %259 = vmatpush.msra.mxu0 0.0
      %260 = vmatpush.msra.mxu0 0.0
      %261 = vmatpush.msra.mxu0 0.0
      %262 = vmatpush.msra.mxu0 0.0
      %263 = vmatpush.msra.mxu0 0.0
      %264 = vmatpush.msra.mxu0 0.0
      %265 = vmatpush.msra.mxu0 0.0
      %266 = vmatpush.msra.mxu0 0.0
      %267 = vmatpush.msra.mxu0 0.0
      %268 = vmatpush.msra.mxu0 0.0
      %269 = vmatpush.msra.mxu0 0.0
      %270 = vmatpush.msra.mxu0 %v226
      %271 = vmatpush.msra.mxu0 %v211
      %272 = vmatpush.msra.mxu0 %v208
      %273 = vmatmul.f32.gmra.mxu0 %v219
      %v274 = vpop.f32.mrf.mxu0
      %v275 = vadd.f32 %v252, %v274
      %276 = vmatmul.f32.gmra.mxu0 %v222
      %v277 = vpop.f32.mrf.mxu0
      %v278 = vadd.f32 %v255, %v277
      %279 = vdwg.mxu0
      %280 = vmatpush.msra.mxu0 %v206
      %281 = vmatpush.msra.mxu0 %v203
      %282 = vmatpush.msra.mxu0 %v200
      %283 = vmatpush.msra.mxu0 %v197
      %284 = vmatpush.msra.mxu0 %v194
      %285 = vmatpush.msra.mxu0 %v191
      %286 = vmatpush.msra.mxu0 %v188
      %287 = vmatpush.msra.mxu0 %v185
      %288 = vmatpush.msra.mxu0 %v182
      %289 = vmatpush.msra.mxu0 %v179
      %290 = vmatpush.msra.mxu0 %v176
      %291 = vmatpush.msra.mxu0 %v173
      %292 = vmatpush.msra.mxu0 %v170
      %293 = vmatpush.msra.mxu0 %v167
      %294 = vmatpush.msra.mxu0 %v164
      %295 = vmatpush.msra.mxu0 %v161
      %296 = vmatmul.f32.gmra.mxu0 %v156
      %v297 = vpop.f32.mrf.mxu0
      %v298 = vadd.f32 0.0, %v297
      %299 = vmatmul.f32.gmra.mxu0 %v158
      %v300 = vpop.f32.mrf.mxu0
      %v301 = vadd.f32 0.0, %v300
      %302 = vdwg.mxu0
      %303 = vmatpush.msra.mxu0 0.0
      %304 = vmatpush.msra.mxu0 0.0
      %305 = vmatpush.msra.mxu0 0.0
      %306 = vmatpush.msra.mxu0 0.0
      %307 = vmatpush.msra.mxu0 0.0
      %308 = vmatpush.msra.mxu0 0.0
      %309 = vmatpush.msra.mxu0 0.0
      %310 = vmatpush.msra.mxu0 0.0
      %311 = vmatpush.msra.mxu0 0.0
      %312 = vmatpush.msra.mxu0 0.0
      %313 = vmatpush.msra.mxu0 0.0
      %314 = vmatpush.msra.mxu0 0.0
      %315 = vmatpush.msra.mxu0 0.0
      %316 = vmatpush.msra.mxu0 %v229
      %317 = vmatpush.msra.mxu0 %v212
      %318 = vmatpush.msra.mxu0 %v209
      %319 = vmatmul.f32.gmra.mxu0 %v219
      %v320 = vpop.f32.mrf.mxu0
      %v321 = vadd.f32 %v298, %v320
      %322 = vmatmul.f32.gmra.mxu0 %v222
      %v323 = vpop.f32.mrf.mxu0
      %v324 = vadd.f32 %v301, %v323
      %325 = vdwg.mxu0
      %326 = vmatpush.msra.mxu0 %v207
      %327 = vmatpush.msra.mxu0 %v204
      %328 = vmatpush.msra.mxu0 %v201
      %329 = vmatpush.msra.mxu0 %v198
      %330 = vmatpush.msra.mxu0 %v195
      %331 = vmatpush.msra.mxu0 %v192
      %332 = vmatpush.msra.mxu0 %v189
      %333 = vmatpush.msra.mxu0 %v186
      %334 = vmatpush.msra.mxu0 %v183
      %335 = vmatpush.msra.mxu0 %v180
      %336 = vmatpush.msra.mxu0 %v177
      %337 = vmatpush.msra.mxu0 %v174
      %338 = vmatpush.msra.mxu0 %v171
      %339 = vmatpush.msra.mxu0 %v168
      %340 = vmatpush.msra.mxu0 %v165
      %341 = vmatpush.msra.mxu0 %v162
      %342 = vmatmul.f32.gmra.mxu0 %v156
      %v343 = vpop.f32.mrf.mxu0
      %v344 = vadd.f32 0.0, %v343
      %345 = vmatmul.f32.gmra.mxu0 %v158
      %v346 = vpop.f32.mrf.mxu0
      %v347 = vadd.f32 0.0, %v346
      %348 = vdwg.mxu0
      %349 = vmatpush.msra.mxu0 0.0
      %350 = vmatpush.msra.mxu0 0.0
      %351 = vmatpush.msra.mxu0 0.0
      %352 = vmatpush.msra.mxu0 0.0
      %353 = vmatpush.msra.mxu0 0.0
      %354 = vmatpush.msra.mxu0 0.0
      %355 = vmatpush.msra.mxu0 0.0
      %356 = vmatpush.msra.mxu0 0.0
      %357 = vmatpush.msra.mxu0 0.0
      %358 = vmatpush.msra.mxu0 0.0
      %359 = vmatpush.msra.mxu0 0.0
      %360 = vmatpush.msra.mxu0 0.0
      %361 = vmatpush.msra.mxu0 0.0
      %362 = vmatpush.msra.mxu0 %v232
      %363 = vmatpush.msra.mxu0 %v213
      %364 = vmatpush.msra.mxu0 %v210
      %365 = vmatmul.f32.gmra.mxu0 %v219
      %v366 = vpop.f32.mrf.mxu0
      %v367 = vadd.f32 %v344, %v366
      %368 = vmatmul.f32.gmra.mxu0 %v222
      %v369 = vpop.f32.mrf.mxu0
      %v370 = vadd.f32 %v347, %v369
      %371 = vdwg.mxu0
      %p372 = scmp.eq.s32.totalorder %s14, 0
      // Predicated region
      $region33: #{lenet_forward.4} parent=31 // pred_check
        %p373 = pneg %p372
      $region34: #{lenet_forward.4} parent=31 // pred_check_branch
        %375 = sbr.rel (%p373) target = $region36
      $region35: #{lenet_forward.4} parent=31 // pred_region
        %376 = vst [vmem:[%s3] sm:$0xff] %v275
        %377 = vst [vmem:[%s3 + $0x8] sm:$0xff] %v321
        %378 = vst [vmem:[%s3 + $0x10] sm:$0xff] %v367
        %379 = vst [vmem:[%s3 + $0x18] sm:$0xff] %v278
        %380 = vst [vmem:[%s3 + $0x20] sm:$0xff] %v324
        %381 = vst [vmem:[%s3 + $0x28] sm:$0xff] %v370
      $region36: #{lenet_forward.4} parent=31 // pred_fallthru
        _
      %p382 = scmp.ne.s32.totalorder %s14, 0
      // Predicated region
      $region37: #{lenet_forward.4} parent=31 // pred_check
        %p383 = pneg %p382
      $region38: #{lenet_forward.4} parent=31 // pred_check_branch
        %385 = sbr.rel (%p383) target = $region40
      $region39: #{lenet_forward.4} parent=31 // pred_region
        %v386 = vld [vmem:[%s3] sm:$0xff]
        %v387 = vld [vmem:[%s3 + $0x8] sm:$0xff]
        %v388 = vld [vmem:[%s3 + $0x10] sm:$0xff]
        %v389 = vld [vmem:[%s3 + $0x18] sm:$0xff]
        %v390 = vld [vmem:[%s3 + $0x20] sm:$0xff]
        %v391 = vld [vmem:[%s3 + $0x28] sm:$0xff]
        %v392 = vmax.f32 %v386, %v275
        %v393 = vmax.f32 %v387, %v321
        %v394 = vmax.f32 %v388, %v367
        %v395 = vmax.f32 %v389, %v278
        %v396 = vmax.f32 %v390, %v324
        %v397 = vmax.f32 %v391, %v370
        %398 = vst [vmem:[%s3] sm:$0xff] %v392
        %399 = vst [vmem:[%s3 + $0x8] sm:$0xff] %v393
        %400 = vst [vmem:[%s3 + $0x10] sm:$0xff] %v394
        %401 = vst [vmem:[%s3 + $0x18] sm:$0xff] %v395
        %402 = vst [vmem:[%s3 + $0x20] sm:$0xff] %v396
        %403 = vst [vmem:[%s3 + $0x28] sm:$0xff] %v397
      $region40: #{lenet_forward.4} parent=31 // pred_fallthru
        _
      %p404 = scmp.eq.s32.totalorder %s14, 3
      // Predicated region
      $region41: #{lenet_forward.4} parent=31 // pred_check
        %p405 = pneg %p404
      $region42: #{lenet_forward.4} parent=31 // pred_check_branch
        %407 = sbr.rel (%p405) target = $region44
      $region43: #{lenet_forward.4} parent=31 // pred_region
        %v408 = vld [vmem:[%s3] sm:$0xff]
        %v409 = vld [vmem:[%s3 + $0x8] sm:$0xff]
        %v410 = vld [vmem:[%s3 + $0x10] sm:$0xff]
        %v411 = vld [vmem:[%s3 + $0x18] sm:$0xff]
        %v412 = vld [vmem:[%s3 + $0x20] sm:$0xff]
        %v413 = vld [vmem:[%s3 + $0x28] sm:$0xff]
        %v414 = vld [vmem:[%s2] sm:$0xff]
        %v415 = vld [vmem:[%s2 + $0x8] sm:$0xff]
        %417 = vset.pattern.permute.xlu0 0
        %418 = vperm.xlu0 %417, %v414
        %v419 = vpop.permute.xlu0 %418
        %422 = vset.pattern.permute.xlu0 0
        %423 = vperm.xlu0 %422, %v415
        %v424 = vpop.permute.xlu0 %423
        %v426 = vadd.f32 %v408, %v419
        %v427 = vadd.f32 %v409, %v419
        %v428 = vadd.f32 %v410, %v419
        %v429 = vadd.f32 %v411, %v424
        %v430 = vadd.f32 %v412, %v424
        %v431 = vadd.f32 %v413, %v424
        %v432 = vmax.f32 %v426, 0.0
        %v433 = vmax.f32 %v427, 0.0
        %v434 = vmax.f32 %v428, 0.0
        %v435 = vmax.f32 %v429, 0.0
        %v436 = vmax.f32 %v430, 0.0
        %v437 = vmax.f32 %v431, 0.0
        %438 = vst [vmem:[%s3] sm:$0xff] %v432
        %439 = vst [vmem:[%s3 + $0x8] sm:$0xff] %v433
        %440 = vst [vmem:[%s3 + $0x10] sm:$0xff] %v434
        %441 = vst [vmem:[%s3 + $0x18] sm:$0xff] %v435
        %442 = vst [vmem:[%s3 + $0x20] sm:$0xff] %v436
        %443 = vst [vmem:[%s3 + $0x28] sm:$0xff] %v437
      $region44: #{lenet_forward.4} parent=31 // pred_fallthru
        _
      // Predicated region
      $region45: #{lenet_forward.4} parent=31 // pred_check
        %p444 = pneg %p95
      $region46: #{lenet_forward.4} parent=31 // pred_check_branch
        %446 = sbr.rel (%p444) target = $region48
      $region47: #{lenet_forward.4} parent=31 // pred_region
        _
      $region48: #{lenet_forward.4} parent=31 // pred_fallthru
        _
      // Predicated region
      $region49: #{lenet_forward.4} parent=31 // pred_check
        %p447 = pneg %p95
      $region50: #{lenet_forward.4} parent=31 // pred_check_branch
        %449 = sbr.rel (%p447) target = $region52
      $region51: #{lenet_forward.4} parent=31 // pred_region
        _
      $region52: #{lenet_forward.4} parent=31 // pred_fallthru
        _
    $region32: #{lenet_forward.4} parent=5 // pred_fallthru
      _
    %p450 = scmp.le.s32.totalorder 2, %s9
    // Predicated region
    $region53: #{lenet_forward.4} parent=5 // pred_check
      %p451 = pneg %p450
    $region54: #{lenet_forward.4} parent=5 // pred_check_branch
      %453 = sbr.rel (%p451) target = $region56
    $region55: #{lenet_forward.4} parent=5 // pred_region
      %s454 = ssub.s32 %s9, 2
    $region56: #{lenet_forward.4} parent=5 // pred_fallthru
      _
  $region6: #{lenet_forward.4} parent=0 // loop_footer
    %s13 = sadd.s32 1, %s9
  $region7: #{lenet_forward.4} parent=0 // loop_footer_branch
    %8 = sbr.rel target = $region3
  $region8: #{lenet_forward.4} parent=0 // loop_exit
    _

// kernel: lenet_forward.5
$region0: #{lenet_forward.5}
  #allocation0 [shape = 'u32[]', space=smem, size = 0x4, offset = 0x4, fixed_abs, tag = 'smem constant byte address 0x4 - core index']
  #allocation1 [shape = 'u32[72,128]{1,0:T(1,128)}', space=vmem, size = 0x9000, scoped, tag = 'internal scratch']
  #allocation2 [shape = 'f32[2,500]{1,0:T(2,128)}', space=vmem, size = 0x1000, scoped, tag = 'scratch operand']
  %s0 = inlined_call_operand.vmem [shape: f32[2,3072], index: 0, kind: input, shape index: {}]
  %s1 = inlined_call_operand.vmem [shape: bf16[3072,500], index: 1, kind: input, shape index: {}]
  %s2 = inlined_call_operand.vmem [shape: f32[1,500], index: 2, kind: input, shape index: {}]
  %s3 = inlined_call_operand.vmem [shape: f32[500,200], index: 3, kind: input, shape index: {}]
  %s4 = inlined_call_operand.vmem [shape: f32[1,200], index: 4, kind: input, shape index: {}]
  %s5 = inlined_call_operand.vmem [shape: f32[200,10], index: 5, kind: input, shape index: {}]
  %s6 = inlined_call_operand.vmem [shape: f32[1,10], index: 6, kind: input, shape index: {}]
  %s7 = inlined_call_operand.hbm [shape: f32[2,10], index: 7, kind: output, shape index: {}]
  %s8 = sld [smem:[#allocation0]]
  $region69: #{lenet_forward.5} parent=0
    _
  %s10 = ssub.s32 1, %s8
  %s11 = scalar_select 0, %s10, %s8
  $region1: #{lenet_forward.5} parent=0
    #allocation3 [shape = 'u8[1024]{0}', space=vmem, size = 0x400, scoped, tag = 'output window, operand 0, single buffered']
    #allocation4 [shape = 's32[2]{0}', space=sflag, size = 0x8, scoped, tag = 'scoped memory for lenet_forward.5']
    %12 = vsyncpa [#allocation4], 0
    loop: start=0, step=1, limit=6
    $region2: #{lenet_forward.5} parent=1 // loop_pre_header
      _
    $region3: #{lenet_forward.5} parent=1 // loop_header
      %s14 = sphi 0, %s18
      %p15 = scmp.ge.s32.totalorder %s14, 6
      %s24 = sphi 0, %s26
      %s27 = sphi 0, %s24
      %s28 = sphi 0, %s27
      %s44 = sphi 0, %s28
      %s50 = sphi 0, %s52
      %s53 = sphi 0, %s50
      %s54 = sphi 0, %s53
      %s70 = sphi 0, %s54
      %s74 = sphi 0, %s74
      %s76 = sphi 0, %s74
      %s77 = sphi 0, %s76
      %s91 = sphi 0, %s77
      %s95 = sphi 0, %s95
      %s97 = sphi 0, %s95
      %s98 = sphi 0, %s97
      %s112 = sphi 0, %s98
      %s116 = sphi 0, %s116
      %s118 = sphi 0, %s116
      %s119 = sphi 0, %s118
      %s133 = sphi 0, %s119
      %s137 = sphi 0, %s137
      %s139 = sphi 0, %s137
      %s140 = sphi 0, %s139
      %s154 = sphi 0, %s140
      %s158 = sphi 0, %s158
      %s160 = sphi 0, %s158
      %s161 = sphi 0, %s160
      %s175 = sphi 0, %s161
      %s179 = sphi 0, %s179
      %s181 = sphi 0, %s179
      %s182 = sphi 0, %s181
      %s196 = sphi 0, %s182
    $region4: #{lenet_forward.5} parent=1 // loop_header_branch
      %17 = sbr.rel (%p15) target = $region8
    $region5: #{lenet_forward.5} parent=1 // loop_body
      %s19 = ssub.s32 %s14, 1
      %s20 = ssub.s32 %s14, 2
      %s21 = sadd.s32 %s14, 1
      %s22 = ssub.s32 %s14, %s21
      %p23 = scmp.eq.s32.totalorder %s22, 0
      %s25 = sadd.s32 %s24, 1
      %s26 = scalar_select %p23, %s24, %s25
      %p29 = pneg %p23
      %p30 = scmp.eq.s32.totalorder %s14, 3
      %p31 = por %p29, %p30
      %p32 = scmp.ne.s32.totalorder %s24, %s27
      %p33 = scmp.eq.s32.totalorder %s14, 0
      %p34 = por %p32, %p33
      %p35 = scmp.ne.s32.totalorder %s24, %s27
      %p36 = scmp.eq.s32.totalorder %s19, 3
      %p37 = por %p35, %p36
      %p38 = scmp.ne.s32.totalorder %s27, %s28
      %p39 = scmp.eq.s32.totalorder %s19, 0
      %p40 = por %p38, %p39
      %p41 = scmp.ne.s32.totalorder %s27, %s28
      %p42 = scmp.eq.s32.totalorder %s20, 3
      %p43 = por %p41, %p42
      %p45 = scmp.ne.s32.totalorder %s28, %s44
      %p46 = scmp.eq.s32.totalorder %s20, 0
      %p47 = por %p45, %p46
      %s48 = ssub.s32 %s14, %s21
      %p49 = scmp.eq.s32.totalorder %s48, 0
      %s51 = sadd.s32 %s50, 1
      %s52 = scalar_select %p49, %s50, %s51
      %p55 = pneg %p49
      %p56 = scmp.eq.s32.totalorder %s14, 3
      %p57 = por %p55, %p56
      %p58 = scmp.ne.s32.totalorder %s50, %s53
      %p59 = scmp.eq.s32.totalorder %s14, 0
      %p60 = por %p58, %p59
      %p61 = scmp.ne.s32.totalorder %s50, %s53
      %p62 = scmp.eq.s32.totalorder %s19, 3
      %p63 = por %p61, %p62
      %p64 = scmp.ne.s32.totalorder %s53, %s54
      %p65 = scmp.eq.s32.totalorder %s19, 0
      %p66 = por %p64, %p65
      %p67 = scmp.ne.s32.totalorder %s53, %s54
      %p68 = scmp.eq.s32.totalorder %s20, 3
      %p69 = por %p67, %p68
      %p71 = scmp.ne.s32.totalorder %s54, %s70
      %p72 = scmp.eq.s32.totalorder %s20, 0
      %p73 = por %p71, %p72
      %s75 = sadd.s32 %s74, 1
      %p78 = scmp.eq.s32.totalorder %s14, 3
      %p79 = scmp.ne.s32.totalorder %s74, %s76
      %p80 = scmp.eq.s32.totalorder %s14, 0
      %p81 = por %p79, %p80
      %p82 = scmp.ne.s32.totalorder %s74, %s76
      %p83 = scmp.eq.s32.totalorder %s19, 3
      %p84 = por %p82, %p83
      %p85 = scmp.ne.s32.totalorder %s76, %s77
      %p86 = scmp.eq.s32.totalorder %s19, 0
      %p87 = por %p85, %p86
      %p88 = scmp.ne.s32.totalorder %s76, %s77
      %p89 = scmp.eq.s32.totalorder %s20, 3
      %p90 = por %p88, %p89
      %p92 = scmp.ne.s32.totalorder %s77, %s91
      %p93 = scmp.eq.s32.totalorder %s20, 0
      %p94 = por %p92, %p93
      %s96 = sadd.s32 %s95, 1
      %p99 = scmp.eq.s32.totalorder %s14, 3
      %p100 = scmp.ne.s32.totalorder %s95, %s97
      %p101 = scmp.eq.s32.totalorder %s14, 0
      %p102 = por %p100, %p101
      %p103 = scmp.ne.s32.totalorder %s95, %s97
      %p104 = scmp.eq.s32.totalorder %s19, 3
      %p105 = por %p103, %p104
      %p106 = scmp.ne.s32.totalorder %s97, %s98
      %p107 = scmp.eq.s32.totalorder %s19, 0
      %p108 = por %p106, %p107
      %p109 = scmp.ne.s32.totalorder %s97, %s98
      %p110 = scmp.eq.s32.totalorder %s20, 3
      %p111 = por %p109, %p110
      %p113 = scmp.ne.s32.totalorder %s98, %s112
      %p114 = scmp.eq.s32.totalorder %s20, 0
      %p115 = por %p113, %p114
      %s117 = sadd.s32 %s116, 1
      %p120 = scmp.eq.s32.totalorder %s14, 3
      %p121 = scmp.ne.s32.totalorder %s116, %s118
      %p122 = scmp.eq.s32.totalorder %s14, 0
      %p123 = por %p121, %p122
      %p124 = scmp.ne.s32.totalorder %s116, %s118
      %p125 = scmp.eq.s32.totalorder %s19, 3
      %p126 = por %p124, %p125
      %p127 = scmp.ne.s32.totalorder %s118, %s119
      %p128 = scmp.eq.s32.totalorder %s19, 0
      %p129 = por %p127, %p128
      %p130 = scmp.ne.s32.totalorder %s118, %s119
      %p131 = scmp.eq.s32.totalorder %s20, 3
      %p132 = por %p130, %p131
      %p134 = scmp.ne.s32.totalorder %s119, %s133
      %p135 = scmp.eq.s32.totalorder %s20, 0
      %p136 = por %p134, %p135
      %s138 = sadd.s32 %s137, 1
      %p141 = scmp.eq.s32.totalorder %s14, 3
      %p142 = scmp.ne.s32.totalorder %s137, %s139
      %p143 = scmp.eq.s32.totalorder %s14, 0
      %p144 = por %p142, %p143
      %p145 = scmp.ne.s32.totalorder %s137, %s139
      %p146 = scmp.eq.s32.totalorder %s19, 3
      %p147 = por %p145, %p146
      %p148 = scmp.ne.s32.totalorder %s139, %s140
      %p149 = scmp.eq.s32.totalorder %s19, 0
      %p150 = por %p148, %p149
      %p151 = scmp.ne.s32.totalorder %s139, %s140
      %p152 = scmp.eq.s32.totalorder %s20, 3
      %p153 = por %p151, %p152
      %p155 = scmp.ne.s32.totalorder %s140, %s154
      %p156 = scmp.eq.s32.totalorder %s20, 0
      %p157 = por %p155, %p156
      %s159 = sadd.s32 %s158, 1
      %p162 = scmp.eq.s32.totalorder %s14, 3
      %p163 = scmp.ne.s32.totalorder %s158, %s160
      %p164 = scmp.eq.s32.totalorder %s14, 0
      %p165 = por %p163, %p164
      %p166 = scmp.ne.s32.totalorder %s158, %s160
      %p167 = scmp.eq.s32.totalorder %s19, 3
      %p168 = por %p166, %p167
      %p169 = scmp.ne.s32.totalorder %s160, %s161
      %p170 = scmp.eq.s32.totalorder %s19, 0
      %p171 = por %p169, %p170
      %p172 = scmp.ne.s32.totalorder %s160, %s161
      %p173 = scmp.eq.s32.totalorder %s20, 3
      %p174 = por %p172, %p173
      %p176 = scmp.ne.s32.totalorder %s161, %s175
      %p177 = scmp.eq.s32.totalorder %s20, 0
      %p178 = por %p176, %p177
      %s180 = sadd.s32 %s179, 1
      %p183 = scmp.eq.s32.totalorder %s14, 3
      %p184 = scmp.ne.s32.totalorder %s179, %s181
      %p185 = scmp.eq.s32.totalorder %s14, 0
      %p186 = por %p184, %p185
      %p187 = scmp.ne.s32.totalorder %s179, %s181
      %p188 = scmp.eq.s32.totalorder %s19, 3
      %p189 = por %p187, %p188
      %p190 = scmp.ne.s32.totalorder %s181, %s182
      %p191 = scmp.eq.s32.totalorder %s19, 0
      %p192 = por %p190, %p191
      %p193 = scmp.ne.s32.totalorder %s181, %s182
      %p194 = scmp.eq.s32.totalorder %s20, 3
      %p195 = por %p193, %p194
      %p197 = scmp.ne.s32.totalorder %s182, %s196
      %p198 = scmp.eq.s32.totalorder %s20, 0
      %p199 = por %p197, %p198
      %p200 = scmp.le.s32.totalorder 1, %s14
      %p201 = scmp.lt.s32.totalorder %s14, 5
      %p202 = pnand %p200, %p201
      %p203 = pneg %p202
      // Predicated region
      $region9: #{lenet_forward.5} parent=5 // pred_check
        _
      $region10: #{lenet_forward.5} parent=5 // pred_check_branch
        %205 = sbr.rel (%p202) target = $region12
      $region11: #{lenet_forward.5} parent=5 // pred_region
        %s206 = ssub.s32 %s14, 1
        // Predicated region
        $region13: #{lenet_forward.5} parent=11 // pred_check
          %p207 = pneg %p87
        $region14: #{lenet_forward.5} parent=11 // pred_check_branch
          %209 = sbr.rel (%p207) target = $region16
        $region15: #{lenet_forward.5} parent=11 // pred_region
          _
        $region16: #{lenet_forward.5} parent=11 // pred_fallthru
          _
        // Predicated region
        $region17: #{lenet_forward.5} parent=11 // pred_check
          %p210 = pneg %p108
        $region18: #{lenet_forward.5} parent=11 // pred_check_branch
          %212 = sbr.rel (%p210) target = $region20
        $region19: #{lenet_forward.5} parent=11 // pred_region
          _
        $region20: #{lenet_forward.5} parent=11 // pred_fallthru
          _
        // Predicated region
        $region21: #{lenet_forward.5} parent=11 // pred_check
          %p213 = pneg %p129
        $region22: #{lenet_forward.5} parent=11 // pred_check_branch
          %215 = sbr.rel (%p213) target = $region24
        $region23: #{lenet_forward.5} parent=11 // pred_region
          _
        $region24: #{lenet_forward.5} parent=11 // pred_fallthru
          _
        // Predicated region
        $region25: #{lenet_forward.5} parent=11 // pred_check
          %p216 = pneg %p150
        $region26: #{lenet_forward.5} parent=11 // pred_check_branch
          %218 = sbr.rel (%p216) target = $region28
        $region27: #{lenet_forward.5} parent=11 // pred_region
          _
        $region28: #{lenet_forward.5} parent=11 // pred_fallthru
          _
        // Predicated region
        $region29: #{lenet_forward.5} parent=11 // pred_check
          %p219 = pneg %p171
        $region30: #{lenet_forward.5} parent=11 // pred_check_branch
          %221 = sbr.rel (%p219) target = $region32
        $region31: #{lenet_forward.5} parent=11 // pred_region
          _
        $region32: #{lenet_forward.5} parent=11 // pred_fallthru
          _
      $region12: #{lenet_forward.5} parent=5 // pred_fallthru
        _
      %p222 = scmp.lt.s32.totalorder %s14, 4
      // Predicated region
      $region33: #{lenet_forward.5} parent=5 // pred_check
        %p223 = pneg %p222
      $region34: #{lenet_forward.5} parent=5 // pred_check_branch
        %225 = sbr.rel (%p223) target = $region36
      $region35: #{lenet_forward.5} parent=5 // pred_region
        // Predicated region
        $region37: #{lenet_forward.5} parent=35 // pred_check
          %p226 = pneg %p34
        $region38: #{lenet_forward.5} parent=35 // pred_check_branch
          %228 = sbr.rel (%p226) target = $region40
        $region39: #{lenet_forward.5} parent=35 // pred_region
          %s229 = smul.u32 6, %s14
          %p230 = scmp.lt.s32.totalorder %s229, 23
          %s231 = scalar_select %p230, %s229, 23
          %s232 = smul.addr %s231, 2
          %s233 = scalar_lea.vmem %s0, %s232
          %s234 = smul.u32 6, %s14
        $region40: #{lenet_forward.5} parent=35 // pred_fallthru
          _
        // Predicated region
        $region41: #{lenet_forward.5} parent=35 // pred_check
          %p235 = pneg %p60
        $region42: #{lenet_forward.5} parent=35 // pred_check_branch
          %237 = sbr.rel (%p235) target = $region44
        $region43: #{lenet_forward.5} parent=35 // pred_region
          %s238 = smul.u32 96, %s14
          %p239 = scmp.lt.s32.totalorder %s238, 383
          %s240 = scalar_select %p239, %s238, 383
          %s241 = smul.addr %s240, 4
          %s242 = smul.addr %s241, 4
          %s243 = scalar_lea.vmem %s1, %s242
          %s244 = smul.u32 96, %s14
        $region44: #{lenet_forward.5} parent=35 // pred_fallthru
          _
      $region36: #{lenet_forward.5} parent=5 // pred_fallthru
        _
      %p245 = scmp.le.s32.totalorder 1, %s14
      %p246 = scmp.lt.s32.totalorder %s14, 5
      %p247 = pnand %p245, %p246
      %p248 = pneg %p247
      // Predicated region
      $region45: #{lenet_forward.5} parent=5 // pred_check
        _
      $region46: #{lenet_forward.5} parent=5 // pred_check_branch
        %250 = sbr.rel (%p247) target = $region48
      $region47: #{lenet_forward.5} parent=5 // pred_region
        %s251 = ssub.s32 %s14, 1
        %s252 = smul.u32 6, %s19
        %p253 = scmp.lt.s32.totalorder %s252, 23
        %s254 = scalar_select %p253, %s252, 23
        %s255 = smul.addr %s254, 2
        %s256 = scalar_lea.vmem %s0, %s255
        %p257 = pneg %p40
        %p258 = pneg %p37
        %s259 = smul.u32 96, %s19
        %p260 = scmp.lt.s32.totalorder %s259, 383
        %s261 = scalar_select %p260, %s259, 383
        %s262 = smul.addr %s261, 4
        %s263 = smul.addr %s262, 4
        %s264 = scalar_lea.vmem %s1, %s263
        %p265 = pneg %p66
        %p266 = pneg %p63
        %p267 = pneg %p87
        %p268 = pneg %p84
        %p269 = pneg %p108
        %p270 = pneg %p105
        %p271 = pneg %p129
        %p272 = pneg %p126
        %p273 = pneg %p150
        %p274 = pneg %p147
        %p275 = pneg %p171
        %p276 = pneg %p168
        %p277 = pneg %p192
        %p278 = pneg %p189
        %s279 = smul.u32 6, %s19
        %p280 = scmp.lt.s32.totalorder %s279, 23
        %s281 = scalar_select %p280, %s279, 23
        %s282 = smul.addr %s281, 2
        %s283 = scalar_lea.vmem %s0, %s282
        %s284 = smul.u32 6, %s19
        %s285 = smul.u32 96, %s19
        %p286 = scmp.lt.s32.totalorder %s285, 383
        %s287 = scalar_select %p286, %s285, 383
        %s288 = smul.addr %s287, 4
        %s289 = smul.addr %s288, 4
        %s290 = scalar_lea.vmem %s1, %s289
        %s291 = smul.u32 96, %s19
        %p292 = scmp.eq.s32.totalorder %s19, 0
        // Predicated region
        $region49: #{lenet_forward.5} parent=47 // pred_check
          %p293 = pneg %p292
        $region50: #{lenet_forward.5} parent=47 // pred_check_branch
          %295 = sbr.rel (%p293) target = $region52
        $region51: #{lenet_forward.5} parent=47 // pred_region
          %vm296 = vcmask 1041408
          %vm297 = vcmask 1043458
          %vm298 = vmor %vm297, %vm296
          %vm299 = vcmask 1045508
          %vm300 = vmor %vm299, %vm298
          %vm301 = vcmask 949254
          %vm302 = vmor %vm301, %vm300
          %303 = vst.msk [vmem:[#allocation2] sm:$0xff] %vm302, 0.0
        $region52: #{lenet_forward.5} parent=47 // pred_fallthru
          _
        %v304 = vld [vmem:[#allocation2] sm:$0xff]
        %v305 = vld [vmem:[%s283] sm:$0xff]
        %v306 = vld [vmem:[%s283 + $0x8] sm:$0xf]
        %309 = vst [vmem:[#allocation1] ss:$4 sm:$0xff] %v305
        %s310 = scalar_lea.vmem [#allocation1], 32
        %311 = vst [vmem:[%s310] ss:$4 sm:$0xff] %v306
        %v312 = vld.sshfl [vmem:[#allocation1] sm:$0xff pattern:$0x73625140]
        %v313 = vld.sshfl [vmem:[#allocation1 + $0x8] sm:$0xff pattern:$0x73625140]
        %v314 = vld.sshfl [vmem:[#allocation1 + $0x10] sm:$0xff pattern:$0x73625140]
        %v315 = vld.sshfl [vmem:[#allocation1 + $0x18] sm:$0xff pattern:$0x73625140]
        %v316 = vld.sshfl [vmem:[#allocation1 + $0x20] sm:$0xff pattern:$0x73625140]
        %v317 = vld.sshfl [vmem:[#allocation1 + $0x28] sm:$0xff pattern:$0x73625140]
        %v324 = vpack.c.bf16 %v312, %v312
        %v325 = vpack.c.bf16 %v313, %v313
        %v326 = vpack.c.bf16 %v314, %v314
        %v327 = vpack.c.bf16 %v315, %v315
        %v328 = vpack.c.bf16 %v316, %v316
        %v329 = vpack.c.bf16 %v317, %v317
        %v330 = vld [vmem:[%s290] sm:$0xff]
        %v331 = vld [vmem:[%s290 + $0x8] sm:$0xff]
        %v332 = vld [vmem:[%s290 + $0x10] sm:$0xff]
        %v333 = vld [vmem:[%s290 + $0x18] sm:$0xff]
        %v334 = vld [vmem:[%s290 + $0x20] sm:$0xff]
        %v335 = vld [vmem:[%s290 + $0x28] sm:$0xff]
        %v336 = vld [vmem:[%s290 + $0x30] sm:$0xff]
        %v337 = vld [vmem:[%s290 + $0x38] sm:$0xff]
        %v338 = vld [vmem:[%s290 + $0x40] sm:$0xff]
        %v339 = vld [vmem:[%s290 + $0x48] sm:$0xff]
        %v340 = vld [vmem:[%s290 + $0x50] sm:$0xff]
        %v341 = vld [vmem:[%s290 + $0x58] sm:$0xff]
        %v342 = vld [vmem:[%s290 + $0x60] sm:$0xff]
        %v343 = vld [vmem:[%s290 + $0x68] sm:$0xff]
        %v344 = vld [vmem:[%s290 + $0x70] sm:$0xff]
        %v345 = vld [vmem:[%s290 + $0x78] sm:$0xff]
        %v346 = vld [vmem:[%s290 + $0x80] sm:$0xff]
        %v347 = vld [vmem:[%s290 + $0x88] sm:$0xff]
        %v348 = vld [vmem:[%s290 + $0x90] sm:$0xff]
        %v349 = vld [vmem:[%s290 + $0x98] sm:$0xff]
        %v350 = vld [vmem:[%s290 + $0xa0] sm:$0xff]
        %v351 = vld [vmem:[%s290 + $0xa8] sm:$0xff]
        %v352 = vld [vmem:[%s290 + $0xb0] sm:$0xff]
        %v353 = vld [vmem:[%s290 + $0xb8] sm:$0xff]
        %v354 = vld [vmem:[%s290 + $0xc0] sm:$0xff]
        %v355 = vld [vmem:[%s290 + $0xc8] sm:$0xff]
        %v356 = vld [vmem:[%s290 + $0xd0] sm:$0xff]
        %v357 = vld [vmem:[%s290 + $0xd8] sm:$0xff]
        %v358 = vld [vmem:[%s290 + $0xe0] sm:$0xff]
        %v359 = vld [vmem:[%s290 + $0xe8] sm:$0xff]
        %v360 = vld [vmem:[%s290 + $0xf0] sm:$0xff]
        %v361 = vld [vmem:[%s290 + $0xf8] sm:$0xff]
        %v362 = vld [vmem:[%s290 + $0x100] sm:$0xff]
        %v363 = vld [vmem:[%s290 + $0x108] sm:$0xff]
        %v364 = vld [vmem:[%s290 + $0x110] sm:$0xff]
        %v365 = vld [vmem:[%s290 + $0x118] sm:$0xff]
        %v366 = vld [vmem:[%s290 + $0x120] sm:$0xff]
        %v367 = vld [vmem:[%s290 + $0x128] sm:$0xff]
        %v368 = vld [vmem:[%s290 + $0x130] sm:$0xff]
        %v369 = vld [vmem:[%s290 + $0x138] sm:$0xff]
        %v370 = vld [vmem:[%s290 + $0x140] sm:$0xff]
        %v371 = vld [vmem:[%s290 + $0x148] sm:$0xff]
        %v372 = vld [vmem:[%s290 + $0x150] sm:$0xff]
        %v373 = vld [vmem:[%s290 + $0x158] sm:$0xff]
        %v374 = vld [vmem:[%s290 + $0x160] sm:$0xff]
        %v375 = vld [vmem:[%s290 + $0x168] sm:$0xff]
        %v376 = vld [vmem:[%s290 + $0x170] sm:$0xff]
        %v377 = vld [vmem:[%s290 + $0x178] sm:$0xff]
        %v378 = vld [vmem:[%s290 + $0x180] sm:$0xff]
        %v379 = vld [vmem:[%s290 + $0x188] sm:$0xff]
        %v380 = vld [vmem:[%s290 + $0x190] sm:$0xff]
        %v381 = vld [vmem:[%s290 + $0x198] sm:$0xff]
        %v382 = vld [vmem:[%s290 + $0x1a0] sm:$0xff]
        %v383 = vld [vmem:[%s290 + $0x1a8] sm:$0xff]
        %v384 = vld [vmem:[%s290 + $0x1b0] sm:$0xff]
        %v385 = vld [vmem:[%s290 + $0x1b8] sm:$0xff]
        %v386 = vld [vmem:[%s290 + $0x1c0] sm:$0xff]
        %v387 = vld [vmem:[%s290 + $0x1c8] sm:$0xff]
        %v388 = vld [vmem:[%s290 + $0x1d0] sm:$0xff]
        %v389 = vld [vmem:[%s290 + $0x1d8] sm:$0xff]
        %v390 = vld [vmem:[%s290 + $0x1e0] sm:$0xff]
        %v391 = vld [vmem:[%s290 + $0x1e8] sm:$0xff]
        %v392 = vld [vmem:[%s290 + $0x1f0] sm:$0xff]
        %v393 = vld [vmem:[%s290 + $0x1f8] sm:$0xff]
        %v394 = vld [vmem:[%s290 + $0x200] sm:$0xff]
        %v395 = vld [vmem:[%s290 + $0x208] sm:$0xff]
        %v396 = vld [vmem:[%s290 + $0x210] sm:$0xff]
        %v397 = vld [vmem:[%s290 + $0x218] sm:$0xff]
        %v398 = vld [vmem:[%s290 + $0x220] sm:$0xff]
        %v399 = vld [vmem:[%s290 + $0x228] sm:$0xff]
        %v400 = vld [vmem:[%s290 + $0x230] sm:$0xff]
        %v401 = vld [vmem:[%s290 + $0x238] sm:$0xff]
        %v402 = vld [vmem:[%s290 + $0x240] sm:$0xff]
        %v403 = vld [vmem:[%s290 + $0x248] sm:$0xff]
        %v404 = vld [vmem:[%s290 + $0x250] sm:$0xff]
        %v405 = vld [vmem:[%s290 + $0x258] sm:$0xff]
        %v406 = vld [vmem:[%s290 + $0x260] sm:$0xff]
        %v407 = vld [vmem:[%s290 + $0x268] sm:$0xff]
        %v408 = vld [vmem:[%s290 + $0x270] sm:$0xff]
        %v409 = vld [vmem:[%s290 + $0x278] sm:$0xff]
        %v410 = vld [vmem:[%s290 + $0x280] sm:$0xff]
        %v411 = vld [vmem:[%s290 + $0x288] sm:$0xff]
        %v412 = vld [vmem:[%s290 + $0x290] sm:$0xff]
        %v413 = vld [vmem:[%s290 + $0x298] sm:$0xff]
        %v414 = vld [vmem:[%s290 + $0x2a0] sm:$0xff]
        %v415 = vld [vmem:[%s290 + $0x2a8] sm:$0xff]
        %v416 = vld [vmem:[%s290 + $0x2b0] sm:$0xff]
        %v417 = vld [vmem:[%s290 + $0x2b8] sm:$0xff]
        %v418 = vld [vmem:[%s290 + $0x2c0] sm:$0xff]
        %v419 = vld [vmem:[%s290 + $0x2c8] sm:$0xff]
        %v420 = vld [vmem:[%s290 + $0x2d0] sm:$0xff]
        %v421 = vld [vmem:[%s290 + $0x2d8] sm:$0xff]
        %v422 = vld [vmem:[%s290 + $0x2e0] sm:$0xff]
        %v423 = vld [vmem:[%s290 + $0x2e8] sm:$0xff]
        %v424 = vld [vmem:[%s290 + $0x2f0] sm:$0xff]
        %v425 = vld [vmem:[%s290 + $0x2f8] sm:$0xff]
        %v426 = vld [vmem:[%s290 + $0x300] sm:$0xff]
        %v427 = vld [vmem:[%s290 + $0x308] sm:$0xff]
        %v428 = vld [vmem:[%s290 + $0x310] sm:$0xff]
        %v429 = vld [vmem:[%s290 + $0x318] sm:$0xff]
        %v430 = vld [vmem:[%s290 + $0x320] sm:$0xff]
        %v431 = vld [vmem:[%s290 + $0x328] sm:$0xff]
        %v432 = vld [vmem:[%s290 + $0x330] sm:$0xff]
        %v433 = vld [vmem:[%s290 + $0x338] sm:$0xff]
        %v434 = vld [vmem:[%s290 + $0x340] sm:$0xff]
        %v435 = vld [vmem:[%s290 + $0x348] sm:$0xff]
        %v436 = vld [vmem:[%s290 + $0x350] sm:$0xff]
        %v437 = vld [vmem:[%s290 + $0x358] sm:$0xff]
        %v438 = vld [vmem:[%s290 + $0x360] sm:$0xff]
        %v439 = vld [vmem:[%s290 + $0x368] sm:$0xff]
        %v440 = vld [vmem:[%s290 + $0x370] sm:$0xff]
        %v441 = vld [vmem:[%s290 + $0x378] sm:$0xff]
        %v442 = vld [vmem:[%s290 + $0x380] sm:$0xff]
        %v443 = vld [vmem:[%s290 + $0x388] sm:$0xff]
        %v444 = vld [vmem:[%s290 + $0x390] sm:$0xff]
        %v445 = vld [vmem:[%s290 + $0x398] sm:$0xff]
        %v446 = vld [vmem:[%s290 + $0x3a0] sm:$0xff]
        %v447 = vld [vmem:[%s290 + $0x3a8] sm:$0xff]
        %v448 = vld [vmem:[%s290 + $0x3b0] sm:$0xff]
        %v449 = vld [vmem:[%s290 + $0x3b8] sm:$0xff]
        %v450 = vld [vmem:[%s290 + $0x3c0] sm:$0xff]
        %v451 = vld [vmem:[%s290 + $0x3c8] sm:$0xff]
        %v452 = vld [vmem:[%s290 + $0x3d0] sm:$0xff]
        %v453 = vld [vmem:[%s290 + $0x3d8] sm:$0xff]
        %v454 = vld [vmem:[%s290 + $0x3e0] sm:$0xff]
        %v455 = vld [vmem:[%s290 + $0x3e8] sm:$0xff]
        %v456 = vld [vmem:[%s290 + $0x3f0] sm:$0xff]
        %v457 = vld [vmem:[%s290 + $0x3f8] sm:$0xff]
        %v458 = vld [vmem:[%s290 + $0x400] sm:$0xff]
        %v459 = vld [vmem:[%s290 + $0x408] sm:$0xff]
        %v460 = vld [vmem:[%s290 + $0x410] sm:$0xff]
        %v461 = vld [vmem:[%s290 + $0x418] sm:$0xff]
        %v462 = vld [vmem:[%s290 + $0x420] sm:$0xff]
        %v463 = vld [vmem:[%s290 + $0x428] sm:$0xff]
        %v464 = vld [vmem:[%s290 + $0x430] sm:$0xff]
        %v465 = vld [vmem:[%s290 + $0x438] sm:$0xff]
        %v466 = vld [vmem:[%s290 + $0x440] sm:$0xff]
        %v467 = vld [vmem:[%s290 + $0x448] sm:$0xff]
        %v468 = vld [vmem:[%s290 + $0x450] sm:$0xff]
        %v469 = vld [vmem:[%s290 + $0x458] sm:$0xff]
        %v470 = vld [vmem:[%s290 + $0x460] sm:$0xff]
        %v471 = vld [vmem:[%s290 + $0x468] sm:$0xff]
        %v472 = vld [vmem:[%s290 + $0x470] sm:$0xff]
        %v473 = vld [vmem:[%s290 + $0x478] sm:$0xff]
        %v474 = vld [vmem:[%s290 + $0x480] sm:$0xff]
        %v475 = vld [vmem:[%s290 + $0x488] sm:$0xff]
        %v476 = vld [vmem:[%s290 + $0x490] sm:$0xff]
        %v477 = vld [vmem:[%s290 + $0x498] sm:$0xff]
        %v478 = vld [vmem:[%s290 + $0x4a0] sm:$0xff]
        %v479 = vld [vmem:[%s290 + $0x4a8] sm:$0xff]
        %v480 = vld [vmem:[%s290 + $0x4b0] sm:$0xff]
        %v481 = vld [vmem:[%s290 + $0x4b8] sm:$0xff]
        %v482 = vld [vmem:[%s290 + $0x4c0] sm:$0xff]
        %v483 = vld [vmem:[%s290 + $0x4c8] sm:$0xff]
        %v484 = vld [vmem:[%s290 + $0x4d0] sm:$0xff]
        %v485 = vld [vmem:[%s290 + $0x4d8] sm:$0xff]
        %v486 = vld [vmem:[%s290 + $0x4e0] sm:$0xff]
        %v487 = vld [vmem:[%s290 + $0x4e8] sm:$0xff]
        %v488 = vld [vmem:[%s290 + $0x4f0] sm:$0xff]
        %v489 = vld [vmem:[%s290 + $0x4f8] sm:$0xff]
        %v490 = vld [vmem:[%s290 + $0x500] sm:$0xff]
        %v491 = vld [vmem:[%s290 + $0x508] sm:$0xff]
        %v492 = vld [vmem:[%s290 + $0x510] sm:$0xff]
        %v493 = vld [vmem:[%s290 + $0x518] sm:$0xff]
        %v494 = vld [vmem:[%s290 + $0x520] sm:$0xff]
        %v495 = vld [vmem:[%s290 + $0x528] sm:$0xff]
        %v496 = vld [vmem:[%s290 + $0x530] sm:$0xff]
        %v497 = vld [vmem:[%s290 + $0x538] sm:$0xff]
        %v498 = vld [vmem:[%s290 + $0x540] sm:$0xff]
        %v499 = vld [vmem:[%s290 + $0x548] sm:$0xff]
        %v500 = vld [vmem:[%s290 + $0x550] sm:$0xff]
        %v501 = vld [vmem:[%s290 + $0x558] sm:$0xff]
        %v502 = vld [vmem:[%s290 + $0x560] sm:$0xff]
        %v503 = vld [vmem:[%s290 + $0x568] sm:$0xff]
        %v504 = vld [vmem:[%s290 + $0x570] sm:$0xff]
        %v505 = vld [vmem:[%s290 + $0x578] sm:$0xff]
        %v506 = vld [vmem:[%s290 + $0x580] sm:$0xff]
        %v507 = vld [vmem:[%s290 + $0x588] sm:$0xff]
        %v508 = vld [vmem:[%s290 + $0x590] sm:$0xff]
        %v509 = vld [vmem:[%s290 + $0x598] sm:$0xff]
        %v510 = vld [vmem:[%s290 + $0x5a0] sm:$0xff]
        %v511 = vld [vmem:[%s290 + $0x5a8] sm:$0xff]
        %v512 = vld [vmem:[%s290 + $0x5b0] sm:$0xff]
        %v513 = vld [vmem:[%s290 + $0x5b8] sm:$0xff]
        %v514 = vld [vmem:[%s290 + $0x5c0] sm:$0xff]
        %v515 = vld [vmem:[%s290 + $0x5c8] sm:$0xff]
        %v516 = vld [vmem:[%s290 + $0x5d0] sm:$0xff]
        %v517 = vld [vmem:[%s290 + $0x5d8] sm:$0xff]
        %v518 = vld [vmem:[%s290 + $0x5e0] sm:$0xff]
        %v519 = vld [vmem:[%s290 + $0x5e8] sm:$0xff]
        %v520 = vld [vmem:[%s290 + $0x5f0] sm:$0xff]
        %v521 = vld [vmem:[%s290 + $0x5f8] sm:$0xff]
        %v714 = vunpack.c.l.b16 %v330
        %v715 = vunpack.c.h.b16 %v330
        %v716 = vunpack.c.l.b16 %v331
        %v717 = vunpack.c.h.b16 %v331
        %v718 = vunpack.c.l.b16 %v332
        %v719 = vunpack.c.h.b16 %v332
        %v720 = vunpack.c.l.b16 %v333
        %v721 = vunpack.c.h.b16 %v333
        %v722 = vunpack.c.l.b16 %v334
        %v723 = vunpack.c.h.b16 %v334
        %v724 = vunpack.c.l.b16 %v335
        %v725 = vunpack.c.h.b16 %v335
        %v726 = vunpack.c.l.b16 %v336
        %v727 = vunpack.c.h.b16 %v336
        %v728 = vunpack.c.l.b16 %v337
        %v729 = vunpack.c.h.b16 %v337
        %v730 = vunpack.c.l.b16 %v338
        %v731 = vunpack.c.h.b16 %v338
        %v732 = vunpack.c.l.b16 %v339
        %v733 = vunpack.c.h.b16 %v339
        %v734 = vunpack.c.l.b16 %v340
        %v735 = vunpack.c.h.b16 %v340
        %v736 = vunpack.c.l.b16 %v341
        %v737 = vunpack.c.h.b16 %v341
        %v738 = vunpack.c.l.b16 %v342
        %v739 = vunpack.c.h.b16 %v342
        %v740 = vunpack.c.l.b16 %v343
        %v741 = vunpack.c.h.b16 %v343
        %v742 = vunpack.c.l.b16 %v344
        %v743 = vunpack.c.h.b16 %v344
        %v744 = vunpack.c.l.b16 %v345
        %v745 = vunpack.c.h.b16 %v345
        %v746 = vunpack.c.l.b16 %v346
        %v747 = vunpack.c.h.b16 %v346
        %v748 = vunpack.c.l.b16 %v347
        %v749 = vunpack.c.h.b16 %v347
        %v750 = vunpack.c.l.b16 %v348
        %v751 = vunpack.c.h.b16 %v348
        %v752 = vunpack.c.l.b16 %v349
        %v753 = vunpack.c.h.b16 %v349
        %v754 = vunpack.c.l.b16 %v350
        %v755 = vunpack.c.h.b16 %v350
        %v756 = vunpack.c.l.b16 %v351
        %v757 = vunpack.c.h.b16 %v351
        %v758 = vunpack.c.l.b16 %v352
        %v759 = vunpack.c.h.b16 %v352
        %v760 = vunpack.c.l.b16 %v353
        %v761 = vunpack.c.h.b16 %v353
        %v762 = vunpack.c.l.b16 %v354
        %v763 = vunpack.c.h.b16 %v354
        %v764 = vunpack.c.l.b16 %v355
        %v765 = vunpack.c.h.b16 %v355
        %v766 = vunpack.c.l.b16 %v356
        %v767 = vunpack.c.h.b16 %v356
        %v768 = vunpack.c.l.b16 %v357
        %v769 = vunpack.c.h.b16 %v357
        %v770 = vunpack.c.l.b16 %v358
        %v771 = vunpack.c.h.b16 %v358
        %v772 = vunpack.c.l.b16 %v359
        %v773 = vunpack.c.h.b16 %v359
        %v774 = vunpack.c.l.b16 %v360
        %v775 = vunpack.c.h.b16 %v360
        %v776 = vunpack.c.l.b16 %v361
        %v777 = vunpack.c.h.b16 %v361
        %v778 = vunpack.c.l.b16 %v362
        %v779 = vunpack.c.h.b16 %v362
        %v780 = vunpack.c.l.b16 %v363
        %v781 = vunpack.c.h.b16 %v363
        %v782 = vunpack.c.l.b16 %v364
        %v783 = vunpack.c.h.b16 %v364
        %v784 = vunpack.c.l.b16 %v365
        %v785 = vunpack.c.h.b16 %v365
        %v786 = vunpack.c.l.b16 %v366
        %v787 = vunpack.c.h.b16 %v366
        %v788 = vunpack.c.l.b16 %v367
        %v789 = vunpack.c.h.b16 %v367
        %v790 = vunpack.c.l.b16 %v368
        %v791 = vunpack.c.h.b16 %v368
        %v792 = vunpack.c.l.b16 %v369
        %v793 = vunpack.c.h.b16 %v369
        %v794 = vunpack.c.l.b16 %v370
        %v795 = vunpack.c.h.b16 %v370
        %v796 = vunpack.c.l.b16 %v371
        %v797 = vunpack.c.h.b16 %v371
        %v798 = vunpack.c.l.b16 %v372
        %v799 = vunpack.c.h.b16 %v372
        %v800 = vunpack.c.l.b16 %v373
        %v801 = vunpack.c.h.b16 %v373
        %v802 = vunpack.c.l.b16 %v374
        %v803 = vunpack.c.h.b16 %v374
        %v804 = vunpack.c.l.b16 %v375
        %v805 = vunpack.c.h.b16 %v375
        %v806 = vunpack.c.l.b16 %v376
        %v807 = vunpack.c.h.b16 %v376
        %v808 = vunpack.c.l.b16 %v377
        %v809 = vunpack.c.h.b16 %v377
        %v810 = vunpack.c.l.b16 %v378
        %v811 = vunpack.c.h.b16 %v378
        %v812 = vunpack.c.l.b16 %v379
        %v813 = vunpack.c.h.b16 %v379
        %v814 = vunpack.c.l.b16 %v380
        %v815 = vunpack.c.h.b16 %v380
        %v816 = vunpack.c.l.b16 %v381
        %v817 = vunpack.c.h.b16 %v381
        %v818 = vunpack.c.l.b16 %v382
        %v819 = vunpack.c.h.b16 %v382
        %v820 = vunpack.c.l.b16 %v383
        %v821 = vunpack.c.h.b16 %v383
        %v822 = vunpack.c.l.b16 %v384
        %v823 = vunpack.c.h.b16 %v384
        %v824 = vunpack.c.l.b16 %v385
        %v825 = vunpack.c.h.b16 %v385
        %v826 = vunpack.c.l.b16 %v386
        %v827 = vunpack.c.h.b16 %v386
        %v828 = vunpack.c.l.b16 %v387
        %v829 = vunpack.c.h.b16 %v387
        %v830 = vunpack.c.l.b16 %v388
        %v831 = vunpack.c.h.b16 %v388
        %v832 = vunpack.c.l.b16 %v389
        %v833 = vunpack.c.h.b16 %v389
        %v834 = vunpack.c.l.b16 %v390
        %v835 = vunpack.c.h.b16 %v390
        %v836 = vunpack.c.l.b16 %v391
        %v837 = vunpack.c.h.b16 %v391
        %v838 = vunpack.c.l.b16 %v392
        %v839 = vunpack.c.h.b16 %v392
        %v840 = vunpack.c.l.b16 %v393
        %v841 = vunpack.c.h.b16 %v393
        %v842 = vunpack.c.l.b16 %v394
        %v843 = vunpack.c.h.b16 %v394
        %v844 = vunpack.c.l.b16 %v395
        %v845 = vunpack.c.h.b16 %v395
        %v846 = vunpack.c.l.b16 %v396
        %v847 = vunpack.c.h.b16 %v396
        %v848 = vunpack.c.l.b16 %v397
        %v849 = vunpack.c.h.b16 %v397
        %v850 = vunpack.c.l.b16 %v398
        %v851 = vunpack.c.h.b16 %v398
        %v852 = vunpack.c.l.b16 %v399
        %v853 = vunpack.c.h.b16 %v399
        %v854 = vunpack.c.l.b16 %v400
        %v855 = vunpack.c.h.b16 %v400
        %v856 = vunpack.c.l.b16 %v401
        %v857 = vunpack.c.h.b16 %v401
        %v858 = vunpack.c.l.b16 %v402
        %v859 = vunpack.c.h.b16 %v402
        %v860 = vunpack.c.l.b16 %v403
        %v861 = vunpack.c.h.b16 %v403
        %v862 = vunpack.c.l.b16 %v404
        %v863 = vunpack.c.h.b16 %v404
        %v864 = vunpack.c.l.b16 %v405
        %v865 = vunpack.c.h.b16 %v405
        %v866 = vunpack.c.l.b16 %v406
        %v867 = vunpack.c.h.b16 %v406
        %v868 = vunpack.c.l.b16 %v407
        %v869 = vunpack.c.h.b16 %v407
        %v870 = vunpack.c.l.b16 %v408
        %v871 = vunpack.c.h.b16 %v408
        %v872 = vunpack.c.l.b16 %v409
        %v873 = vunpack.c.h.b16 %v409
        %v874 = vunpack.c.l.b16 %v410
        %v875 = vunpack.c.h.b16 %v410
        %v876 = vunpack.c.l.b16 %v411
        %v877 = vunpack.c.h.b16 %v411
        %v878 = vunpack.c.l.b16 %v412
        %v879 = vunpack.c.h.b16 %v412
        %v880 = vunpack.c.l.b16 %v413
        %v881 = vunpack.c.h.b16 %v413
        %v882 = vunpack.c.l.b16 %v414
        %v883 = vunpack.c.h.b16 %v414
        %v884 = vunpack.c.l.b16 %v415
        %v885 = vunpack.c.h.b16 %v415
        %v886 = vunpack.c.l.b16 %v416
        %v887 = vunpack.c.h.b16 %v416
        %v888 = vunpack.c.l.b16 %v417
        %v889 = vunpack.c.h.b16 %v417
        %v890 = vunpack.c.l.b16 %v418
        %v891 = vunpack.c.h.b16 %v418
        %v892 = vunpack.c.l.b16 %v419
        %v893 = vunpack.c.h.b16 %v419
        %v894 = vunpack.c.l.b16 %v420
        %v895 = vunpack.c.h.b16 %v420
        %v896 = vunpack.c.l.b16 %v421
        %v897 = vunpack.c.h.b16 %v421
        %v898 = vunpack.c.l.b16 %v422
        %v899 = vunpack.c.h.b16 %v422
        %v900 = vunpack.c.l.b16 %v423
        %v901 = vunpack.c.h.b16 %v423
        %v902 = vunpack.c.l.b16 %v424
        %v903 = vunpack.c.h.b16 %v424
        %v904 = vunpack.c.l.b16 %v425
        %v905 = vunpack.c.h.b16 %v425
        %v906 = vunpack.c.l.b16 %v426
        %v907 = vunpack.c.h.b16 %v426
        %v908 = vunpack.c.l.b16 %v427
        %v909 = vunpack.c.h.b16 %v427
        %v910 = vunpack.c.l.b16 %v428
        %v911 = vunpack.c.h.b16 %v428
        %v912 = vunpack.c.l.b16 %v429
        %v913 = vunpack.c.h.b16 %v429
        %v914 = vunpack.c.l.b16 %v430
        %v915 = vunpack.c.h.b16 %v430
        %v916 = vunpack.c.l.b16 %v431
        %v917 = vunpack.c.h.b16 %v431
        %v918 = vunpack.c.l.b16 %v432
        %v919 = vunpack.c.h.b16 %v432
        %v920 = vunpack.c.l.b16 %v433
        %v921 = vunpack.c.h.b16 %v433
        %v922 = vunpack.c.l.b16 %v434
        %v923 = vunpack.c.h.b16 %v434
        %v924 = vunpack.c.l.b16 %v435
        %v925 = vunpack.c.h.b16 %v435
        %v926 = vunpack.c.l.b16 %v436
        %v927 = vunpack.c.h.b16 %v436
        %v928 = vunpack.c.l.b16 %v437
        %v929 = vunpack.c.h.b16 %v437
        %v930 = vunpack.c.l.b16 %v438
        %v931 = vunpack.c.h.b16 %v438
        %v932 = vunpack.c.l.b16 %v439
        %v933 = vunpack.c.h.b16 %v439
        %v934 = vunpack.c.l.b16 %v440
        %v935 = vunpack.c.h.b16 %v440
        %v936 = vunpack.c.l.b16 %v441
        %v937 = vunpack.c.h.b16 %v441
        %v938 = vunpack.c.l.b16 %v442
        %v939 = vunpack.c.h.b16 %v442
        %v940 = vunpack.c.l.b16 %v443
        %v941 = vunpack.c.h.b16 %v443
        %v942 = vunpack.c.l.b16 %v444
        %v943 = vunpack.c.h.b16 %v444
        %v944 = vunpack.c.l.b16 %v445
        %v945 = vunpack.c.h.b16 %v445
        %v946 = vunpack.c.l.b16 %v446
        %v947 = vunpack.c.h.b16 %v446
        %v948 = vunpack.c.l.b16 %v447
        %v949 = vunpack.c.h.b16 %v447
        %v950 = vunpack.c.l.b16 %v448
        %v951 = vunpack.c.h.b16 %v448
        %v952 = vunpack.c.l.b16 %v449
        %v953 = vunpack.c.h.b16 %v449
        %v954 = vunpack.c.l.b16 %v450
        %v955 = vunpack.c.h.b16 %v450
        %v956 = vunpack.c.l.b16 %v451
        %v957 = vunpack.c.h.b16 %v451
        %v958 = vunpack.c.l.b16 %v452
        %v959 = vunpack.c.h.b16 %v452
        %v960 = vunpack.c.l.b16 %v453
        %v961 = vunpack.c.h.b16 %v453
        %v962 = vunpack.c.l.b16 %v454
        %v963 = vunpack.c.h.b16 %v454
        %v964 = vunpack.c.l.b16 %v455
        %v965 = vunpack.c.h.b16 %v455
        %v966 = vunpack.c.l.b16 %v456
        %v967 = vunpack.c.h.b16 %v456
        %v968 = vunpack.c.l.b16 %v457
        %v969 = vunpack.c.h.b16 %v457
        %v970 = vunpack.c.l.b16 %v458
        %v971 = vunpack.c.h.b16 %v458
        %v972 = vunpack.c.l.b16 %v459
        %v973 = vunpack.c.h.b16 %v459
        %v974 = vunpack.c.l.b16 %v460
        %v975 = vunpack.c.h.b16 %v460
        %v976 = vunpack.c.l.b16 %v461
        %v977 = vunpack.c.h.b16 %v461
        %v978 = vunpack.c.l.b16 %v462
        %v979 = vunpack.c.h.b16 %v462
        %v980 = vunpack.c.l.b16 %v463
        %v981 = vunpack.c.h.b16 %v463
        %v982 = vunpack.c.l.b16 %v464
        %v983 = vunpack.c.h.b16 %v464
        %v984 = vunpack.c.l.b16 %v465
        %v985 = vunpack.c.h.b16 %v465
        %v986 = vunpack.c.l.b16 %v466
        %v987 = vunpack.c.h.b16 %v466
        %v988 = vunpack.c.l.b16 %v467
        %v989 = vunpack.c.h.b16 %v467
        %v990 = vunpack.c.l.b16 %v468
        %v991 = vunpack.c.h.b16 %v468
        %v992 = vunpack.c.l.b16 %v469
        %v993 = vunpack.c.h.b16 %v469
        %v994 = vunpack.c.l.b16 %v470
        %v995 = vunpack.c.h.b16 %v470
        %v996 = vunpack.c.l.b16 %v471
        %v997 = vunpack.c.h.b16 %v471
        %v998 = vunpack.c.l.b16 %v472
        %v999 = vunpack.c.h.b16 %v472
        %v1000 = vunpack.c.l.b16 %v473
        %v1001 = vunpack.c.h.b16 %v473
        %v1002 = vunpack.c.l.b16 %v474
        %v1003 = vunpack.c.h.b16 %v474
        %v1004 = vunpack.c.l.b16 %v475
        %v1005 = vunpack.c.h.b16 %v475
        %v1006 = vunpack.c.l.b16 %v476
        %v1007 = vunpack.c.h.b16 %v476
        %v1008 = vunpack.c.l.b16 %v477
        %v1009 = vunpack.c.h.b16 %v477
        %v1010 = vunpack.c.l.b16 %v478
        %v1011 = vunpack.c.h.b16 %v478
        %v1012 = vunpack.c.l.b16 %v479
        %v1013 = vunpack.c.h.b16 %v479
        %v1014 = vunpack.c.l.b16 %v480
        %v1015 = vunpack.c.h.b16 %v480
        %v1016 = vunpack.c.l.b16 %v481
        %v1017 = vunpack.c.h.b16 %v481
        %v1018 = vunpack.c.l.b16 %v482
        %v1019 = vunpack.c.h.b16 %v482
        %v1020 = vunpack.c.l.b16 %v483
        %v1021 = vunpack.c.h.b16 %v483
        %v1022 = vunpack.c.l.b16 %v484
        %v1023 = vunpack.c.h.b16 %v484
        %v1024 = vunpack.c.l.b16 %v485
        %v1025 = vunpack.c.h.b16 %v485
        %v1026 = vunpack.c.l.b16 %v486
        %v1027 = vunpack.c.h.b16 %v486
        %v1028 = vunpack.c.l.b16 %v487
        %v1029 = vunpack.c.h.b16 %v487
        %v1030 = vunpack.c.l.b16 %v488
        %v1031 = vunpack.c.h.b16 %v488
        %v1032 = vunpack.c.l.b16 %v489
        %v1033 = vunpack.c.h.b16 %v489
        %v1034 = vunpack.c.l.b16 %v490
        %v1035 = vunpack.c.h.b16 %v490
        %v1036 = vunpack.c.l.b16 %v491
        %v1037 = vunpack.c.h.b16 %v491
        %v1038 = vunpack.c.l.b16 %v492
        %v1039 = vunpack.c.h.b16 %v492
        %v1040 = vunpack.c.l.b16 %v493
        %v1041 = vunpack.c.h.b16 %v493
        %v1042 = vunpack.c.l.b16 %v494
        %v1043 = vunpack.c.h.b16 %v494
        %v1044 = vunpack.c.l.b16 %v495
        %v1045 = vunpack.c.h.b16 %v495
        %v1046 = vunpack.c.l.b16 %v496
        %v1047 = vunpack.c.h.b16 %v496
        %v1048 = vunpack.c.l.b16 %v497
        %v1049 = vunpack.c.h.b16 %v497
        %v1050 = vunpack.c.l.b16 %v498
        %v1051 = vunpack.c.h.b16 %v498
        %v1052 = vunpack.c.l.b16 %v499
        %v1053 = vunpack.c.h.b16 %v499
        %v1054 = vunpack.c.l.b16 %v500
        %v1055 = vunpack.c.h.b16 %v500
        %v1056 = vunpack.c.l.b16 %v501
        %v1057 = vunpack.c.h.b16 %v501
        %v1058 = vunpack.c.l.b16 %v502
        %v1059 = vunpack.c.h.b16 %v502
        %v1060 = vunpack.c.l.b16 %v503
        %v1061 = vunpack.c.h.b16 %v503
        %v1062 = vunpack.c.l.b16 %v504
        %v1063 = vunpack.c.h.b16 %v504
        %v1064 = vunpack.c.l.b16 %v505
        %v1065 = vunpack.c.h.b16 %v505
        %v1066 = vunpack.c.l.b16 %v506
        %v1067 = vunpack.c.h.b16 %v506
        %v1068 = vunpack.c.l.b16 %v507
        %v1069 = vunpack.c.h.b16 %v507
        %v1070 = vunpack.c.l.b16 %v508
        %v1071 = vunpack.c.h.b16 %v508
        %v1072 = vunpack.c.l.b16 %v509
        %v1073 = vunpack.c.h.b16 %v509
        %v1074 = vunpack.c.l.b16 %v510
        %v1075 = vunpack.c.h.b16 %v510
        %v1076 = vunpack.c.l.b16 %v511
        %v1077 = vunpack.c.h.b16 %v511
        %v1078 = vunpack.c.l.b16 %v512
        %v1079 = vunpack.c.h.b16 %v512
        %v1080 = vunpack.c.l.b16 %v513
        %v1081 = vunpack.c.h.b16 %v513
        %v1082 = vunpack.c.l.b16 %v514
        %v1083 = vunpack.c.h.b16 %v514
        %v1084 = vunpack.c.l.b16 %v515
        %v1085 = vunpack.c.h.b16 %v515
        %v1086 = vunpack.c.l.b16 %v516
        %v1087 = vunpack.c.h.b16 %v516
        %v1088 = vunpack.c.l.b16 %v517
        %v1089 = vunpack.c.h.b16 %v517
        %v1090 = vunpack.c.l.b16 %v518
        %v1091 = vunpack.c.h.b16 %v518
        %v1092 = vunpack.c.l.b16 %v519
        %v1093 = vunpack.c.h.b16 %v519
        %v1094 = vunpack.c.l.b16 %v520
        %v1095 = vunpack.c.h.b16 %v520
        %v1096 = vunpack.c.l.b16 %v521
        %v1097 = vunpack.c.h.b16 %v521
        %v1098 = vpack.c.b16 %v718, %v714
        %v1099 = vpack.c.b16 %v719, %v715
        %v1100 = vpack.c.b16 %v720, %v716
        %v1101 = vpack.c.b16 %v721, %v717
        %v1102 = vpack.c.b16 %v726, %v722
        %v1103 = vpack.c.b16 %v727, %v723
        %v1104 = vpack.c.b16 %v728, %v724
        %v1105 = vpack.c.b16 %v729, %v725
        %v1106 = vpack.c.b16 %v734, %v730
        %v1107 = vpack.c.b16 %v735, %v731
        %v1108 = vpack.c.b16 %v736, %v732
        %v1109 = vpack.c.b16 %v737, %v733
        %v1110 = vpack.c.b16 %v742, %v738
        %v1111 = vpack.c.b16 %v743, %v739
        %v1112 = vpack.c.b16 %v744, %v740
        %v1113 = vpack.c.b16 %v745, %v741
        %v1114 = vpack.c.b16 %v750, %v746
        %v1115 = vpack.c.b16 %v751, %v747
        %v1116 = vpack.c.b16 %v752, %v748
        %v1117 = vpack.c.b16 %v753, %v749
        %v1118 = vpack.c.b16 %v758, %v754
        %v1119 = vpack.c.b16 %v759, %v755
        %v1120 = vpack.c.b16 %v760, %v756
        %v1121 = vpack.c.b16 %v761, %v757
        %v1122 = vpack.c.b16 %v766, %v762
        %v1123 = vpack.c.b16 %v767, %v763
        %v1124 = vpack.c.b16 %v768, %v764
        %v1125 = vpack.c.b16 %v769, %v765
        %v1126 = vpack.c.b16 %v774, %v770
        %v1127 = vpack.c.b16 %v775, %v771
        %v1128 = vpack.c.b16 %v776, %v772
        %v1129 = vpack.c.b16 %v777, %v773
        %v1130 = vpack.c.b16 %v782, %v778
        %v1131 = vpack.c.b16 %v783, %v779
        %v1132 = vpack.c.b16 %v784, %v780
        %v1133 = vpack.c.b16 %v785, %v781
        %v1134 = vpack.c.b16 %v790, %v786
        %v1135 = vpack.c.b16 %v791, %v787
        %v1136 = vpack.c.b16 %v792, %v788
        %v1137 = vpack.c.b16 %v793, %v789
        %v1138 = vpack.c.b16 %v798, %v794
        %v1139 = vpack.c.b16 %v799, %v795
        %v1140 = vpack.c.b16 %v800, %v796
        %v1141 = vpack.c.b16 %v801, %v797
        %v1142 = vpack.c.b16 %v806, %v802
        %v1143 = vpack.c.b16 %v807, %v803
        %v1144 = vpack.c.b16 %v808, %v804
        %v1145 = vpack.c.b16 %v809, %v805
        %v1146 = vpack.c.b16 %v814, %v810
        %v1147 = vpack.c.b16 %v815, %v811
        %v1148 = vpack.c.b16 %v816, %v812
        %v1149 = vpack.c.b16 %v817, %v813
        %v1150 = vpack.c.b16 %v822, %v818
        %v1151 = vpack.c.b16 %v823, %v819
        %v1152 = vpack.c.b16 %v824, %v820
        %v1153 = vpack.c.b16 %v825, %v821
        %v1154 = vpack.c.b16 %v830, %v826
        %v1155 = vpack.c.b16 %v831, %v827
        %v1156 = vpack.c.b16 %v832, %v828
        %v1157 = vpack.c.b16 %v833, %v829
        %v1158 = vpack.c.b16 %v838, %v834
        %v1159 = vpack.c.b16 %v839, %v835
        %v1160 = vpack.c.b16 %v840, %v836
        %v1161 = vpack.c.b16 %v841, %v837
        %v1162 = vpack.c.b16 %v846, %v842
        %v1163 = vpack.c.b16 %v847, %v843
        %v1164 = vpack.c.b16 %v848, %v844
        %v1165 = vpack.c.b16 %v849, %v845
        %v1166 = vpack.c.b16 %v854, %v850
        %v1167 = vpack.c.b16 %v855, %v851
        %v1168 = vpack.c.b16 %v856, %v852
        %v1169 = vpack.c.b16 %v857, %v853
        %v1170 = vpack.c.b16 %v862, %v858
        %v1171 = vpack.c.b16 %v863, %v859
        %v1172 = vpack.c.b16 %v864, %v860
        %v1173 = vpack.c.b16 %v865, %v861
        %v1174 = vpack.c.b16 %v870, %v866
        %v1175 = vpack.c.b16 %v871, %v867
        %v1176 = vpack.c.b16 %v872, %v868
        %v1177 = vpack.c.b16 %v873, %v869
        %v1178 = vpack.c.b16 %v878, %v874
        %v1179 = vpack.c.b16 %v879, %v875
        %v1180 = vpack.c.b16 %v880, %v876
        %v1181 = vpack.c.b16 %v881, %v877
        %v1182 = vpack.c.b16 %v886, %v882
        %v1183 = vpack.c.b16 %v887, %v883
        %v1184 = vpack.c.b16 %v888, %v884
        %v1185 = vpack.c.b16 %v889, %v885
        %v1186 = vpack.c.b16 %v894, %v890
        %v1187 = vpack.c.b16 %v895, %v891
        %v1188 = vpack.c.b16 %v896, %v892
        %v1189 = vpack.c.b16 %v897, %v893
        %v1190 = vpack.c.b16 %v902, %v898
        %v1191 = vpack.c.b16 %v903, %v899
        %v1192 = vpack.c.b16 %v904, %v900
        %v1193 = vpack.c.b16 %v905, %v901
        %v1194 = vpack.c.b16 %v910, %v906
        %v1195 = vpack.c.b16 %v911, %v907
        %v1196 = vpack.c.b16 %v912, %v908
        %v1197 = vpack.c.b16 %v913, %v909
        %v1198 = vpack.c.b16 %v918, %v914
        %v1199 = vpack.c.b16 %v919, %v915
        %v1200 = vpack.c.b16 %v920, %v916
        %v1201 = vpack.c.b16 %v921, %v917
        %v1202 = vpack.c.b16 %v926, %v922
        %v1203 = vpack.c.b16 %v927, %v923
        %v1204 = vpack.c.b16 %v928, %v924
        %v1205 = vpack.c.b16 %v929, %v925
        %v1206 = vpack.c.b16 %v934, %v930
        %v1207 = vpack.c.b16 %v935, %v931
        %v1208 = vpack.c.b16 %v936, %v932
        %v1209 = vpack.c.b16 %v937, %v933
        %v1210 = vpack.c.b16 %v942, %v938
        %v1211 = vpack.c.b16 %v943, %v939
        %v1212 = vpack.c.b16 %v944, %v940
        %v1213 = vpack.c.b16 %v945, %v941
        %v1214 = vpack.c.b16 %v950, %v946
        %v1215 = vpack.c.b16 %v951, %v947
        %v1216 = vpack.c.b16 %v952, %v948
        %v1217 = vpack.c.b16 %v953, %v949
        %v1218 = vpack.c.b16 %v958, %v954
        %v1219 = vpack.c.b16 %v959, %v955
        %v1220 = vpack.c.b16 %v960, %v956
        %v1221 = vpack.c.b16 %v961, %v957
        %v1222 = vpack.c.b16 %v966, %v962
        %v1223 = vpack.c.b16 %v967, %v963
        %v1224 = vpack.c.b16 %v968, %v964
        %v1225 = vpack.c.b16 %v969, %v965
        %v1226 = vpack.c.b16 %v974, %v970
        %v1227 = vpack.c.b16 %v975, %v971
        %v1228 = vpack.c.b16 %v976, %v972
        %v1229 = vpack.c.b16 %v977, %v973
        %v1230 = vpack.c.b16 %v982, %v978
        %v1231 = vpack.c.b16 %v983, %v979
        %v1232 = vpack.c.b16 %v984, %v980
        %v1233 = vpack.c.b16 %v985, %v981
        %v1234 = vpack.c.b16 %v990, %v986
        %v1235 = vpack.c.b16 %v991, %v987
        %v1236 = vpack.c.b16 %v992, %v988
        %v1237 = vpack.c.b16 %v993, %v989
        %v1238 = vpack.c.b16 %v998, %v994
        %v1239 = vpack.c.b16 %v999, %v995
        %v1240 = vpack.c.b16 %v1000, %v996
        %v1241 = vpack.c.b16 %v1001, %v997
        %v1242 = vpack.c.b16 %v1006, %v1002
        %v1243 = vpack.c.b16 %v1007, %v1003
        %v1244 = vpack.c.b16 %v1008, %v1004
        %v1245 = vpack.c.b16 %v1009, %v1005
        %v1246 = vpack.c.b16 %v1014, %v1010
        %v1247 = vpack.c.b16 %v1015, %v1011
        %v1248 = vpack.c.b16 %v1016, %v1012
        %v1249 = vpack.c.b16 %v1017, %v1013
        %v1250 = vpack.c.b16 %v1022, %v1018
        %v1251 = vpack.c.b16 %v1023, %v1019
        %v1252 = vpack.c.b16 %v1024, %v1020
        %v1253 = vpack.c.b16 %v1025, %v1021
        %v1254 = vpack.c.b16 %v1030, %v1026
        %v1255 = vpack.c.b16 %v1031, %v1027
        %v1256 = vpack.c.b16 %v1032, %v1028
        %v1257 = vpack.c.b16 %v1033, %v1029
        %v1258 = vpack.c.b16 %v1038, %v1034
        %v1259 = vpack.c.b16 %v1039, %v1035
        %v1260 = vpack.c.b16 %v1040, %v1036
        %v1261 = vpack.c.b16 %v1041, %v1037
        %v1262 = vpack.c.b16 %v1046, %v1042
        %v1263 = vpack.c.b16 %v1047, %v1043
        %v1264 = vpack.c.b16 %v1048, %v1044
        %v1265 = vpack.c.b16 %v1049, %v1045
        %v1266 = vpack.c.b16 %v1054, %v1050
        %v1267 = vpack.c.b16 %v1055, %v1051
        %v1268 = vpack.c.b16 %v1056, %v1052
        %v1269 = vpack.c.b16 %v1057, %v1053
        %v1270 = vpack.c.b16 %v1062, %v1058
        %v1271 = vpack.c.b16 %v1063, %v1059
        %v1272 = vpack.c.b16 %v1064, %v1060
        %v1273 = vpack.c.b16 %v1065, %v1061
        %v1274 = vpack.c.b16 %v1070, %v1066
        %v1275 = vpack.c.b16 %v1071, %v1067
        %v1276 = vpack.c.b16 %v1072, %v1068
        %v1277 = vpack.c.b16 %v1073, %v1069
        %v1278 = vpack.c.b16 %v1078, %v1074
        %v1279 = vpack.c.b16 %v1079, %v1075
        %v1280 = vpack.c.b16 %v1080, %v1076
        %v1281 = vpack.c.b16 %v1081, %v1077
        %v1282 = vpack.c.b16 %v1086, %v1082
        %v1283 = vpack.c.b16 %v1087, %v1083
        %v1284 = vpack.c.b16 %v1088, %v1084
        %v1285 = vpack.c.b16 %v1089, %v1085
        %v1286 = vpack.c.b16 %v1094, %v1090
        %v1287 = vpack.c.b16 %v1095, %v1091
        %v1288 = vpack.c.b16 %v1096, %v1092
        %v1289 = vpack.c.b16 %v1097, %v1093
        %1482 = vmatpush.bf16.msra.mxu0 %v1126
        %1483 = vmatpush.bf16.msra.mxu0 %v1122
        %1484 = vmatpush.bf16.msra.mxu0 %v1118
        %1485 = vmatpush.bf16.msra.mxu0 %v1114
        %1486 = vmatpush.bf16.msra.mxu0 %v1110
        %1487 = vmatpush.bf16.msra.mxu0 %v1106
        %1488 = vmatpush.bf16.msra.mxu0 %v1102
        %1489 = vmatpush.bf16.msra.mxu0 %v1098
        %1490 = vmatmul.bf16.gmra.mxu0 %v324
        %v1491 = vpop.f32.mrf.mxu0
        %v1492 = vadd.f32 0.0, %v1491
        %v1493 = vpop.f32.mrf.mxu0
        %1494 = vdwg.mxu0
        %1495 = vmatpush.bf16.msra.mxu0 %v1158
        %1496 = vmatpush.bf16.msra.mxu0 %v1154
        %1497 = vmatpush.bf16.msra.mxu0 %v1150
        %1498 = vmatpush.bf16.msra.mxu0 %v1146
        %1499 = vmatpush.bf16.msra.mxu0 %v1142
        %1500 = vmatpush.bf16.msra.mxu0 %v1138
        %1501 = vmatpush.bf16.msra.mxu0 %v1134
        %1502 = vmatpush.bf16.msra.mxu0 %v1130
        %1503 = vmatmul.bf16.gmra.mxu0 %v325
        %v1504 = vpop.f32.mrf.mxu0
        %v1505 = vadd.f32 %v1492, %v1504
        %v1506 = vpop.f32.mrf.mxu0
        %1507 = vdwg.mxu0
        %1508 = vmatpush.bf16.msra.mxu0 %v1190
        %1509 = vmatpush.bf16.msra.mxu0 %v1186
        %1510 = vmatpush.bf16.msra.mxu0 %v1182
        %1511 = vmatpush.bf16.msra.mxu0 %v1178
        %1512 = vmatpush.bf16.msra.mxu0 %v1174
        %1513 = vmatpush.bf16.msra.mxu0 %v1170
        %1514 = vmatpush.bf16.msra.mxu0 %v1166
        %1515 = vmatpush.bf16.msra.mxu0 %v1162
        %1516 = vmatmul.bf16.gmra.mxu0 %v326
        %v1517 = vpop.f32.mrf.mxu0
        %v1518 = vadd.f32 %v1505, %v1517
        %v1519 = vpop.f32.mrf.mxu0
        %1520 = vdwg.mxu0
        %1521 = vmatpush.bf16.msra.mxu0 %v1222
        %1522 = vmatpush.bf16.msra.mxu0 %v1218
        %1523 = vmatpush.bf16.msra.mxu0 %v1214
        %1524 = vmatpush.bf16.msra.mxu0 %v1210
        %1525 = vmatpush.bf16.msra.mxu0 %v1206
        %1526 = vmatpush.bf16.msra.mxu0 %v1202
        %1527 = vmatpush.bf16.msra.mxu0 %v1198
        %1528 = vmatpush.bf16.msra.mxu0 %v1194
        %1529 = vmatmul.bf16.gmra.mxu0 %v327
        %v1530 = vpop.f32.mrf.mxu0
        %v1531 = vadd.f32 %v1518, %v1530
        %v1532 = vpop.f32.mrf.mxu0
        %1533 = vdwg.mxu0
        %1534 = vmatpush.bf16.msra.mxu0 %v1254
        %1535 = vmatpush.bf16.msra.mxu0 %v1250
        %1536 = vmatpush.bf16.msra.mxu0 %v1246
        %1537 = vmatpush.bf16.msra.mxu0 %v1242
        %1538 = vmatpush.bf16.msra.mxu0 %v1238
        %1539 = vmatpush.bf16.msra.mxu0 %v1234
        %1540 = vmatpush.bf16.msra.mxu0 %v1230
        %1541 = vmatpush.bf16.msra.mxu0 %v1226
        %1542 = vmatmul.bf16.gmra.mxu0 %v328
        %v1543 = vpop.f32.mrf.mxu0
        %v1544 = vadd.f32 %v1531, %v1543
        %v1545 = vpop.f32.mrf.mxu0
        %1546 = vdwg.mxu0
        %1547 = vmatpush.bf16.msra.mxu0 %v1286
        %1548 = vmatpush.bf16.msra.mxu0 %v1282
        %1549 = vmatpush.bf16.msra.mxu0 %v1278
        %1550 = vmatpush.bf16.msra.mxu0 %v1274
        %1551 = vmatpush.bf16.msra.mxu0 %v1270
        %1552 = vmatpush.bf16.msra.mxu0 %v1266
        %1553 = vmatpush.bf16.msra.mxu0 %v1262
        %1554 = vmatpush.bf16.msra.mxu0 %v1258
        %1555 = vmatmul.bf16.gmra.mxu0 %v329
        %v1556 = vpop.f32.mrf.mxu0
        %v1557 = vadd.f32 %v1544, %v1556
        %v1558 = vpop.f32.mrf.mxu0
        %1559 = vdwg.mxu0
        %1560 = vmatpush.bf16.msra.mxu0 %v1127
        %1561 = vmatpush.bf16.msra.mxu0 %v1123
        %1562 = vmatpush.bf16.msra.mxu0 %v1119
        %1563 = vmatpush.bf16.msra.mxu0 %v1115
        %1564 = vmatpush.bf16.msra.mxu0 %v1111
        %1565 = vmatpush.bf16.msra.mxu0 %v1107
        %1566 = vmatpush.bf16.msra.mxu0 %v1103
        %1567 = vmatpush.bf16.msra.mxu0 %v1099
        %1568 = vmatmul.bf16.gmra.mxu0 %v324
        %v1569 = vpop.f32.mrf.mxu0
        %v1570 = vadd.f32 0.0, %v1569
        %v1571 = vpop.f32.mrf.mxu0
        %1572 = vdwg.mxu0
        %1573 = vmatpush.bf16.msra.mxu0 %v1159
        %1574 = vmatpush.bf16.msra.mxu0 %v1155
        %1575 = vmatpush.bf16.msra.mxu0 %v1151
        %1576 = vmatpush.bf16.msra.mxu0 %v1147
        %1577 = vmatpush.bf16.msra.mxu0 %v1143
        %1578 = vmatpush.bf16.msra.mxu0 %v1139
        %1579 = vmatpush.bf16.msra.mxu0 %v1135
        %1580 = vmatpush.bf16.msra.mxu0 %v1131
        %1581 = vmatmul.bf16.gmra.mxu0 %v325
        %v1582 = vpop.f32.mrf.mxu0
        %v1583 = vadd.f32 %v1570, %v1582
        %v1584 = vpop.f32.mrf.mxu0
        %1585 = vdwg.mxu0
        %1586 = vmatpush.bf16.msra.mxu0 %v1191
        %1587 = vmatpush.bf16.msra.mxu0 %v1187
        %1588 = vmatpush.bf16.msra.mxu0 %v1183
        %1589 = vmatpush.bf16.msra.mxu0 %v1179
        %1590 = vmatpush.bf16.msra.mxu0 %v1175
        %1591 = vmatpush.bf16.msra.mxu0 %v1171
        %1592 = vmatpush.bf16.msra.mxu0 %v1167
        %1593 = vmatpush.bf16.msra.mxu0 %v1163
        %1594 = vmatmul.bf16.gmra.mxu0 %v326
        %v1595 = vpop.f32.mrf.mxu0
        %v1596 = vadd.f32 %v1583, %v1595
        %v1597 = vpop.f32.mrf.mxu0
        %1598 = vdwg.mxu0
        %1599 = vmatpush.bf16.msra.mxu0 %v1223
        %1600 = vmatpush.bf16.msra.mxu0 %v1219
        %1601 = vmatpush.bf16.msra.mxu0 %v1215
        %1602 = vmatpush.bf16.msra.mxu0 %v1211
        %1603 = vmatpush.bf16.msra.mxu0 %v1207
        %1604 = vmatpush.bf16.msra.mxu0 %v1203
        %1605 = vmatpush.bf16.msra.mxu0 %v1199
        %1606 = vmatpush.bf16.msra.mxu0 %v1195
        %1607 = vmatmul.bf16.gmra.mxu0 %v327
        %v1608 = vpop.f32.mrf.mxu0
        %v1609 = vadd.f32 %v1596, %v1608
        %v1610 = vpop.f32.mrf.mxu0
        %1611 = vdwg.mxu0
        %1612 = vmatpush.bf16.msra.mxu0 %v1255
        %1613 = vmatpush.bf16.msra.mxu0 %v1251
        %1614 = vmatpush.bf16.msra.mxu0 %v1247
        %1615 = vmatpush.bf16.msra.mxu0 %v1243
        %1616 = vmatpush.bf16.msra.mxu0 %v1239
        %1617 = vmatpush.bf16.msra.mxu0 %v1235
        %1618 = vmatpush.bf16.msra.mxu0 %v1231
        %1619 = vmatpush.bf16.msra.mxu0 %v1227
        %1620 = vmatmul.bf16.gmra.mxu0 %v328
        %v1621 = vpop.f32.mrf.mxu0
        %v1622 = vadd.f32 %v1609, %v1621
        %v1623 = vpop.f32.mrf.mxu0
        %1624 = vdwg.mxu0
        %1625 = vmatpush.bf16.msra.mxu0 %v1287
        %1626 = vmatpush.bf16.msra.mxu0 %v1283
        %1627 = vmatpush.bf16.msra.mxu0 %v1279
        %1628 = vmatpush.bf16.msra.mxu0 %v1275
        %1629 = vmatpush.bf16.msra.mxu0 %v1271
        %1630 = vmatpush.bf16.msra.mxu0 %v1267
        %1631 = vmatpush.bf16.msra.mxu0 %v1263
        %1632 = vmatpush.bf16.msra.mxu0 %v1259
        %1633 = vmatmul.bf16.gmra.mxu0 %v329
        %v1634 = vpop.f32.mrf.mxu0
        %v1635 = vadd.f32 %v1622, %v1634
        %v1636 = vpop.f32.mrf.mxu0
        %1637 = vdwg.mxu0
        %1638 = vmatpush.bf16.msra.mxu0 %v1128
        %1639 = vmatpush.bf16.msra.mxu0 %v1124
        %1640 = vmatpush.bf16.msra.mxu0 %v1120
        %1641 = vmatpush.bf16.msra.mxu0 %v1116
        %1642 = vmatpush.bf16.msra.mxu0 %v1112
        %1643 = vmatpush.bf16.msra.mxu0 %v1108
        %1644 = vmatpush.bf16.msra.mxu0 %v1104
        %1645 = vmatpush.bf16.msra.mxu0 %v1100
        %1646 = vmatmul.bf16.gmra.mxu0 %v324
        %v1647 = vpop.f32.mrf.mxu0
        %v1648 = vadd.f32 0.0, %v1647
        %v1649 = vpop.f32.mrf.mxu0
        %1650 = vdwg.mxu0
        %1651 = vmatpush.bf16.msra.mxu0 %v1160
        %1652 = vmatpush.bf16.msra.mxu0 %v1156
        %1653 = vmatpush.bf16.msra.mxu0 %v1152
        %1654 = vmatpush.bf16.msra.mxu0 %v1148
        %1655 = vmatpush.bf16.msra.mxu0 %v1144
        %1656 = vmatpush.bf16.msra.mxu0 %v1140
        %1657 = vmatpush.bf16.msra.mxu0 %v1136
        %1658 = vmatpush.bf16.msra.mxu0 %v1132
        %1659 = vmatmul.bf16.gmra.mxu0 %v325
        %v1660 = vpop.f32.mrf.mxu0
        %v1661 = vadd.f32 %v1648, %v1660
        %v1662 = vpop.f32.mrf.mxu0
        %1663 = vdwg.mxu0
        %1664 = vmatpush.bf16.msra.mxu0 %v1192
        %1665 = vmatpush.bf16.msra.mxu0 %v1188
        %1666 = vmatpush.bf16.msra.mxu0 %v1184
        %1667 = vmatpush.bf16.msra.mxu0 %v1180
        %1668 = vmatpush.bf16.msra.mxu0 %v1176
        %1669 = vmatpush.bf16.msra.mxu0 %v1172
        %1670 = vmatpush.bf16.msra.mxu0 %v1168
        %1671 = vmatpush.bf16.msra.mxu0 %v1164
        %1672 = vmatmul.bf16.gmra.mxu0 %v326
        %v1673 = vpop.f32.mrf.mxu0
        %v1674 = vadd.f32 %v1661, %v1673
        %v1675 = vpop.f32.mrf.mxu0
        %1676 = vdwg.mxu0
        %1677 = vmatpush.bf16.msra.mxu0 %v1224
        %1678 = vmatpush.bf16.msra.mxu0 %v1220
        %1679 = vmatpush.bf16.msra.mxu0 %v1216
        %1680 = vmatpush.bf16.msra.mxu0 %v1212
        %1681 = vmatpush.bf16.msra.mxu0 %v1208
        %1682 = vmatpush.bf16.msra.mxu0 %v1204
        %1683 = vmatpush.bf16.msra.mxu0 %v1200
        %1684 = vmatpush.bf16.msra.mxu0 %v1196
        %1685 = vmatmul.bf16.gmra.mxu0 %v327
        %v1686 = vpop.f32.mrf.mxu0
        %v1687 = vadd.f32 %v1674, %v1686
        %v1688 = vpop.f32.mrf.mxu0
        %1689 = vdwg.mxu0
        %1690 = vmatpush.bf16.msra.mxu0 %v1256
        %1691 = vmatpush.bf16.msra.mxu0 %v1252
        %1692 = vmatpush.bf16.msra.mxu0 %v1248
        %1693 = vmatpush.bf16.msra.mxu0 %v1244
        %1694 = vmatpush.bf16.msra.mxu0 %v1240
        %1695 = vmatpush.bf16.msra.mxu0 %v1236
        %1696 = vmatpush.bf16.msra.mxu0 %v1232
        %1697 = vmatpush.bf16.msra.mxu0 %v1228
        %1698 = vmatmul.bf16.gmra.mxu0 %v328
        %v1699 = vpop.f32.mrf.mxu0
        %v1700 = vadd.f32 %v1687, %v1699
        %v1701 = vpop.f32.mrf.mxu0
        %1702 = vdwg.mxu0
        %1703 = vmatpush.bf16.msra.mxu0 %v1288
        %1704 = vmatpush.bf16.msra.mxu0 %v1284
        %1705 = vmatpush.bf16.msra.mxu0 %v1280
        %1706 = vmatpush.bf16.msra.mxu0 %v1276
        %1707 = vmatpush.bf16.msra.mxu0 %v1272
        %1708 = vmatpush.bf16.msra.mxu0 %v1268
        %1709 = vmatpush.bf16.msra.mxu0 %v1264
        %1710 = vmatpush.bf16.msra.mxu0 %v1260
        %1711 = vmatmul.bf16.gmra.mxu0 %v329
        %v1712 = vpop.f32.mrf.mxu0
        %v1713 = vadd.f32 %v1700, %v1712
        %v1714 = vpop.f32.mrf.mxu0
        %1715 = vdwg.mxu0
        %1716 = vmatpush.bf16.msra.mxu0 %v1129
        %1717 = vmatpush.bf16.msra.mxu0 %v1125
        %1718 = vmatpush.bf16.msra.mxu0 %v1121
        %1719 = vmatpush.bf16.msra.mxu0 %v1117
        %1720 = vmatpush.bf16.msra.mxu0 %v1113
        %1721 = vmatpush.bf16.msra.mxu0 %v1109
        %1722 = vmatpush.bf16.msra.mxu0 %v1105
        %1723 = vmatpush.bf16.msra.mxu0 %v1101
        %1724 = vmatmul.bf16.gmra.mxu0 %v324
        %v1725 = vpop.f32.mrf.mxu0
        %v1726 = vadd.f32 0.0, %v1725
        %v1727 = vpop.f32.mrf.mxu0
        %1728 = vdwg.mxu0
        %1729 = vmatpush.bf16.msra.mxu0 %v1161
        %1730 = vmatpush.bf16.msra.mxu0 %v1157
        %1731 = vmatpush.bf16.msra.mxu0 %v1153
        %1732 = vmatpush.bf16.msra.mxu0 %v1149
        %1733 = vmatpush.bf16.msra.mxu0 %v1145
        %1734 = vmatpush.bf16.msra.mxu0 %v1141
        %1735 = vmatpush.bf16.msra.mxu0 %v1137
        %1736 = vmatpush.bf16.msra.mxu0 %v1133
        %1737 = vmatmul.bf16.gmra.mxu0 %v325
        %v1738 = vpop.f32.mrf.mxu0
        %v1739 = vadd.f32 %v1726, %v1738
        %v1740 = vpop.f32.mrf.mxu0
        %1741 = vdwg.mxu0
        %1742 = vmatpush.bf16.msra.mxu0 %v1193
        %1743 = vmatpush.bf16.msra.mxu0 %v1189
        %1744 = vmatpush.bf16.msra.mxu0 %v1185
        %1745 = vmatpush.bf16.msra.mxu0 %v1181
        %1746 = vmatpush.bf16.msra.mxu0 %v1177
        %1747 = vmatpush.bf16.msra.mxu0 %v1173
        %1748 = vmatpush.bf16.msra.mxu0 %v1169
        %1749 = vmatpush.bf16.msra.mxu0 %v1165
        %1750 = vmatmul.bf16.gmra.mxu0 %v326
        %v1751 = vpop.f32.mrf.mxu0
        %v1752 = vadd.f32 %v1739, %v1751
        %v1753 = vpop.f32.mrf.mxu0
        %1754 = vdwg.mxu0
        %1755 = vmatpush.bf16.msra.mxu0 %v1225
        %1756 = vmatpush.bf16.msra.mxu0 %v1221
        %1757 = vmatpush.bf16.msra.mxu0 %v1217
        %1758 = vmatpush.bf16.msra.mxu0 %v1213
        %1759 = vmatpush.bf16.msra.mxu0 %v1209
        %1760 = vmatpush.bf16.msra.mxu0 %v1205
        %1761 = vmatpush.bf16.msra.mxu0 %v1201
        %1762 = vmatpush.bf16.msra.mxu0 %v1197
        %1763 = vmatmul.bf16.gmra.mxu0 %v327
        %v1764 = vpop.f32.mrf.mxu0
        %v1765 = vadd.f32 %v1752, %v1764
        %v1766 = vpop.f32.mrf.mxu0
        %1767 = vdwg.mxu0
        %1768 = vmatpush.bf16.msra.mxu0 %v1257
        %1769 = vmatpush.bf16.msra.mxu0 %v1253
        %1770 = vmatpush.bf16.msra.mxu0 %v1249
        %1771 = vmatpush.bf16.msra.mxu0 %v1245
        %1772 = vmatpush.bf16.msra.mxu0 %v1241
        %1773 = vmatpush.bf16.msra.mxu0 %v1237
        %1774 = vmatpush.bf16.msra.mxu0 %v1233
        %1775 = vmatpush.bf16.msra.mxu0 %v1229
        %1776 = vmatmul.bf16.gmra.mxu0 %v328
        %v1777 = vpop.f32.mrf.mxu0
        %v1778 = vadd.f32 %v1765, %v1777
        %v1779 = vpop.f32.mrf.mxu0
        %1780 = vdwg.mxu0
        %1781 = vmatpush.bf16.msra.mxu0 %v1289
        %1782 = vmatpush.bf16.msra.mxu0 %v1285
        %1783 = vmatpush.bf16.msra.mxu0 %v1281
        %1784 = vmatpush.bf16.msra.mxu0 %v1277
        %1785 = vmatpush.bf16.msra.mxu0 %v1273
        %1786 = vmatpush.bf16.msra.mxu0 %v1269
        %1787 = vmatpush.bf16.msra.mxu0 %v1265
        %1788 = vmatpush.bf16.msra.mxu0 %v1261
        %1789 = vmatmul.bf16.gmra.mxu0 %v329
        %v1790 = vpop.f32.mrf.mxu0
        %v1791 = vadd.f32 %v1778, %v1790
        %v1792 = vpop.f32.mrf.mxu0
        %1793 = vdwg.mxu0
        %v1798 = vrot.slane %v1635, 6
        %v1799 = vrot.slane %v1713, 4
        %v1800 = vrot.slane %v1791, 2
        %vm1801 = vcmask 1041408
        %v1802 = vsel %vm1801, %v1557, %v1798
        %vm1803 = vcmask 1045508
        %v1804 = vsel %vm1803, %v1799, %v1800
        %vm1805 = vcmask 1043456
        %v1806 = vsel %vm1805, %v1802, %v1804
        %v1808 = vadd.f32 %v304, %v1806
        %vm1809 = vcmask 1043458
        %vm1810 = vmor %vm1809, %vm1801
        %vm1811 = vmor %vm1803, %vm1810
        %vm1812 = vcmask 949254
        %vm1813 = vmor %vm1812, %vm1811
        %1814 = vst.msk [vmem:[#allocation2] sm:$0xff] %vm1813, %v1808
        %p1815 = scmp.eq.s32.totalorder %s19, 3
        // Predicated region
        $region53: #{lenet_forward.5} parent=47 // pred_check
          %p1816 = pneg %p1815
        $region54: #{lenet_forward.5} parent=47 // pred_check_branch
          %1818 = sbr.rel (%p1816) target = $region56
        $region55: #{lenet_forward.5} parent=47 // pred_region
          %v1819 = vld [vmem:[#allocation2] sm:$0xff]
          %v1820 = vld [vmem:[%s2] sm:$0xf]
          %v1822 = vperm.slane %v1820, 0
          %v1823 = vperm.slane %v1820, 1
          %v1824 = vperm.slane %v1820, 2
          %v1825 = vperm.slane %v1820, 3
          %v1826 = vrot.slane %v1823, 6
          %v1827 = vrot.slane %v1824, 4
          %v1828 = vrot.slane %v1825, 2
          %v1829 = vsel %vm1801, %v1822, %v1826
          %v1830 = vsel %vm1803, %v1827, %v1828
          %v1831 = vsel %vm1805, %v1829, %v1830
          %v1833 = vadd.f32 %v1819, %v1831
          %v1834 = vmax.f32 %v1833, 0.0
          %v1835 = vld [vmem:[%s3] sm:$0xff]
          %v1836 = vld [vmem:[%s3 + $0x8] sm:$0xff]
          %v1837 = vld [vmem:[%s3 + $0x10] sm:$0xff]
          %v1838 = vld [vmem:[%s3 + $0x18] sm:$0xff]
          %v1839 = vld [vmem:[%s3 + $0x20] sm:$0xff]
          %v1840 = vld [vmem:[%s3 + $0x28] sm:$0xff]
          %v1841 = vld [vmem:[%s3 + $0x30] sm:$0xff]
          %v1842 = vld [vmem:[%s3 + $0x38] sm:$0xff]
          %v1843 = vld [vmem:[%s3 + $0x40] sm:$0xff]
          %v1844 = vld [vmem:[%s3 + $0x48] sm:$0xff]
          %v1845 = vld [vmem:[%s3 + $0x50] sm:$0xff]
          %v1846 = vld [vmem:[%s3 + $0x58] sm:$0xff]
          %v1847 = vld [vmem:[%s3 + $0x60] sm:$0xff]
          %v1848 = vld [vmem:[%s3 + $0x68] sm:$0xff]
          %v1849 = vld [vmem:[%s3 + $0x70] sm:$0xff]
          %v1850 = vld [vmem:[%s3 + $0x78] sm:$0xff]
          %v1851 = vld [vmem:[%s3 + $0x80] sm:$0xff]
          %v1852 = vld [vmem:[%s3 + $0x88] sm:$0xff]
          %v1853 = vld [vmem:[%s3 + $0x90] sm:$0xff]
          %v1854 = vld [vmem:[%s3 + $0x98] sm:$0xff]
          %v1855 = vld [vmem:[%s3 + $0xa0] sm:$0xff]
          %v1856 = vld [vmem:[%s3 + $0xa8] sm:$0xff]
          %v1857 = vld [vmem:[%s3 + $0xb0] sm:$0xff]
          %v1858 = vld [vmem:[%s3 + $0xb8] sm:$0xff]
          %v1859 = vld [vmem:[%s3 + $0xc0] sm:$0xff]
          %v1860 = vld [vmem:[%s3 + $0xc8] sm:$0xff]
          %v1861 = vld [vmem:[%s3 + $0xd0] sm:$0xff]
          %v1862 = vld [vmem:[%s3 + $0xd8] sm:$0xff]
          %v1863 = vld [vmem:[%s3 + $0xe0] sm:$0xff]
          %v1864 = vld [vmem:[%s3 + $0xe8] sm:$0xff]
          %v1865 = vld [vmem:[%s3 + $0xf0] sm:$0xff]
          %v1866 = vld [vmem:[%s3 + $0xf8] sm:$0xff]
          %v1867 = vld [vmem:[%s3 + $0x100] sm:$0xff]
          %v1868 = vld [vmem:[%s3 + $0x108] sm:$0xff]
          %v1869 = vld [vmem:[%s3 + $0x110] sm:$0xff]
          %v1870 = vld [vmem:[%s3 + $0x118] sm:$0xff]
          %v1871 = vld [vmem:[%s3 + $0x120] sm:$0xff]
          %v1872 = vld [vmem:[%s3 + $0x128] sm:$0xff]
          %v1873 = vld [vmem:[%s3 + $0x130] sm:$0xff]
          %v1874 = vld [vmem:[%s3 + $0x138] sm:$0xff]
          %v1875 = vld [vmem:[%s3 + $0x140] sm:$0xff]
          %v1876 = vld [vmem:[%s3 + $0x148] sm:$0xff]
          %v1877 = vld [vmem:[%s3 + $0x150] sm:$0xff]
          %v1878 = vld [vmem:[%s3 + $0x158] sm:$0xff]
          %v1879 = vld [vmem:[%s3 + $0x160] sm:$0xff]
          %v1880 = vld [vmem:[%s3 + $0x168] sm:$0xff]
          %v1881 = vld [vmem:[%s3 + $0x170] sm:$0xff]
          %v1882 = vld [vmem:[%s3 + $0x178] sm:$0xff]
          %v1883 = vld [vmem:[%s3 + $0x180] sm:$0xff]
          %v1884 = vld [vmem:[%s3 + $0x188] sm:$0xff]
          %v1885 = vld [vmem:[%s3 + $0x190] sm:$0xff]
          %v1886 = vld [vmem:[%s3 + $0x198] sm:$0xff]
          %v1887 = vld [vmem:[%s3 + $0x1a0] sm:$0xff]
          %v1888 = vld [vmem:[%s3 + $0x1a8] sm:$0xff]
          %v1889 = vld [vmem:[%s3 + $0x1b0] sm:$0xff]
          %v1890 = vld [vmem:[%s3 + $0x1b8] sm:$0xff]
          %v1891 = vld [vmem:[%s3 + $0x1c0] sm:$0xff]
          %v1892 = vld [vmem:[%s3 + $0x1c8] sm:$0xff]
          %v1893 = vld [vmem:[%s3 + $0x1d0] sm:$0xff]
          %v1894 = vld [vmem:[%s3 + $0x1d8] sm:$0xff]
          %v1895 = vld [vmem:[%s3 + $0x1e0] sm:$0xff]
          %v1896 = vld [vmem:[%s3 + $0x1e8] sm:$0xff]
          %v1897 = vld [vmem:[%s3 + $0x1f0] sm:$0xff]
          %v1898 = vld [vmem:[%s3 + $0x1f8] sm:$0xff]
          %v1899 = vld [vmem:[%s3 + $0x200] sm:$0xff]
          %v1900 = vld [vmem:[%s3 + $0x208] sm:$0xff]
          %v1901 = vld [vmem:[%s3 + $0x210] sm:$0xff]
          %v1902 = vld [vmem:[%s3 + $0x218] sm:$0xff]
          %v1903 = vld [vmem:[%s3 + $0x220] sm:$0xff]
          %v1904 = vld [vmem:[%s3 + $0x228] sm:$0xff]
          %v1905 = vld [vmem:[%s3 + $0x230] sm:$0xff]
          %v1906 = vld [vmem:[%s3 + $0x238] sm:$0xff]
          %v1907 = vld [vmem:[%s3 + $0x240] sm:$0xff]
          %v1908 = vld [vmem:[%s3 + $0x248] sm:$0xff]
          %v1909 = vld [vmem:[%s3 + $0x250] sm:$0xff]
          %v1910 = vld [vmem:[%s3 + $0x258] sm:$0xff]
          %v1911 = vld [vmem:[%s3 + $0x260] sm:$0xff]
          %v1912 = vld [vmem:[%s3 + $0x268] sm:$0xff]
          %v1913 = vld [vmem:[%s3 + $0x270] sm:$0xff]
          %v1914 = vld [vmem:[%s3 + $0x278] sm:$0xff]
          %v1915 = vld [vmem:[%s3 + $0x280] sm:$0xff]
          %v1916 = vld [vmem:[%s3 + $0x288] sm:$0xff]
          %v1917 = vld [vmem:[%s3 + $0x290] sm:$0xff]
          %v1918 = vld [vmem:[%s3 + $0x298] sm:$0xff]
          %v1919 = vld [vmem:[%s3 + $0x2a0] sm:$0xff]
          %v1920 = vld [vmem:[%s3 + $0x2a8] sm:$0xff]
          %v1921 = vld [vmem:[%s3 + $0x2b0] sm:$0xff]
          %v1922 = vld [vmem:[%s3 + $0x2b8] sm:$0xff]
          %v1923 = vld [vmem:[%s3 + $0x2c0] sm:$0xff]
          %v1924 = vld [vmem:[%s3 + $0x2c8] sm:$0xff]
          %v1925 = vld [vmem:[%s3 + $0x2d0] sm:$0xff]
          %v1926 = vld [vmem:[%s3 + $0x2d8] sm:$0xff]
          %v1927 = vld [vmem:[%s3 + $0x2e0] sm:$0xff]
          %v1928 = vld [vmem:[%s3 + $0x2e8] sm:$0xff]
          %v1929 = vld [vmem:[%s3 + $0x2f0] sm:$0xff]
          %v1930 = vld [vmem:[%s3 + $0x2f8] sm:$0xff]
          %v1931 = vld [vmem:[%s3 + $0x300] sm:$0xff]
          %v1932 = vld [vmem:[%s3 + $0x308] sm:$0xff]
          %v1933 = vld [vmem:[%s3 + $0x310] sm:$0xff]
          %v1934 = vld [vmem:[%s3 + $0x318] sm:$0xff]
          %v1935 = vld [vmem:[%s3 + $0x320] sm:$0xff]
          %v1936 = vld [vmem:[%s3 + $0x328] sm:$0xff]
          %v1937 = vld [vmem:[%s3 + $0x330] sm:$0xff]
          %v1938 = vld [vmem:[%s3 + $0x338] sm:$0xff]
          %v1939 = vld [vmem:[%s3 + $0x340] sm:$0xff]
          %v1940 = vld [vmem:[%s3 + $0x348] sm:$0xff]
          %v1941 = vld [vmem:[%s3 + $0x350] sm:$0xff]
          %v1942 = vld [vmem:[%s3 + $0x358] sm:$0xff]
          %v1943 = vld [vmem:[%s3 + $0x360] sm:$0xff]
          %v1944 = vld [vmem:[%s3 + $0x368] sm:$0xff]
          %v1945 = vld [vmem:[%s3 + $0x370] sm:$0xff]
          %v1946 = vld [vmem:[%s3 + $0x378] sm:$0xff]
          %v1947 = vld [vmem:[%s3 + $0x380] sm:$0xff]
          %v1948 = vld [vmem:[%s3 + $0x388] sm:$0xff]
          %v1949 = vld [vmem:[%s3 + $0x390] sm:$0xff]
          %v1950 = vld [vmem:[%s3 + $0x398] sm:$0xff]
          %v1951 = vld [vmem:[%s3 + $0x3a0] sm:$0xff]
          %v1952 = vld [vmem:[%s3 + $0x3a8] sm:$0xff]
          %v1953 = vld [vmem:[%s3 + $0x3b0] sm:$0xff]
          %v1954 = vld [vmem:[%s3 + $0x3b8] sm:$0xff]
          %v1955 = vld [vmem:[%s3 + $0x3c0] sm:$0xff]
          %v1956 = vld [vmem:[%s3 + $0x3c8] sm:$0xff]
          %v1957 = vld [vmem:[%s3 + $0x3d0] sm:$0xff]
          %v1958 = vld [vmem:[%s3 + $0x3d8] sm:$0xff]
          %v1959 = vld [vmem:[%s3 + $0x3e0] sm:$0xf]
          %v1960 = vld [vmem:[%s3 + $0x3e8] sm:$0xf]
          %v1961 = vld [vmem:[%s4] sm:$0x3]
          %v1963 = vperm.slane %v1961, 0
          %v1964 = vperm.slane %v1961, 1
          %1968 = vst [vmem:[#allocation1] ss:$4 sm:$0xff] %v1834
          %v1969 = vld.sshfl [vmem:[#allocation1] sm:$0xff pattern:$0x73625140]
          %v1970 = vld.sshfl [vmem:[#allocation1 + $0x8] sm:$0xff pattern:$0x73625140]
          %v1971 = vld.sshfl [vmem:[#allocation1 + $0x10] sm:$0xff pattern:$0x73625140]
          %v1972 = vld.sshfl [vmem:[#allocation1 + $0x18] sm:$0xff pattern:$0x73625140]
          %vm1976 = vcmask 949248
          %v1977 = vsel %vm1976, %v1972, 0
          %v1980 = vsel %vm1805, %v1959, 0
          %v1983 = vsel %vm1805, %v1960, 0
          %1985 = vmatpush.msra.mxu0 %v1865
          %1986 = vmatpush.msra.mxu0 %v1863
          %1987 = vmatpush.msra.mxu0 %v1861
          %1988 = vmatpush.msra.mxu0 %v1859
          %1989 = vmatpush.msra.mxu0 %v1857
          %1990 = vmatpush.msra.mxu0 %v1855
          %1991 = vmatpush.msra.mxu0 %v1853
          %1992 = vmatpush.msra.mxu0 %v1851
          %1993 = vmatpush.msra.mxu0 %v1849
          %1994 = vmatpush.msra.mxu0 %v1847
          %1995 = vmatpush.msra.mxu0 %v1845
          %1996 = vmatpush.msra.mxu0 %v1843
          %1997 = vmatpush.msra.mxu0 %v1841
          %1998 = vmatpush.msra.mxu0 %v1839
          %1999 = vmatpush.msra.mxu0 %v1837
          %2000 = vmatpush.msra.mxu0 %v1835
          %2001 = vmatmul.f32.gmra.mxu0 %v1969
          %v2002 = vpop.f32.mrf.mxu0
          %v2003 = vadd.f32 %v1963, %v2002
          %2004 = vdwg.mxu0
          %2005 = vmatpush.msra.mxu0 %v1897
          %2006 = vmatpush.msra.mxu0 %v1895
          %2007 = vmatpush.msra.mxu0 %v1893
          %2008 = vmatpush.msra.mxu0 %v1891
          %2009 = vmatpush.msra.mxu0 %v1889
          %2010 = vmatpush.msra.mxu0 %v1887
          %2011 = vmatpush.msra.mxu0 %v1885
          %2012 = vmatpush.msra.mxu0 %v1883
          %2013 = vmatpush.msra.mxu0 %v1881
          %2014 = vmatpush.msra.mxu0 %v1879
          %2015 = vmatpush.msra.mxu0 %v1877
          %2016 = vmatpush.msra.mxu0 %v1875
          %2017 = vmatpush.msra.mxu0 %v1873
          %2018 = vmatpush.msra.mxu0 %v1871
          %2019 = vmatpush.msra.mxu0 %v1869
          %2020 = vmatpush.msra.mxu0 %v1867
          %2021 = vmatmul.f32.gmra.mxu0 %v1970
          %v2022 = vpop.f32.mrf.mxu0
          %v2023 = vadd.f32 %v2003, %v2022
          %2024 = vdwg.mxu0
          %2025 = vmatpush.msra.mxu0 %v1929
          %2026 = vmatpush.msra.mxu0 %v1927
          %2027 = vmatpush.msra.mxu0 %v1925
          %2028 = vmatpush.msra.mxu0 %v1923
          %2029 = vmatpush.msra.mxu0 %v1921
          %2030 = vmatpush.msra.mxu0 %v1919
          %2031 = vmatpush.msra.mxu0 %v1917
          %2032 = vmatpush.msra.mxu0 %v1915
          %2033 = vmatpush.msra.mxu0 %v1913
          %2034 = vmatpush.msra.mxu0 %v1911
          %2035 = vmatpush.msra.mxu0 %v1909
          %2036 = vmatpush.msra.mxu0 %v1907
          %2037 = vmatpush.msra.mxu0 %v1905
          %2038 = vmatpush.msra.mxu0 %v1903
          %2039 = vmatpush.msra.mxu0 %v1901
          %2040 = vmatpush.msra.mxu0 %v1899
          %2041 = vmatmul.f32.gmra.mxu0 %v1971
          %v2042 = vpop.f32.mrf.mxu0
          %v2043 = vadd.f32 %v2023, %v2042
          %2044 = vdwg.mxu0
          %2045 = vmatpush.msra.mxu0 0.0
          %2046 = vmatpush.msra.mxu0 %v1980
          %2047 = vmatpush.msra.mxu0 %v1957
          %2048 = vmatpush.msra.mxu0 %v1955
          %2049 = vmatpush.msra.mxu0 %v1953
          %2050 = vmatpush.msra.mxu0 %v1951
          %2051 = vmatpush.msra.mxu0 %v1949
          %2052 = vmatpush.msra.mxu0 %v1947
          %2053 = vmatpush.msra.mxu0 %v1945
          %2054 = vmatpush.msra.mxu0 %v1943
          %2055 = vmatpush.msra.mxu0 %v1941
          %2056 = vmatpush.msra.mxu0 %v1939
          %2057 = vmatpush.msra.mxu0 %v1937
          %2058 = vmatpush.msra.mxu0 %v1935
          %2059 = vmatpush.msra.mxu0 %v1933
          %2060 = vmatpush.msra.mxu0 %v1931
          %2061 = vmatmul.f32.gmra.mxu0 %v1977
          %v2062 = vpop.f32.mrf.mxu0
          %v2063 = vadd.f32 %v2043, %v2062
          %2064 = vdwg.mxu0
          %2065 = vmatpush.msra.mxu0 %v1866
          %2066 = vmatpush.msra.mxu0 %v1864
          %2067 = vmatpush.msra.mxu0 %v1862
          %2068 = vmatpush.msra.mxu0 %v1860
          %2069 = vmatpush.msra.mxu0 %v1858
          %2070 = vmatpush.msra.mxu0 %v1856
          %2071 = vmatpush.msra.mxu0 %v1854
          %2072 = vmatpush.msra.mxu0 %v1852
          %2073 = vmatpush.msra.mxu0 %v1850
          %2074 = vmatpush.msra.mxu0 %v1848
          %2075 = vmatpush.msra.mxu0 %v1846
          %2076 = vmatpush.msra.mxu0 %v1844
          %2077 = vmatpush.msra.mxu0 %v1842
          %2078 = vmatpush.msra.mxu0 %v1840
          %2079 = vmatpush.msra.mxu0 %v1838
          %2080 = vmatpush.msra.mxu0 %v1836
          %2081 = vmatmul.f32.gmra.mxu0 %v1969
          %v2082 = vpop.f32.mrf.mxu0
          %v2083 = vadd.f32 %v1964, %v2082
          %2084 = vdwg.mxu0
          %2085 = vmatpush.msra.mxu0 %v1898
          %2086 = vmatpush.msra.mxu0 %v1896
          %2087 = vmatpush.msra.mxu0 %v1894
          %2088 = vmatpush.msra.mxu0 %v1892
          %2089 = vmatpush.msra.mxu0 %v1890
          %2090 = vmatpush.msra.mxu0 %v1888
          %2091 = vmatpush.msra.mxu0 %v1886
          %2092 = vmatpush.msra.mxu0 %v1884
          %2093 = vmatpush.msra.mxu0 %v1882
          %2094 = vmatpush.msra.mxu0 %v1880
          %2095 = vmatpush.msra.mxu0 %v1878
          %2096 = vmatpush.msra.mxu0 %v1876
          %2097 = vmatpush.msra.mxu0 %v1874
          %2098 = vmatpush.msra.mxu0 %v1872
          %2099 = vmatpush.msra.mxu0 %v1870
          %2100 = vmatpush.msra.mxu0 %v1868
          %2101 = vmatmul.f32.gmra.mxu0 %v1970
          %v2102 = vpop.f32.mrf.mxu0
          %v2103 = vadd.f32 %v2083, %v2102
          %2104 = vdwg.mxu0
          %2105 = vmatpush.msra.mxu0 %v1930
          %2106 = vmatpush.msra.mxu0 %v1928
          %2107 = vmatpush.msra.mxu0 %v1926
          %2108 = vmatpush.msra.mxu0 %v1924
          %2109 = vmatpush.msra.mxu0 %v1922
          %2110 = vmatpush.msra.mxu0 %v1920
          %2111 = vmatpush.msra.mxu0 %v1918
          %2112 = vmatpush.msra.mxu0 %v1916
          %2113 = vmatpush.msra.mxu0 %v1914
          %2114 = vmatpush.msra.mxu0 %v1912
          %2115 = vmatpush.msra.mxu0 %v1910
          %2116 = vmatpush.msra.mxu0 %v1908
          %2117 = vmatpush.msra.mxu0 %v1906
          %2118 = vmatpush.msra.mxu0 %v1904
          %2119 = vmatpush.msra.mxu0 %v1902
          %2120 = vmatpush.msra.mxu0 %v1900
          %2121 = vmatmul.f32.gmra.mxu0 %v1971
          %v2122 = vpop.f32.mrf.mxu0
          %v2123 = vadd.f32 %v2103, %v2122
          %2124 = vdwg.mxu0
          %2125 = vmatpush.msra.mxu0 0.0
          %2126 = vmatpush.msra.mxu0 %v1983
          %2127 = vmatpush.msra.mxu0 %v1958
          %2128 = vmatpush.msra.mxu0 %v1956
          %2129 = vmatpush.msra.mxu0 %v1954
          %2130 = vmatpush.msra.mxu0 %v1952
          %2131 = vmatpush.msra.mxu0 %v1950
          %2132 = vmatpush.msra.mxu0 %v1948
          %2133 = vmatpush.msra.mxu0 %v1946
          %2134 = vmatpush.msra.mxu0 %v1944
          %2135 = vmatpush.msra.mxu0 %v1942
          %2136 = vmatpush.msra.mxu0 %v1940
          %2137 = vmatpush.msra.mxu0 %v1938
          %2138 = vmatpush.msra.mxu0 %v1936
          %2139 = vmatpush.msra.mxu0 %v1934
          %2140 = vmatpush.msra.mxu0 %v1932
          %2141 = vmatmul.f32.gmra.mxu0 %v1977
          %v2142 = vpop.f32.mrf.mxu0
          %v2143 = vadd.f32 %v2123, %v2142
          %2144 = vdwg.mxu0
          %v2145 = vmax.f32 %v2063, 0.0
          %v2146 = vmax.f32 %v2143, 0.0
          %v2147 = vld [vmem:[%s5] sm:$0xff]
          %v2148 = vld [vmem:[%s5 + $0x8] sm:$0xff]
          %v2149 = vld [vmem:[%s5 + $0x10] sm:$0xff]
          %v2150 = vld [vmem:[%s5 + $0x18] sm:$0xff]
          %v2151 = vld [vmem:[%s5 + $0x20] sm:$0xff]
          %v2152 = vld [vmem:[%s5 + $0x28] sm:$0xff]
          %v2153 = vld [vmem:[%s5 + $0x30] sm:$0xff]
          %v2154 = vld [vmem:[%s5 + $0x38] sm:$0xff]
          %v2155 = vld [vmem:[%s5 + $0x40] sm:$0xff]
          %v2156 = vld [vmem:[%s5 + $0x48] sm:$0xff]
          %v2157 = vld [vmem:[%s5 + $0x50] sm:$0xff]
          %v2158 = vld [vmem:[%s5 + $0x58] sm:$0xff]
          %v2159 = vld [vmem:[%s5 + $0x60] sm:$0xff]
          %v2160 = vld [vmem:[%s5 + $0x68] sm:$0xff]
          %v2161 = vld [vmem:[%s5 + $0x70] sm:$0xff]
          %v2162 = vld [vmem:[%s5 + $0x78] sm:$0xff]
          %v2163 = vld [vmem:[%s5 + $0x80] sm:$0xff]
          %v2164 = vld [vmem:[%s5 + $0x88] sm:$0xff]
          %v2165 = vld [vmem:[%s5 + $0x90] sm:$0xff]
          %v2166 = vld [vmem:[%s5 + $0x98] sm:$0xff]
          %v2167 = vld [vmem:[%s5 + $0xa0] sm:$0xff]
          %v2168 = vld [vmem:[%s5 + $0xa8] sm:$0xff]
          %v2169 = vld [vmem:[%s5 + $0xb0] sm:$0xff]
          %v2170 = vld [vmem:[%s5 + $0xb8] sm:$0xff]
          %v2171 = vld [vmem:[%s5 + $0xc0] sm:$0xff]
          %v2172 = vld [vmem:[%s6] sm:$0x1]
          %v2174 = vperm.slane %v2172, 0
          %vm2176 = vcmask 588800
          %v2178 = vsel %vm2176, %v2146, 0
          %2180 = vmatpush.msra.mxu0 %v2162
          %2181 = vmatpush.msra.mxu0 %v2161
          %2182 = vmatpush.msra.mxu0 %v2160
          %2183 = vmatpush.msra.mxu0 %v2159
          %2184 = vmatpush.msra.mxu0 %v2158
          %2185 = vmatpush.msra.mxu0 %v2157
          %2186 = vmatpush.msra.mxu0 %v2156
          %2187 = vmatpush.msra.mxu0 %v2155
          %2188 = vmatpush.msra.mxu0 %v2154
          %2189 = vmatpush.msra.mxu0 %v2153
          %2190 = vmatpush.msra.mxu0 %v2152
          %2191 = vmatpush.msra.mxu0 %v2151
          %2192 = vmatpush.msra.mxu0 %v2150
          %2193 = vmatpush.msra.mxu0 %v2149
          %2194 = vmatpush.msra.mxu0 %v2148
          %2195 = vmatpush.msra.mxu0 %v2147
          %2196 = vmatmul.f32.gmra.mxu0 %v2145
          %v2197 = vpop.f32.mrf.mxu0
          %v2198 = vadd.f32 %v2174, %v2197
          %2199 = vdwg.mxu0
          %2200 = vmatpush.msra.mxu0 0.0
          %2201 = vmatpush.msra.mxu0 0.0
          %2202 = vmatpush.msra.mxu0 0.0
          %2203 = vmatpush.msra.mxu0 0.0
          %2204 = vmatpush.msra.mxu0 0.0
          %2205 = vmatpush.msra.mxu0 0.0
          %2206 = vmatpush.msra.mxu0 0.0
          %2207 = vmatpush.msra.mxu0 %v2171
          %2208 = vmatpush.msra.mxu0 %v2170
          %2209 = vmatpush.msra.mxu0 %v2169
          %2210 = vmatpush.msra.mxu0 %v2168
          %2211 = vmatpush.msra.mxu0 %v2167
          %2212 = vmatpush.msra.mxu0 %v2166
          %2213 = vmatpush.msra.mxu0 %v2165
          %2214 = vmatpush.msra.mxu0 %v2164
          %2215 = vmatpush.msra.mxu0 %v2163
          %2216 = vmatmul.f32.gmra.mxu0 %v2178
          %v2217 = vpop.f32.mrf.mxu0
          %v2218 = vadd.f32 %v2198, %v2217
          %2219 = vdwg.mxu0
          %vm2220 = vcmask 74752
          %2221 = vst.msk [vmem:[#allocation3] sm:$0x3] %vm2220, %v2218
        $region56: #{lenet_forward.5} parent=47 // pred_fallthru
          _
        // Predicated region
        $region57: #{lenet_forward.5} parent=47 // pred_check
          %p2222 = pneg %p189
        $region58: #{lenet_forward.5} parent=47 // pred_check_branch
          %2224 = sbr.rel (%p2222) target = $region60
        $region59: #{lenet_forward.5} parent=47 // pred_region
          %2226 = vsyncadd [#allocation4], 0
          %s2228 = sshll.u32 [#allocation3], 4
          %s2229 = int_to_ptr.vmem [resolvable:$true] %s2228
          %s2230 = sshll.u32 %s7, 4
          %s2231 = int_to_ptr.hbm [resolvable:$true] %s2230
          %2233 = dma.vmem_to_hbm [thread:$0]  %s2229, 32, %s2231, [#allocation4]
        $region60: #{lenet_forward.5} parent=47 // pred_fallthru
          _
        // Predicated region
        $region61: #{lenet_forward.5} parent=47 // pred_check
          %p2234 = pneg %p189
        $region62: #{lenet_forward.5} parent=47 // pred_check_branch
          %2236 = sbr.rel (%p2234) target = $region64
        $region63: #{lenet_forward.5} parent=47 // pred_region
          %2238 = dma.done [#allocation4], 32
        $region64: #{lenet_forward.5} parent=47 // pred_fallthru
          _
      $region48: #{lenet_forward.5} parent=5 // pred_fallthru
        _
      %p2239 = scmp.le.s32.totalorder 2, %s14
      // Predicated region
      $region65: #{lenet_forward.5} parent=5 // pred_check
        %p2240 = pneg %p2239
      $region66: #{lenet_forward.5} parent=5 // pred_check_branch
        %2242 = sbr.rel (%p2240) target = $region68
      $region67: #{lenet_forward.5} parent=5 // pred_region
        %s2243 = ssub.s32 %s14, 2
      $region68: #{lenet_forward.5} parent=5 // pred_fallthru
        _
    $region6: #{lenet_forward.5} parent=1 // loop_footer
      %s18 = sadd.s32 1, %s14
    $region7: #{lenet_forward.5} parent=1 // loop_footer_branch
      %13 = sbr.rel target = $region3
    $region8: #{lenet_forward.5} parent=1 // loop_exit
      _
    %2244 = vsyncpa [#allocation4], 1
    %s2245 = scalar_lea.sflag [#allocation4], 1
    %2246 = vsyncpa %s2245, 1

</llo_original>
